<compile_context>
chip_gen: v7x
topology: tpu7x:2x2x1
jax: 0.10.0
libtpu: 0.0.40
codegen_flags: <defaults>
</compile_context>

<pallas_src>
import jax
import jax.numpy as jnp
from jax.experimental import pallas as pl
from jax.experimental.pallas import tpu as pltpu


F_IN = 64 * 18 * 18          # 20736
H1, H2, H3 = 512, 128, 32
TK = 3456                    # 20736 / 3456 = 6 steps; 3456 % 128 == 0, % 16 == 0


def _fc_fused_kernel(x_ref, w1_ref, b1_ref, w2_ref, b2_ref,
                     w3_ref, b3_ref, w4_ref, b4_ref,
                     o_ref, acc_ref):
    """Fused FC head.  Grid axis 0 tiles the K contraction of layer 1;
    layers 2-4 run in the epilogue on the last reduction step."""
    k = pl.program_id(0)

    @pl.when(k == 0)
    def _():
        acc_ref[...] = jnp.zeros_like(acc_ref)

    # Layer-1 partial product: bf16 x bf16 on the MXU, f32 accumulation.
    # (x tile is tiny; casting it to bf16 in-kernel keeps the MXU on the
    #  native bf16 path and avoids a large f32 upcast of the weight tile.)
    acc_ref[...] += jnp.dot(
        x_ref[...].astype(jnp.bfloat16),
        w1_ref[...],
        preferred_element_type=jnp.float32,
    )

    @pl.when(k == pl.num_programs(0) - 1)
    def _():
        # Layer 1 bias + ReLU.
        h = jnp.maximum(acc_ref[...] + b1_ref[...], 0.0)                  # (B, 512)
        # Layer 2: Linear + ReLU (weights resident in VMEM).
        h = jnp.maximum(
            jnp.dot(h, w2_ref[...], preferred_element_type=jnp.float32)
            + b2_ref[...], 0.0)                                           # (B, 128)
        # Layer 3: Linear + ReLU.
        h = jnp.maximum(
            jnp.dot(h, w3_ref[...], preferred_element_type=jnp.float32)
            + b3_ref[...], 0.0)                                           # (B, 32)
        # Layer 4: Linear (no activation).
        z = jnp.dot(h, w4_ref[...], preferred_element_type=jnp.float32) \
            + b4_ref[...]                                                 # (B, C)
        o_ref[...] = z.astype(o_ref.dtype)


def fc_forward(x, params, *, tk=TK):
    """Forward pass of the FC module as a single fused Pallas call."""
    (w1, b1), (w2, b2), (w3, b3), (w4, b4) = params
    B, K = x.shape
    assert K == w1.shape[0] and K % tk == 0
    C = w4.shape[1]
    n_k = K // tk

    def resident(shape):
        # Constant index_map -> block stays resident in VMEM across all k.
        return pl.BlockSpec(shape, lambda k: (0, 0))

    cost = pl.CostEstimate(
        flops=2 * B * (K * H1 + H1 * H2 + H2 * H3 + H3 * C),
        transcendentals=0,
        bytes_accessed=(
            x.size * x.dtype.itemsize          # activations
            + w1.size * w1.dtype.itemsize      # bf16 layer-1 weight (dominant)
            + (w2.size + w3.size + w4.size) * 4
            + (H1 + H2 + H3 + C) * 4           # biases
            + B * C * 4),                      # output
    )

    return pl.pallas_call(
        _fc_fused_kernel,
        out_shape=jax.ShapeDtypeStruct((B, C), jnp.float32),
        grid_spec=pltpu.PrefetchScalarGridSpec(
            num_scalar_prefetch=0,
            grid=(n_k,),
            in_specs=[
                pl.BlockSpec((B, tk), lambda k: (0, k)),    # x: step along K
                pl.BlockSpec((tk, H1), lambda k: (k, 0)),   # w1 (bf16): step along K
                resident((1, H1)),                          # b1
                resident((H1, H2)),                         # w2
                resident((1, H2)),                          # b2
                resident((H2, H3)),                         # w3
                resident((1, H3)),                          # b3
                resident((H3, C)),                          # w4
                resident((1, C)),                           # b4
            ],
            out_specs=pl.BlockSpec((B, C), lambda k: (0, 0)),
            scratch_shapes=[pltpu.VMEM((B, H1), jnp.float32)],  # layer-1 accumulator
        ),
        compiler_params=pltpu.CompilerParams(
            dimension_semantics=("arbitrary",),   # K is a reduction axis
        ),
        cost_estimate=cost,
    )(x, w1, b1.reshape(1, H1), w2, b2.reshape(1, H2),
      w3, b3.reshape(1, H3), w4, b4.reshape(1, C))


# ----------------------------------------------------------------------------
# Parameter construction (deterministic, PyTorch-default-style uniform init).
# Layer-1 weight is stored in bf16 (streamed-weight bandwidth win); the small
# layers stay f32 (negligible bytes).
# ----------------------------------------------------------------------------
def init_params(key, num_classes=3):
    dims = [(F_IN, H1), (H1, H2), (H2, H3), (H3, num_classes)]
    params = []
    for i, (fan_in, fan_out) in enumerate(dims):
        kw, kb = jax.random.split(jax.random.fold_in(key, i))
        bound = 1.0 / (fan_in ** 0.5)
        w = jax.random.uniform(kw, (fan_in, fan_out), jnp.float32, -bound, bound)
        b = jax.random.uniform(kb, (fan_out,), jnp.float32, -bound, bound)
        if i == 0:
            w = w.astype(jnp.bfloat16)
        params.append((w, b))
    return params


def fc_reference(x, params):
    """Pure-JAX reference mirroring the kernel math (bf16 layer-1 matmul with
    f32 accumulation, f32 everywhere else)."""
    (w1, b1), (w2, b2), (w3, b3), (w4, b4) = params
    h = jnp.dot(x.astype(jnp.bfloat16), w1,
                preferred_element_type=jnp.float32) + b1
    h = jnp.maximum(h, 0.0)
    h = jnp.maximum(h @ w2 + b2, 0.0)
    h = jnp.maximum(h @ w3 + b3, 0.0)
    return h @ w4 + b4


if __name__ == "__main__":
    key = jax.random.PRNGKey(0)
    kx, kp = jax.random.split(key)

    B = 2
    num_classes = 3                     # module default
    x = jax.random.normal(kx, (B, F_IN), dtype=jnp.float32)
    params = init_params(kp, num_classes=num_classes)

    forward = jax.jit(fc_forward)
    out = forward(x, params)
    out = jax.block_until_ready(out)

    ref = fc_reference(x, params)
    assert out.shape == (B, num_classes), out.shape
    assert jnp.allclose(out, ref, atol=1e-3, rtol=1e-3), (
        "mismatch vs reference: max abs err "
        f"{float(jnp.max(jnp.abs(out - ref)))}")

    print("KERNEL_OK")
</pallas_src>

<mosaic_0001>
module attributes {stable_mosaic.version = 11 : i64} {
  func.func @_fc_fused_kernel(%arg0: i32, %arg1: memref<2x3456xf32, #tpu.memory_space<vmem>>, %arg2: memref<3456x512xbf16, #tpu.memory_space<vmem>>, %arg3: memref<1x512xf32, #tpu.memory_space<vmem>>, %arg4: memref<512x128xf32, #tpu.memory_space<vmem>>, %arg5: memref<1x128xf32, #tpu.memory_space<vmem>>, %arg6: memref<128x32xf32, #tpu.memory_space<vmem>>, %arg7: memref<1x32xf32, #tpu.memory_space<vmem>>, %arg8: memref<32x3xf32, #tpu.memory_space<vmem>>, %arg9: memref<1x3xf32, #tpu.memory_space<vmem>>, %arg10: memref<2x3xf32, #tpu.memory_space<vmem>>, %arg11: memref<2x512xf32, #tpu.memory_space<vmem>>) attributes {dimension_semantics = [#tpu.dimension_semantics<arbitrary>], iteration_bounds = array<i64: 6>, scalar_prefetch = 0 : i64, scratch_operands = 1 : i64, tpu.core_type = #tpu.core_type<tc>, window_params = [{transform_indices = @transform_0, window_bounds = array<i64: 2, 3456>}, {transform_indices = @transform_1, window_bounds = array<i64: 3456, 512>}, {pipeline_mode = #tpu.pipeline_mode<synchronous>, transform_indices = @transform_2, window_bounds = array<i64: 1, 512>}, {pipeline_mode = #tpu.pipeline_mode<synchronous>, transform_indices = @transform_3, window_bounds = array<i64: 512, 128>}, {pipeline_mode = #tpu.pipeline_mode<synchronous>, transform_indices = @transform_4, window_bounds = array<i64: 1, 128>}, {pipeline_mode = #tpu.pipeline_mode<synchronous>, transform_indices = @transform_5, window_bounds = array<i64: 128, 32>}, {pipeline_mode = #tpu.pipeline_mode<synchronous>, transform_indices = @transform_6, window_bounds = array<i64: 1, 32>}, {pipeline_mode = #tpu.pipeline_mode<synchronous>, transform_indices = @transform_7, window_bounds = array<i64: 32, 3>}, {pipeline_mode = #tpu.pipeline_mode<synchronous>, transform_indices = @transform_8, window_bounds = array<i64: 1, 3>}, {pipeline_mode = #tpu.pipeline_mode<synchronous>, transform_indices = @transform_9, window_bounds = array<i64: 2, 3>}]} {
    %c0_i32 = arith.constant 0 : i32
    %0 = arith.cmpi eq, %arg0, %c0_i32 : i32
    %1 = arith.extui %0 : i1 to i32
    %c0_i32_0 = arith.constant 0 : i32
    %2 = arith.cmpi ne, %1, %c0_i32_0 : i32
    scf.if %2 {
      %cst_9 = arith.constant 0.000000e+00 : f32
      %13 = vector.broadcast %cst_9 : f32 to vector<2x512xf32>
      %c0_10 = arith.constant 0 : index
      %c0_11 = arith.constant 0 : index
      %14 = vector.load %arg11[%c0_10, %c0_11] : memref<2x512xf32, #tpu.memory_space<vmem>>, vector<2x512xf32>
      tpu.vector_store %arg11[%c0_10, %c0_11], %13 {strides = array<i32>} : memref<2x512xf32, #tpu.memory_space<vmem>>, vector<2x512xf32>,
    } else {
    }
    %c0 = arith.constant 0 : index
    %c0_1 = arith.constant 0 : index
    %3 = vector.load %arg11[%c0, %c0_1] : memref<2x512xf32, #tpu.memory_space<vmem>>, vector<2x512xf32>
    %c0_2 = arith.constant 0 : index
    %c0_3 = arith.constant 0 : index
    %4 = vector.load %arg1[%c0_2, %c0_3] : memref<2x3456xf32, #tpu.memory_space<vmem>>, vector<2x3456xf32>
    %5 = arith.truncf %4 : vector<2x3456xf32> to vector<2x3456xbf16>
    %c0_4 = arith.constant 0 : index
    %c0_5 = arith.constant 0 : index
    %6 = vector.load %arg2[%c0_4, %c0_5] : memref<3456x512xbf16, #tpu.memory_space<vmem>>, vector<3456x512xbf16>
    %cst = arith.constant dense<0.000000e+00> : vector<2x512xf32>
    %7 = tpu.matmul %5, %6, %cst {dimension_numbers = #tpu.dot_dimension_numbers<[1], [0], [0], [1], [0, 0, 1, 1], [], []>} : vector<2x3456xbf16>, vector<3456x512xbf16>, vector<2x512xf32> -> vector<2x512xf32>
    %8 = arith.addf %3, %7 : vector<2x512xf32>
    %c0_6 = arith.constant 0 : index
    %c0_7 = arith.constant 0 : index
    %9 = vector.load %arg11[%c0_6, %c0_7] : memref<2x512xf32, #tpu.memory_space<vmem>>, vector<2x512xf32>
    tpu.vector_store %arg11[%c0_6, %c0_7], %8 {strides = array<i32>} : memref<2x512xf32, #tpu.memory_space<vmem>>, vector<2x512xf32>,
    %c5_i32 = arith.constant 5 : i32
    %10 = arith.cmpi eq, %arg0, %c5_i32 : i32
    %11 = arith.extui %10 : i1 to i32
    %c0_i32_8 = arith.constant 0 : i32
    %12 = arith.cmpi ne, %11, %c0_i32_8 : i32
    scf.if %12 {
      %c0_9 = arith.constant 0 : index
      %c0_10 = arith.constant 0 : index
      %13 = vector.load %arg11[%c0_9, %c0_10] : memref<2x512xf32, #tpu.memory_space<vmem>>, vector<2x512xf32>
      %c0_11 = arith.constant 0 : index
      %c0_12 = arith.constant 0 : index
      %14 = vector.load %arg3[%c0_11, %c0_12] : memref<1x512xf32, #tpu.memory_space<vmem>>, vector<1x512xf32>
      %15 = vector.broadcast %14 : vector<1x512xf32> to vector<2x512xf32>
      %16 = arith.addf %13, %15 : vector<2x512xf32>
      %cst_13 = arith.constant 0.000000e+00 : f32
      %17 = vector.broadcast %cst_13 : f32 to vector<2x512xf32>
      %18 = arith.maximumf %16, %17 : vector<2x512xf32>
      %c0_14 = arith.constant 0 : index
      %c0_15 = arith.constant 0 : index
      %19 = vector.load %arg4[%c0_14, %c0_15] : memref<512x128xf32, #tpu.memory_space<vmem>>, vector<512x128xf32>
      %cst_16 = arith.constant dense<0.000000e+00> : vector<2x128xf32>
      %20 = tpu.matmul %18, %19, %cst_16 {dimension_numbers = #tpu.dot_dimension_numbers<[1], [0], [0], [1], [0, 0, 1, 1], [], []>} : vector<2x512xf32>, vector<512x128xf32>, vector<2x128xf32> -> vector<2x128xf32>
      %c0_17 = arith.constant 0 : index
      %c0_18 = arith.constant 0 : index
      %21 = vector.load %arg5[%c0_17, %c0_18] : memref<1x128xf32, #tpu.memory_space<vmem>>, vector<1x128xf32>
      %22 = vector.broadcast %21 : vector<1x128xf32> to vector<2x128xf32>
      %23 = arith.addf %20, %22 : vector<2x128xf32>
      %cst_19 = arith.constant 0.000000e+00 : f32
      %24 = vector.broadcast %cst_19 : f32 to vector<2x128xf32>
      %25 = arith.maximumf %23, %24 : vector<2x128xf32>
      %c0_20 = arith.constant 0 : index
      %c0_21 = arith.constant 0 : index
      %26 = vector.load %arg6[%c0_20, %c0_21] : memref<128x32xf32, #tpu.memory_space<vmem>>, vector<128x32xf32>
      %cst_22 = arith.constant dense<0.000000e+00> : vector<2x32xf32>
      %27 = tpu.matmul %25, %26, %cst_22 {dimension_numbers = #tpu.dot_dimension_numbers<[1], [0], [0], [1], [0, 0, 1, 1], [], []>} : vector<2x128xf32>, vector<128x32xf32>, vector<2x32xf32> -> vector<2x32xf32>
      %c0_23 = arith.constant 0 : index
      %c0_24 = arith.constant 0 : index
      %28 = vector.load %arg7[%c0_23, %c0_24] : memref<1x32xf32, #tpu.memory_space<vmem>>, vector<1x32xf32>
      %29 = vector.broadcast %28 : vector<1x32xf32> to vector<2x32xf32>
      %30 = arith.addf %27, %29 : vector<2x32xf32>
      %cst_25 = arith.constant 0.000000e+00 : f32
      %31 = vector.broadcast %cst_25 : f32 to vector<2x32xf32>
      %32 = arith.maximumf %30, %31 : vector<2x32xf32>
      %c0_26 = arith.constant 0 : index
      %c0_27 = arith.constant 0 : index
      %33 = vector.load %arg8[%c0_26, %c0_27] : memref<32x3xf32, #tpu.memory_space<vmem>>, vector<32x3xf32>
      %cst_28 = arith.constant dense<0.000000e+00> : vector<2x3xf32>
      %34 = tpu.matmul %32, %33, %cst_28 {dimension_numbers = #tpu.dot_dimension_numbers<[1], [0], [0], [1], [0, 0, 1, 1], [], []>} : vector<2x32xf32>, vector<32x3xf32>, vector<2x3xf32> -> vector<2x3xf32>
      %c0_29 = arith.constant 0 : index
      %c0_30 = arith.constant 0 : index
      %35 = vector.load %arg9[%c0_29, %c0_30] : memref<1x3xf32, #tpu.memory_space<vmem>>, vector<1x3xf32>
      %36 = vector.broadcast %35 : vector<1x3xf32> to vector<2x3xf32>
      %37 = arith.addf %34, %36 : vector<2x3xf32>
      %c0_31 = arith.constant 0 : index
      %c0_32 = arith.constant 0 : index
      %38 = vector.load %arg10[%c0_31, %c0_32] : memref<2x3xf32, #tpu.memory_space<vmem>>, vector<2x3xf32>
      tpu.vector_store %arg10[%c0_31, %c0_32], %37 {strides = array<i32>} : memref<2x3xf32, #tpu.memory_space<vmem>>, vector<2x3xf32>,
    } else {
    }
    return
  }
  func.func @transform_0(%arg0: i32) -> (i32, i32) {
    %c0_i32 = arith.constant 0 : i32
    %c0_i32_0 = arith.constant 0 : i32
    return %c0_i32, %arg0 : i32, i32
  }
  func.func @transform_1(%arg0: i32) -> (i32, i32) {
    %c0_i32 = arith.constant 0 : i32
    %c0_i32_0 = arith.constant 0 : i32
    return %arg0, %c0_i32 : i32, i32
  }
  func.func @transform_2(%arg0: i32) -> (i32, i32) {
    %c0_i32 = arith.constant 0 : i32
    %c0_i32_0 = arith.constant 0 : i32
    %c0_i32_1 = arith.constant 0 : i32
    return %c0_i32, %c0_i32_0 : i32, i32
  }
  func.func @transform_3(%arg0: i32) -> (i32, i32) {
    %c0_i32 = arith.constant 0 : i32
    %c0_i32_0 = arith.constant 0 : i32
    %c0_i32_1 = arith.constant 0 : i32
    return %c0_i32, %c0_i32_0 : i32, i32
  }
  func.func @transform_4(%arg0: i32) -> (i32, i32) {
    %c0_i32 = arith.constant 0 : i32
    %c0_i32_0 = arith.constant 0 : i32
    %c0_i32_1 = arith.constant 0 : i32
    return %c0_i32, %c0_i32_0 : i32, i32
  }
  func.func @transform_5(%arg0: i32) -> (i32, i32) {
    %c0_i32 = arith.constant 0 : i32
    %c0_i32_0 = arith.constant 0 : i32
    %c0_i32_1 = arith.constant 0 : i32
    return %c0_i32, %c0_i32_0 : i32, i32
  }
  func.func @transform_6(%arg0: i32) -> (i32, i32) {
    %c0_i32 = arith.constant 0 : i32
    %c0_i32_0 = arith.constant 0 : i32
    %c0_i32_1 = arith.constant 0 : i32
    return %c0_i32, %c0_i32_0 : i32, i32
  }
  func.func @transform_7(%arg0: i32) -> (i32, i32) {
    %c0_i32 = arith.constant 0 : i32
    %c0_i32_0 = arith.constant 0 : i32
    %c0_i32_1 = arith.constant 0 : i32
    return %c0_i32, %c0_i32_0 : i32, i32
  }
  func.func @transform_8(%arg0: i32) -> (i32, i32) {
    %c0_i32 = arith.constant 0 : i32
    %c0_i32_0 = arith.constant 0 : i32
    %c0_i32_1 = arith.constant 0 : i32
    return %c0_i32, %c0_i32_0 : i32, i32
  }
  func.func @transform_9(%arg0: i32) -> (i32, i32) {
    %c0_i32 = arith.constant 0 : i32
    %c0_i32_0 = arith.constant 0 : i32
    %c0_i32_1 = arith.constant 0 : i32
    return %c0_i32, %c0_i32_0 : i32, i32
  }
}

</mosaic_0001>

<llo_original>
// kernel: fc_forward.1
$region0: #{fc_forward.1}
  #allocation0 [shape = 'u32[]', space=smem, size = 0x4, offset = 0x4, fixed_abs, tag = 'smem constant byte address 0x4 - core index']
  #allocation1 [shape = 'u32[144,128]{1,0:T(1,128)}', space=vmem, size = 0x12000, scoped, tag = 'internal scratch']
  #allocation2 [shape = 'f32[2,512]{1,0:T(2,128)}', space=vmem, size = 0x1000, scoped, tag = 'scratch operand']
  %s0 = inlined_call_operand.hbm [shape: f32[2,20736], index: 0, kind: input, shape index: {}]
  %s1 = inlined_call_operand.hbm [shape: bf16[20736,512], index: 1, kind: input, shape index: {}]
  %s2 = inlined_call_operand.hbm [shape: f32[1,512], index: 2, kind: input, shape index: {}]
  %s3 = inlined_call_operand.hbm [shape: f32[512,128], index: 3, kind: input, shape index: {}]
  %s4 = inlined_call_operand.hbm [shape: f32[1,128], index: 4, kind: input, shape index: {}]
  %s5 = inlined_call_operand.vmem [shape: f32[128,32], index: 5, kind: input, shape index: {}]
  %s6 = inlined_call_operand.hbm [shape: f32[1,32], index: 6, kind: input, shape index: {}]
  %s7 = inlined_call_operand.vmem [shape: f32[32,3], index: 7, kind: input, shape index: {}]
  %s8 = inlined_call_operand.hbm [shape: f32[1,3], index: 8, kind: input, shape index: {}]
  %s9 = inlined_call_operand.hbm [shape: f32[2,3], index: 9, kind: output, shape index: {}]
  %s10 = sld [smem:[#allocation0]]
  $region105: #{fc_forward.1} parent=0
    _
  %s12 = ssub.s32 1, %s10
  %s13 = scalar_select 0, %s12, %s10
  $region1: #{fc_forward.1} parent=0
    #allocation3 [shape = 'u8[55296]{0}', space=vmem, size = 0xd800, scoped, tag = 'input window, operand 0']
    #allocation4 [shape = 's32[2]{0}', space=sflag, size = 0x8, scoped, tag = 'scoped memory for fc_forward.1']
    #allocation5 [shape = 's32[2]{0}', space=sflag, size = 0x8, scoped, tag = 'scoped memory for fc_forward.1']
    #allocation6 [shape = 'u8[7077888]{0}', space=vmem, size = 0x6c0000, scoped, tag = 'input window, operand 1']
    #allocation7 [shape = 's32[2]{0}', space=sflag, size = 0x8, scoped, tag = 'scoped memory for fc_forward.1']
    #allocation8 [shape = 'u8[2048]{0}', space=vmem, size = 0x800, scoped, tag = 'input window, operand 2, single buffered']
    #allocation9 [shape = 'u8[262144]{0}', space=vmem, size = 0x40000, scoped, tag = 'input window, operand 3, single buffered']
    #allocation10 [shape = 's32[1]{0}', space=sflag, size = 0x4, scoped, tag = 'scoped memory for fc_forward.1']
    #allocation11 [shape = 'u8[512]{0}', space=vmem, size = 0x400, scoped, tag = 'input window, operand 4, single buffered']
    #allocation12 [shape = 'u8[512]{0}', space=vmem, size = 0x400, scoped, tag = 'input window, operand 6, single buffered']
    #allocation13 [shape = 's32[1]{0}', space=sflag, size = 0x4, scoped, tag = 'scoped memory for fc_forward.1']
    #allocation14 [shape = 'u8[512]{0}', space=vmem, size = 0x400, scoped, tag = 'input window, operand 8, single buffered']
    #allocation15 [shape = 'u8[1024]{0}', space=vmem, size = 0x400, scoped, tag = 'output window, operand 0, single buffered']
    %14 = vsyncpa [#allocation4], 0
    %s15 = scalar_lea.sflag [#allocation4], 1
    %16 = vsyncpa %s15, 0
    %17 = vsyncpa [#allocation7], 0
    %s18 = scalar_lea.sflag [#allocation7], 1
    %19 = vsyncpa %s18, 0
    %20 = vsyncpa [#allocation10], 0
    %21 = vsyncpa [#allocation13], 0
    %22 = vsyncpa [#allocation5], 0
    loop: start=0, step=1, limit=8
    $region2: #{fc_forward.1} parent=1 // loop_pre_header
      _
    $region3: #{fc_forward.1} parent=1 // loop_header
      %s24 = sphi 0, %s28
      %p25 = scmp.ge.s32.totalorder %s24, 8
      %s34 = sphi 0, %s36
      %s37 = sphi 0, %s34
      %s38 = sphi 0, %s37
      %s54 = sphi 0, %s38
      %s60 = sphi 0, %s62
      %s63 = sphi 0, %s60
      %s64 = sphi 0, %s63
      %s80 = sphi 0, %s64
      %s84 = sphi 0, %s84
      %s86 = sphi 0, %s84
      %s87 = sphi 0, %s86
      %s101 = sphi 0, %s87
      %s105 = sphi 0, %s105
      %s107 = sphi 0, %s105
      %s108 = sphi 0, %s107
      %s122 = sphi 0, %s108
      %s126 = sphi 0, %s126
      %s128 = sphi 0, %s126
      %s129 = sphi 0, %s128
      %s143 = sphi 0, %s129
      %s147 = sphi 0, %s147
      %s149 = sphi 0, %s147
      %s150 = sphi 0, %s149
      %s164 = sphi 0, %s150
      %s168 = sphi 0, %s168
      %s170 = sphi 0, %s168
      %s171 = sphi 0, %s170
      %s185 = sphi 0, %s171
      %s189 = sphi 0, %s189
      %s191 = sphi 0, %s189
      %s192 = sphi 0, %s191
      %s206 = sphi 0, %s192
      %s210 = sphi 0, %s210
      %s212 = sphi 0, %s210
      %s213 = sphi 0, %s212
      %s227 = sphi 0, %s213
      %s231 = sphi 0, %s231
      %s233 = sphi 0, %s231
      %s234 = sphi 0, %s233
      %s248 = sphi 0, %s234
    $region4: #{fc_forward.1} parent=1 // loop_header_branch
      %27 = sbr.rel (%p25) target = $region8
    $region5: #{fc_forward.1} parent=1 // loop_body
      %s29 = ssub.s32 %s24, 1
      %s30 = ssub.s32 %s24, 2
      %s31 = sadd.s32 %s24, 1
      %s32 = ssub.s32 %s24, %s31
      %p33 = scmp.eq.s32.totalorder %s32, 0
      %s35 = sadd.s32 %s34, 1
      %s36 = scalar_select %p33, %s34, %s35
      %p39 = pneg %p33
      %p40 = scmp.eq.s32.totalorder %s24, 5
      %p41 = por %p39, %p40
      %p42 = scmp.ne.s32.totalorder %s34, %s37
      %p43 = scmp.eq.s32.totalorder %s24, 0
      %p44 = por %p42, %p43
      %p45 = scmp.ne.s32.totalorder %s34, %s37
      %p46 = scmp.eq.s32.totalorder %s29, 5
      %p47 = por %p45, %p46
      %p48 = scmp.ne.s32.totalorder %s37, %s38
      %p49 = scmp.eq.s32.totalorder %s29, 0
      %p50 = por %p48, %p49
      %p51 = scmp.ne.s32.totalorder %s37, %s38
      %p52 = scmp.eq.s32.totalorder %s30, 5
      %p53 = por %p51, %p52
      %p55 = scmp.ne.s32.totalorder %s38, %s54
      %p56 = scmp.eq.s32.totalorder %s30, 0
      %p57 = por %p55, %p56
      %s58 = ssub.s32 %s24, %s31
      %p59 = scmp.eq.s32.totalorder %s58, 0
      %s61 = sadd.s32 %s60, 1
      %s62 = scalar_select %p59, %s60, %s61
      %p65 = pneg %p59
      %p66 = scmp.eq.s32.totalorder %s24, 5
      %p67 = por %p65, %p66
      %p68 = scmp.ne.s32.totalorder %s60, %s63
      %p69 = scmp.eq.s32.totalorder %s24, 0
      %p70 = por %p68, %p69
      %p71 = scmp.ne.s32.totalorder %s60, %s63
      %p72 = scmp.eq.s32.totalorder %s29, 5
      %p73 = por %p71, %p72
      %p74 = scmp.ne.s32.totalorder %s63, %s64
      %p75 = scmp.eq.s32.totalorder %s29, 0
      %p76 = por %p74, %p75
      %p77 = scmp.ne.s32.totalorder %s63, %s64
      %p78 = scmp.eq.s32.totalorder %s30, 5
      %p79 = por %p77, %p78
      %p81 = scmp.ne.s32.totalorder %s64, %s80
      %p82 = scmp.eq.s32.totalorder %s30, 0
      %p83 = por %p81, %p82
      %s85 = sadd.s32 %s84, 1
      %p88 = scmp.eq.s32.totalorder %s24, 5
      %p89 = scmp.ne.s32.totalorder %s84, %s86
      %p90 = scmp.eq.s32.totalorder %s24, 0
      %p91 = por %p89, %p90
      %p92 = scmp.ne.s32.totalorder %s84, %s86
      %p93 = scmp.eq.s32.totalorder %s29, 5
      %p94 = por %p92, %p93
      %p95 = scmp.ne.s32.totalorder %s86, %s87
      %p96 = scmp.eq.s32.totalorder %s29, 0
      %p97 = por %p95, %p96
      %p98 = scmp.ne.s32.totalorder %s86, %s87
      %p99 = scmp.eq.s32.totalorder %s30, 5
      %p100 = por %p98, %p99
      %p102 = scmp.ne.s32.totalorder %s87, %s101
      %p103 = scmp.eq.s32.totalorder %s30, 0
      %p104 = por %p102, %p103
      %s106 = sadd.s32 %s105, 1
      %p109 = scmp.eq.s32.totalorder %s24, 5
      %p110 = scmp.ne.s32.totalorder %s105, %s107
      %p111 = scmp.eq.s32.totalorder %s24, 0
      %p112 = por %p110, %p111
      %p113 = scmp.ne.s32.totalorder %s105, %s107
      %p114 = scmp.eq.s32.totalorder %s29, 5
      %p115 = por %p113, %p114
      %p116 = scmp.ne.s32.totalorder %s107, %s108
      %p117 = scmp.eq.s32.totalorder %s29, 0
      %p118 = por %p116, %p117
      %p119 = scmp.ne.s32.totalorder %s107, %s108
      %p120 = scmp.eq.s32.totalorder %s30, 5
      %p121 = por %p119, %p120
      %p123 = scmp.ne.s32.totalorder %s108, %s122
      %p124 = scmp.eq.s32.totalorder %s30, 0
      %p125 = por %p123, %p124
      %s127 = sadd.s32 %s126, 1
      %p130 = scmp.eq.s32.totalorder %s24, 5
      %p131 = scmp.ne.s32.totalorder %s126, %s128
      %p132 = scmp.eq.s32.totalorder %s24, 0
      %p133 = por %p131, %p132
      %p134 = scmp.ne.s32.totalorder %s126, %s128
      %p135 = scmp.eq.s32.totalorder %s29, 5
      %p136 = por %p134, %p135
      %p137 = scmp.ne.s32.totalorder %s128, %s129
      %p138 = scmp.eq.s32.totalorder %s29, 0
      %p139 = por %p137, %p138
      %p140 = scmp.ne.s32.totalorder %s128, %s129
      %p141 = scmp.eq.s32.totalorder %s30, 5
      %p142 = por %p140, %p141
      %p144 = scmp.ne.s32.totalorder %s129, %s143
      %p145 = scmp.eq.s32.totalorder %s30, 0
      %p146 = por %p144, %p145
      %s148 = sadd.s32 %s147, 1
      %p151 = scmp.eq.s32.totalorder %s24, 5
      %p152 = scmp.ne.s32.totalorder %s147, %s149
      %p153 = scmp.eq.s32.totalorder %s24, 0
      %p154 = por %p152, %p153
      %p155 = scmp.ne.s32.totalorder %s147, %s149
      %p156 = scmp.eq.s32.totalorder %s29, 5
      %p157 = por %p155, %p156
      %p158 = scmp.ne.s32.totalorder %s149, %s150
      %p159 = scmp.eq.s32.totalorder %s29, 0
      %p160 = por %p158, %p159
      %p161 = scmp.ne.s32.totalorder %s149, %s150
      %p162 = scmp.eq.s32.totalorder %s30, 5
      %p163 = por %p161, %p162
      %p165 = scmp.ne.s32.totalorder %s150, %s164
      %p166 = scmp.eq.s32.totalorder %s30, 0
      %p167 = por %p165, %p166
      %s169 = sadd.s32 %s168, 1
      %p172 = scmp.eq.s32.totalorder %s24, 5
      %p173 = scmp.ne.s32.totalorder %s168, %s170
      %p174 = scmp.eq.s32.totalorder %s24, 0
      %p175 = por %p173, %p174
      %p176 = scmp.ne.s32.totalorder %s168, %s170
      %p177 = scmp.eq.s32.totalorder %s29, 5
      %p178 = por %p176, %p177
      %p179 = scmp.ne.s32.totalorder %s170, %s171
      %p180 = scmp.eq.s32.totalorder %s29, 0
      %p181 = por %p179, %p180
      %p182 = scmp.ne.s32.totalorder %s170, %s171
      %p183 = scmp.eq.s32.totalorder %s30, 5
      %p184 = por %p182, %p183
      %p186 = scmp.ne.s32.totalorder %s171, %s185
      %p187 = scmp.eq.s32.totalorder %s30, 0
      %p188 = por %p186, %p187
      %s190 = sadd.s32 %s189, 1
      %p193 = scmp.eq.s32.totalorder %s24, 5
      %p194 = scmp.ne.s32.totalorder %s189, %s191
      %p195 = scmp.eq.s32.totalorder %s24, 0
      %p196 = por %p194, %p195
      %p197 = scmp.ne.s32.totalorder %s189, %s191
      %p198 = scmp.eq.s32.totalorder %s29, 5
      %p199 = por %p197, %p198
      %p200 = scmp.ne.s32.totalorder %s191, %s192
      %p201 = scmp.eq.s32.totalorder %s29, 0
      %p202 = por %p200, %p201
      %p203 = scmp.ne.s32.totalorder %s191, %s192
      %p204 = scmp.eq.s32.totalorder %s30, 5
      %p205 = por %p203, %p204
      %p207 = scmp.ne.s32.totalorder %s192, %s206
      %p208 = scmp.eq.s32.totalorder %s30, 0
      %p209 = por %p207, %p208
      %s211 = sadd.s32 %s210, 1
      %p214 = scmp.eq.s32.totalorder %s24, 5
      %p215 = scmp.ne.s32.totalorder %s210, %s212
      %p216 = scmp.eq.s32.totalorder %s24, 0
      %p217 = por %p215, %p216
      %p218 = scmp.ne.s32.totalorder %s210, %s212
      %p219 = scmp.eq.s32.totalorder %s29, 5
      %p220 = por %p218, %p219
      %p221 = scmp.ne.s32.totalorder %s212, %s213
      %p222 = scmp.eq.s32.totalorder %s29, 0
      %p223 = por %p221, %p222
      %p224 = scmp.ne.s32.totalorder %s212, %s213
      %p225 = scmp.eq.s32.totalorder %s30, 5
      %p226 = por %p224, %p225
      %p228 = scmp.ne.s32.totalorder %s213, %s227
      %p229 = scmp.eq.s32.totalorder %s30, 0
      %p230 = por %p228, %p229
      %s232 = sadd.s32 %s231, 1
      %p235 = scmp.eq.s32.totalorder %s24, 5
      %p236 = scmp.ne.s32.totalorder %s231, %s233
      %p237 = scmp.eq.s32.totalorder %s24, 0
      %p238 = por %p236, %p237
      %p239 = scmp.ne.s32.totalorder %s231, %s233
      %p240 = scmp.eq.s32.totalorder %s29, 5
      %p241 = por %p239, %p240
      %p242 = scmp.ne.s32.totalorder %s233, %s234
      %p243 = scmp.eq.s32.totalorder %s29, 0
      %p244 = por %p242, %p243
      %p245 = scmp.ne.s32.totalorder %s233, %s234
      %p246 = scmp.eq.s32.totalorder %s30, 5
      %p247 = por %p245, %p246
      %p249 = scmp.ne.s32.totalorder %s234, %s248
      %p250 = scmp.eq.s32.totalorder %s30, 0
      %p251 = por %p249, %p250
      %p252 = scmp.le.s32.totalorder 1, %s24
      %p253 = scmp.lt.s32.totalorder %s24, 7
      %p254 = pnand %p252, %p253
      %p255 = pneg %p254
      // Predicated region
      $region9: #{fc_forward.1} parent=5 // pred_check
        _
      $region10: #{fc_forward.1} parent=5 // pred_check_branch
        %257 = sbr.rel (%p254) target = $region12
      $region11: #{fc_forward.1} parent=5 // pred_region
        %s258 = ssub.s32 %s24, 1
        // Predicated region
        $region13: #{fc_forward.1} parent=11 // pred_check
          %p259 = pneg %p97
        $region14: #{fc_forward.1} parent=11 // pred_check_branch
          %261 = sbr.rel (%p259) target = $region16
        $region15: #{fc_forward.1} parent=11 // pred_region
          %s263 = ssub.s32 64, 64
          %264 = vsyncadd [#allocation7], %s263
          %s266 = sshll.u32 [#allocation8], 4
          %s267 = int_to_ptr.vmem [resolvable:$true] %s266
          %269 = dma.hbm_to_vmem [thread:$0]  %s2, 64, %s267, [#allocation7]
        $region16: #{fc_forward.1} parent=11 // pred_fallthru
          _
        // Predicated region
        $region17: #{fc_forward.1} parent=11 // pred_check
          %p270 = pneg %p118
        $region18: #{fc_forward.1} parent=11 // pred_check_branch
          %272 = sbr.rel (%p270) target = $region20
        $region19: #{fc_forward.1} parent=11 // pred_region
          %s274 = ssub.s32 8192, 8192
          %275 = vsyncadd [#allocation10], %s274
          %s276 = sshll.u32 [#allocation9], 4
          %s277 = int_to_ptr.vmem [resolvable:$true] %s276
          %282 = dma.hbm_to_vmem [thread:$0]  %s3, 8192, %s277, [#allocation10], 128, 128, 8
        $region20: #{fc_forward.1} parent=11 // pred_fallthru
          _
        // Predicated region
        $region21: #{fc_forward.1} parent=11 // pred_check
          %p283 = pneg %p139
        $region22: #{fc_forward.1} parent=11 // pred_check_branch
          %285 = sbr.rel (%p283) target = $region24
        $region23: #{fc_forward.1} parent=11 // pred_region
          %s287 = ssub.s32 16, 16
          %288 = vsyncadd [#allocation10], %s287
          %s290 = sshll.u32 [#allocation11], 4
          %s291 = int_to_ptr.vmem [resolvable:$true] %s290
          %293 = dma.hbm_to_vmem [thread:$0]  %s4, 16, %s291, [#allocation10]
        $region24: #{fc_forward.1} parent=11 // pred_fallthru
          _
        // Predicated region
        $region25: #{fc_forward.1} parent=11 // pred_check
          %p294 = pneg %p160
        $region26: #{fc_forward.1} parent=11 // pred_check_branch
          %296 = sbr.rel (%p294) target = $region28
        $region27: #{fc_forward.1} parent=11 // pred_region
          _
        $region28: #{fc_forward.1} parent=11 // pred_fallthru
          _
        // Predicated region
        $region29: #{fc_forward.1} parent=11 // pred_check
          %p297 = pneg %p181
        $region30: #{fc_forward.1} parent=11 // pred_check_branch
          %299 = sbr.rel (%p297) target = $region32
        $region31: #{fc_forward.1} parent=11 // pred_region
          %s301 = ssub.s32 16, 16
          %302 = vsyncadd [#allocation13], %s301
          %s304 = sshll.u32 [#allocation12], 4
          %s305 = int_to_ptr.vmem [resolvable:$true] %s304
          %307 = dma.hbm_to_vmem [thread:$0]  %s6, 16, %s305, [#allocation13]
        $region32: #{fc_forward.1} parent=11 // pred_fallthru
          _
        // Predicated region
        $region33: #{fc_forward.1} parent=11 // pred_check
          %p308 = pneg %p202
        $region34: #{fc_forward.1} parent=11 // pred_check_branch
          %310 = sbr.rel (%p308) target = $region36
        $region35: #{fc_forward.1} parent=11 // pred_region
          _
        $region36: #{fc_forward.1} parent=11 // pred_fallthru
          _
        // Predicated region
        $region37: #{fc_forward.1} parent=11 // pred_check
          %p311 = pneg %p223
        $region38: #{fc_forward.1} parent=11 // pred_check_branch
          %313 = sbr.rel (%p311) target = $region40
        $region39: #{fc_forward.1} parent=11 // pred_region
          %s315 = ssub.s32 16, 16
          %316 = vsyncadd [#allocation13], %s315
          %s318 = sshll.u32 [#allocation14], 4
          %s319 = int_to_ptr.vmem [resolvable:$true] %s318
          %321 = dma.hbm_to_vmem [thread:$0]  %s8, 16, %s319, [#allocation13]
        $region40: #{fc_forward.1} parent=11 // pred_fallthru
          _
      $region12: #{fc_forward.1} parent=5 // pred_fallthru
        _
      %p322 = scmp.lt.s32.totalorder %s24, 6
      // Predicated region
      $region41: #{fc_forward.1} parent=5 // pred_check
        %p323 = pneg %p322
      $region42: #{fc_forward.1} parent=5 // pred_check_branch
        %325 = sbr.rel (%p323) target = $region44
      $region43: #{fc_forward.1} parent=5 // pred_region
        // Predicated region
        $region45: #{fc_forward.1} parent=43 // pred_check
          %p326 = pneg %p44
        $region46: #{fc_forward.1} parent=43 // pred_check_branch
          %328 = sbr.rel (%p326) target = $region48
        $region47: #{fc_forward.1} parent=43 // pred_region
          %s329 = sand.u32 %s34, 1
          %s330 = scalar_lea.sflag [#allocation4], %s329
          %s331 = sand.u32 %s34, 1
          %s332 = smul.addr %s331, 54
          %s333 = scalar_lea.vmem [#allocation3], %s332
          %s334 = smul.u32 27, %s24
          %s336 = ssub.s32 864, 864
          %337 = vsyncadd %s330, %s336
          %s338 = smul.addr %s334, 32
          %s339 = scalar_lea.hbm %s0, %s338
          %s341 = sshll.u32 %s333, 4
          %s342 = int_to_ptr.vmem [resolvable:$true] %s341
          %344 = dma.hbm_to_vmem [thread:$0]  %s339, 864, %s342, %s330
        $region48: #{fc_forward.1} parent=43 // pred_fallthru
          _
        // Predicated region
        $region49: #{fc_forward.1} parent=43 // pred_check
          %p345 = pneg %p70
        $region50: #{fc_forward.1} parent=43 // pred_check_branch
          %347 = sbr.rel (%p345) target = $region52
        $region51: #{fc_forward.1} parent=43 // pred_region
          %s348 = sand.u32 %s24, 1
          %s349 = scalar_lea.sflag [#allocation7], %s348
          %s350 = sand.u32 %s60, 1
          %s351 = smul.addr %s350, 6912
          %s352 = scalar_lea.vmem [#allocation6], %s351
          %s353 = smul.u32 432, %s24
          %s355 = ssub.s32 110592, 110592
          %356 = vsyncadd %s349, %s355
          %s357 = smul.addr %s353, 4
          %s358 = smul.addr %s357, 64
          %s359 = scalar_lea.hbm %s1, %s358
          %s360 = sshll.u32 %s352, 4
          %s361 = int_to_ptr.vmem [resolvable:$true] %s360
          %366 = dma.hbm_to_vmem [thread:$0]  %s359, 110592, %s361, %s349, 256, 256, 16
        $region52: #{fc_forward.1} parent=43 // pred_fallthru
          _
      $region44: #{fc_forward.1} parent=5 // pred_fallthru
        _
      %p367 = scmp.le.s32.totalorder 1, %s24
      %p368 = scmp.lt.s32.totalorder %s24, 7
      %p369 = pnand %p367, %p368
      %p370 = pneg %p369
      // Predicated region
      $region53: #{fc_forward.1} parent=5 // pred_check
        _
      $region54: #{fc_forward.1} parent=5 // pred_check_branch
        %372 = sbr.rel (%p369) target = $region56
      $region55: #{fc_forward.1} parent=5 // pred_region
        %s373 = ssub.s32 %s24, 1
        %s374 = sand.u32 %s37, 1
        %s375 = scalar_lea.sflag [#allocation4], %s374
        %s376 = sand.u32 %s37, 1
        %s377 = smul.addr %s376, 54
        %s378 = scalar_lea.vmem [#allocation3], %s377
        // Predicated region
        $region57: #{fc_forward.1} parent=55 // pred_check
          %p379 = pneg %p50
        $region58: #{fc_forward.1} parent=55 // pred_check_branch
          %381 = sbr.rel (%p379) target = $region60
        $region59: #{fc_forward.1} parent=55 // pred_region
          %382 = dma.done %s375, 864
        $region60: #{fc_forward.1} parent=55 // pred_fallthru
          _
        %s383 = sand.u32 %s29, 1
        %s384 = scalar_lea.sflag [#allocation7], %s383
        %s385 = sand.u32 %s63, 1
        %s386 = smul.addr %s385, 6912
        %s387 = scalar_lea.vmem [#allocation6], %s386
        // Predicated region
        $region61: #{fc_forward.1} parent=55 // pred_check
          %p388 = pneg %p76
        $region62: #{fc_forward.1} parent=55 // pred_check_branch
          %390 = sbr.rel (%p388) target = $region64
        $region63: #{fc_forward.1} parent=55 // pred_region
          %391 = dma.done %s384, 110592
        $region64: #{fc_forward.1} parent=55 // pred_fallthru
          _
        // Predicated region
        $region65: #{fc_forward.1} parent=55 // pred_check
          %p392 = pneg %p97
        $region66: #{fc_forward.1} parent=55 // pred_check_branch
          %394 = sbr.rel (%p392) target = $region68
        $region67: #{fc_forward.1} parent=55 // pred_region
          %395 = dma.done [#allocation7], 64
        $region68: #{fc_forward.1} parent=55 // pred_fallthru
          _
        // Predicated region
        $region69: #{fc_forward.1} parent=55 // pred_check
          %p396 = pneg %p118
        $region70: #{fc_forward.1} parent=55 // pred_check_branch
          %398 = sbr.rel (%p396) target = $region72
        $region71: #{fc_forward.1} parent=55 // pred_region
          %399 = dma.done [#allocation10], 8192
        $region72: #{fc_forward.1} parent=55 // pred_fallthru
          _
        // Predicated region
        $region73: #{fc_forward.1} parent=55 // pred_check
          %p400 = pneg %p139
        $region74: #{fc_forward.1} parent=55 // pred_check_branch
          %402 = sbr.rel (%p400) target = $region76
        $region75: #{fc_forward.1} parent=55 // pred_region
          %403 = dma.done [#allocation10], 16
        $region76: #{fc_forward.1} parent=55 // pred_fallthru
          _
        // Predicated region
        $region77: #{fc_forward.1} parent=55 // pred_check
          %p404 = pneg %p181
        $region78: #{fc_forward.1} parent=55 // pred_check_branch
          %406 = sbr.rel (%p404) target = $region80
        $region79: #{fc_forward.1} parent=55 // pred_region
          %407 = dma.done [#allocation13], 16
        $region80: #{fc_forward.1} parent=55 // pred_fallthru
          _
        // Predicated region
        $region81: #{fc_forward.1} parent=55 // pred_check
          %p408 = pneg %p223
        $region82: #{fc_forward.1} parent=55 // pred_check_branch
          %410 = sbr.rel (%p408) target = $region84
        $region83: #{fc_forward.1} parent=55 // pred_region
          %411 = dma.done [#allocation13], 16
        $region84: #{fc_forward.1} parent=55 // pred_fallthru
          _
        %s412 = sand.u32 %s37, 1
        %s413 = scalar_lea.sflag [#allocation4], %s412
        %s414 = sand.u32 %s37, 1
        %s415 = smul.addr %s414, 54
        %s416 = scalar_lea.vmem [#allocation3], %s415
        %p417 = pneg %p50
        %p418 = pneg %p47
        %s419 = sand.u32 %s29, 1
        %s420 = scalar_lea.sflag [#allocation7], %s419
        %s421 = sand.u32 %s63, 1
        %s422 = smul.addr %s421, 6912
        %s423 = scalar_lea.vmem [#allocation6], %s422
        %p424 = pneg %p76
        %p425 = pneg %p73
        %p426 = pneg %p97
        %p427 = pneg %p94
        %p428 = pneg %p118
        %p429 = pneg %p115
        %p430 = pneg %p139
        %p431 = pneg %p136
        %p432 = pneg %p160
        %p433 = pneg %p157
        %p434 = pneg %p181
        %p435 = pneg %p178
        %p436 = pneg %p202
        %p437 = pneg %p199
        %p438 = pneg %p223
        %p439 = pneg %p220
        %p440 = pneg %p244
        %p441 = pneg %p241
        %s442 = smul.u32 27, %s29
        %s443 = smul.u32 432, %s29
        %p445 = scmp.eq.s32.totalorder %s29, 0
        // Predicated region
        $region85: #{fc_forward.1} parent=55 // pred_check
          %p446 = pneg %p445
        $region86: #{fc_forward.1} parent=55 // pred_check_branch
          %448 = sbr.rel (%p446) target = $region88
        $region87: #{fc_forward.1} parent=55 // pred_region
          %449 = vst [vmem:[#allocation2] sm:$0xff] 0.0
        $region88: #{fc_forward.1} parent=55 // pred_fallthru
          _
        %v450 = vld [vmem:[#allocation2] sm:$0xff]
        %v451 = vld [vmem:[%s378] sm:$0xff]
        %v452 = vld [vmem:[%s378 + $0x8] sm:$0xff]
        %v453 = vld [vmem:[%s378 + $0x10] sm:$0xff]
        %v454 = vld [vmem:[%s378 + $0x18] sm:$0xff]
        %v455 = vld [vmem:[%s378 + $0x20] sm:$0xff]
        %v456 = vld [vmem:[%s378 + $0x28] sm:$0xff]
        %v457 = vld [vmem:[%s378 + $0x30] sm:$0x3f]
        %v465 = vcombine.high %v451, %v451
        %v467 = vunpack.c.l.s4 1983009808
        %v468 = vunpack.c.0.s8 %v467
        %v469 = vlaneseq
        %v470 = vshrl.u32 %v469, 7
        %v471 = vsub.s32 %v468, %v470
        %v472 = vrot.slane %v451, %v471
        %v474 = vunpack.c.l.s4 1983009808
        %v475 = vunpack.c.0.s8 %v474
        %v476 = vlaneseq
        %v477 = vshrl.u32 %v476, 7
        %v478 = vsub.s32 %v475, %v477
        %v479 = vrot.slane %v465, %v478
        %v480 = vcombine.high %v472, %v472
        %v481 = vcombine.high %v479, %v479
        %v482 = vcombine.high %v452, %v452
        %v484 = vunpack.c.l.s4 1983009808
        %v485 = vunpack.c.0.s8 %v484
        %v486 = vlaneseq
        %v487 = vshrl.u32 %v486, 7
        %v488 = vsub.s32 %v485, %v487
        %v489 = vrot.slane %v452, %v488
        %v491 = vunpack.c.l.s4 1983009808
        %v492 = vunpack.c.0.s8 %v491
        %v493 = vlaneseq
        %v494 = vshrl.u32 %v493, 7
        %v495 = vsub.s32 %v492, %v494
        %v496 = vrot.slane %v482, %v495
        %v497 = vcombine.high %v489, %v489
        %v498 = vcombine.high %v496, %v496
        %v499 = vcombine.high %v453, %v453
        %v501 = vunpack.c.l.s4 1983009808
        %v502 = vunpack.c.0.s8 %v501
        %v503 = vlaneseq
        %v504 = vshrl.u32 %v503, 7
        %v505 = vsub.s32 %v502, %v504
        %v506 = vrot.slane %v453, %v505
        %v508 = vunpack.c.l.s4 1983009808
        %v509 = vunpack.c.0.s8 %v508
        %v510 = vlaneseq
        %v511 = vshrl.u32 %v510, 7
        %v512 = vsub.s32 %v509, %v511
        %v513 = vrot.slane %v499, %v512
        %v514 = vcombine.high %v506, %v506
        %v515 = vcombine.high %v513, %v513
        %v516 = vcombine.high %v454, %v454
        %v518 = vunpack.c.l.s4 1983009808
        %v519 = vunpack.c.0.s8 %v518
        %v520 = vlaneseq
        %v521 = vshrl.u32 %v520, 7
        %v522 = vsub.s32 %v519, %v521
        %v523 = vrot.slane %v454, %v522
        %v525 = vunpack.c.l.s4 1983009808
        %v526 = vunpack.c.0.s8 %v525
        %v527 = vlaneseq
        %v528 = vshrl.u32 %v527, 7
        %v529 = vsub.s32 %v526, %v528
        %v530 = vrot.slane %v516, %v529
        %v531 = vcombine.high %v523, %v523
        %v532 = vcombine.high %v530, %v530
        %v533 = vcombine.high %v455, %v455
        %v535 = vunpack.c.l.s4 1983009808
        %v536 = vunpack.c.0.s8 %v535
        %v537 = vlaneseq
        %v538 = vshrl.u32 %v537, 7
        %v539 = vsub.s32 %v536, %v538
        %v540 = vrot.slane %v455, %v539
        %v542 = vunpack.c.l.s4 1983009808
        %v543 = vunpack.c.0.s8 %v542
        %v544 = vlaneseq
        %v545 = vshrl.u32 %v544, 7
        %v546 = vsub.s32 %v543, %v545
        %v547 = vrot.slane %v533, %v546
        %v548 = vcombine.high %v540, %v540
        %v549 = vcombine.high %v547, %v547
        %v550 = vcombine.high %v456, %v456
        %v552 = vunpack.c.l.s4 1983009808
        %v553 = vunpack.c.0.s8 %v552
        %v554 = vlaneseq
        %v555 = vshrl.u32 %v554, 7
        %v556 = vsub.s32 %v553, %v555
        %v557 = vrot.slane %v456, %v556
        %v559 = vunpack.c.l.s4 1983009808
        %v560 = vunpack.c.0.s8 %v559
        %v561 = vlaneseq
        %v562 = vshrl.u32 %v561, 7
        %v563 = vsub.s32 %v560, %v562
        %v564 = vrot.slane %v550, %v563
        %v565 = vcombine.high %v557, %v557
        %v566 = vcombine.high %v564, %v564
        %v567 = vcombine.high %v457, %v457
        %v569 = vunpack.c.l.s4 1983009808
        %v570 = vunpack.c.0.s8 %v569
        %v571 = vlaneseq
        %v572 = vshrl.u32 %v571, 7
        %v573 = vsub.s32 %v570, %v572
        %v574 = vrot.slane %v457, %v573
        %v576 = vunpack.c.l.s4 1983009808
        %v577 = vunpack.c.0.s8 %v576
        %v578 = vlaneseq
        %v579 = vshrl.u32 %v578, 7
        %v580 = vsub.s32 %v577, %v579
        %v581 = vrot.slane %v567, %v580
        %v582 = vcombine.high %v574, %v574
        %v610 = vpack.c.bf16 %v472, %v472
        %v611 = vpack.c.bf16 %v480, %v480
        %v612 = vpack.c.bf16 %v479, %v479
        %v613 = vpack.c.bf16 %v481, %v481
        %v614 = vpack.c.bf16 %v489, %v489
        %v615 = vpack.c.bf16 %v497, %v497
        %v616 = vpack.c.bf16 %v496, %v496
        %v617 = vpack.c.bf16 %v498, %v498
        %v618 = vpack.c.bf16 %v506, %v506
        %v619 = vpack.c.bf16 %v514, %v514
        %v620 = vpack.c.bf16 %v513, %v513
        %v621 = vpack.c.bf16 %v515, %v515
        %v622 = vpack.c.bf16 %v523, %v523
        %v623 = vpack.c.bf16 %v531, %v531
        %v624 = vpack.c.bf16 %v530, %v530
        %v625 = vpack.c.bf16 %v532, %v532
        %v626 = vpack.c.bf16 %v540, %v540
        %v627 = vpack.c.bf16 %v548, %v548
        %v628 = vpack.c.bf16 %v547, %v547
        %v629 = vpack.c.bf16 %v549, %v549
        %v630 = vpack.c.bf16 %v557, %v557
        %v631 = vpack.c.bf16 %v565, %v565
        %v632 = vpack.c.bf16 %v564, %v564
        %v633 = vpack.c.bf16 %v566, %v566
        %v634 = vpack.c.bf16 %v574, %v574
        %v635 = vpack.c.bf16 %v582, %v582
        %v636 = vpack.c.bf16 %v581, %v581
        %v637 = vld [vmem:[%s387] sm:$0xff]
        %v638 = vld [vmem:[%s387 + $0x8] sm:$0xff]
        %v639 = vld [vmem:[%s387 + $0x10] sm:$0xff]
        %v640 = vld [vmem:[%s387 + $0x18] sm:$0xff]
        %v641 = vld [vmem:[%s387 + $0x20] sm:$0xff]
        %v642 = vld [vmem:[%s387 + $0x28] sm:$0xff]
        %v643 = vld [vmem:[%s387 + $0x30] sm:$0xff]
        %v644 = vld [vmem:[%s387 + $0x38] sm:$0xff]
        %v645 = vld [vmem:[%s387 + $0x40] sm:$0xff]
        %v646 = vld [vmem:[%s387 + $0x48] sm:$0xff]
        %v647 = vld [vmem:[%s387 + $0x50] sm:$0xff]
        %v648 = vld [vmem:[%s387 + $0x58] sm:$0xff]
        %v649 = vld [vmem:[%s387 + $0x60] sm:$0xff]
        %v650 = vld [vmem:[%s387 + $0x68] sm:$0xff]
        %v651 = vld [vmem:[%s387 + $0x70] sm:$0xff]
        %v652 = vld [vmem:[%s387 + $0x78] sm:$0xff]
        %v653 = vld [vmem:[%s387 + $0x80] sm:$0xff]
        %v654 = vld [vmem:[%s387 + $0x88] sm:$0xff]
        %v655 = vld [vmem:[%s387 + $0x90] sm:$0xff]
        %v656 = vld [vmem:[%s387 + $0x98] sm:$0xff]
        %v657 = vld [vmem:[%s387 + $0xa0] sm:$0xff]
        %v658 = vld [vmem:[%s387 + $0xa8] sm:$0xff]
        %v659 = vld [vmem:[%s387 + $0xb0] sm:$0xff]
        %v660 = vld [vmem:[%s387 + $0xb8] sm:$0xff]
        %v661 = vld [vmem:[%s387 + $0xc0] sm:$0xff]
        %v662 = vld [vmem:[%s387 + $0xc8] sm:$0xff]
        %v663 = vld [vmem:[%s387 + $0xd0] sm:$0xff]
        %v664 = vld [vmem:[%s387 + $0xd8] sm:$0xff]
        %v665 = vld [vmem:[%s387 + $0xe0] sm:$0xff]
        %v666 = vld [vmem:[%s387 + $0xe8] sm:$0xff]
        %v667 = vld [vmem:[%s387 + $0xf0] sm:$0xff]
        %v668 = vld [vmem:[%s387 + $0xf8] sm:$0xff]
        %v669 = vld [vmem:[%s387 + $0x100] sm:$0xff]
        %v670 = vld [vmem:[%s387 + $0x108] sm:$0xff]
        %v671 = vld [vmem:[%s387 + $0x110] sm:$0xff]
        %v672 = vld [vmem:[%s387 + $0x118] sm:$0xff]
        %v673 = vld [vmem:[%s387 + $0x120] sm:$0xff]
        %v674 = vld [vmem:[%s387 + $0x128] sm:$0xff]
        %v675 = vld [vmem:[%s387 + $0x130] sm:$0xff]
        %v676 = vld [vmem:[%s387 + $0x138] sm:$0xff]
        %v677 = vld [vmem:[%s387 + $0x140] sm:$0xff]
        %v678 = vld [vmem:[%s387 + $0x148] sm:$0xff]
        %v679 = vld [vmem:[%s387 + $0x150] sm:$0xff]
        %v680 = vld [vmem:[%s387 + $0x158] sm:$0xff]
        %v681 = vld [vmem:[%s387 + $0x160] sm:$0xff]
        %v682 = vld [vmem:[%s387 + $0x168] sm:$0xff]
        %v683 = vld [vmem:[%s387 + $0x170] sm:$0xff]
        %v684 = vld [vmem:[%s387 + $0x178] sm:$0xff]
        %v685 = vld [vmem:[%s387 + $0x180] sm:$0xff]
        %v686 = vld [vmem:[%s387 + $0x188] sm:$0xff]
        %v687 = vld [vmem:[%s387 + $0x190] sm:$0xff]
        %v688 = vld [vmem:[%s387 + $0x198] sm:$0xff]
        %v689 = vld [vmem:[%s387 + $0x1a0] sm:$0xff]
        %v690 = vld [vmem:[%s387 + $0x1a8] sm:$0xff]
        %v691 = vld [vmem:[%s387 + $0x1b0] sm:$0xff]
        %v692 = vld [vmem:[%s387 + $0x1b8] sm:$0xff]
        %v693 = vld [vmem:[%s387 + $0x1c0] sm:$0xff]
        %v694 = vld [vmem:[%s387 + $0x1c8] sm:$0xff]
        %v695 = vld [vmem:[%s387 + $0x1d0] sm:$0xff]
        %v696 = vld [vmem:[%s387 + $0x1d8] sm:$0xff]
        %v697 = vld [vmem:[%s387 + $0x1e0] sm:$0xff]
        %v698 = vld [vmem:[%s387 + $0x1e8] sm:$0xff]
        %v699 = vld [vmem:[%s387 + $0x1f0] sm:$0xff]
        %v700 = vld [vmem:[%s387 + $0x1f8] sm:$0xff]
        %v701 = vld [vmem:[%s387 + $0x200] sm:$0xff]
        %v702 = vld [vmem:[%s387 + $0x208] sm:$0xff]
        %v703 = vld [vmem:[%s387 + $0x210] sm:$0xff]
        %v704 = vld [vmem:[%s387 + $0x218] sm:$0xff]
        %v705 = vld [vmem:[%s387 + $0x220] sm:$0xff]
        %v706 = vld [vmem:[%s387 + $0x228] sm:$0xff]
        %v707 = vld [vmem:[%s387 + $0x230] sm:$0xff]
        %v708 = vld [vmem:[%s387 + $0x238] sm:$0xff]
        %v709 = vld [vmem:[%s387 + $0x240] sm:$0xff]
        %v710 = vld [vmem:[%s387 + $0x248] sm:$0xff]
        %v711 = vld [vmem:[%s387 + $0x250] sm:$0xff]
        %v712 = vld [vmem:[%s387 + $0x258] sm:$0xff]
        %v713 = vld [vmem:[%s387 + $0x260] sm:$0xff]
        %v714 = vld [vmem:[%s387 + $0x268] sm:$0xff]
        %v715 = vld [vmem:[%s387 + $0x270] sm:$0xff]
        %v716 = vld [vmem:[%s387 + $0x278] sm:$0xff]
        %v717 = vld [vmem:[%s387 + $0x280] sm:$0xff]
        %v718 = vld [vmem:[%s387 + $0x288] sm:$0xff]
        %v719 = vld [vmem:[%s387 + $0x290] sm:$0xff]
        %v720 = vld [vmem:[%s387 + $0x298] sm:$0xff]
        %v721 = vld [vmem:[%s387 + $0x2a0] sm:$0xff]
        %v722 = vld [vmem:[%s387 + $0x2a8] sm:$0xff]
        %v723 = vld [vmem:[%s387 + $0x2b0] sm:$0xff]
        %v724 = vld [vmem:[%s387 + $0x2b8] sm:$0xff]
        %v725 = vld [vmem:[%s387 + $0x2c0] sm:$0xff]
        %v726 = vld [vmem:[%s387 + $0x2c8] sm:$0xff]
        %v727 = vld [vmem:[%s387 + $0x2d0] sm:$0xff]
        %v728 = vld [vmem:[%s387 + $0x2d8] sm:$0xff]
        %v729 = vld [vmem:[%s387 + $0x2e0] sm:$0xff]
        %v730 = vld [vmem:[%s387 + $0x2e8] sm:$0xff]
        %v731 = vld [vmem:[%s387 + $0x2f0] sm:$0xff]
        %v732 = vld [vmem:[%s387 + $0x2f8] sm:$0xff]
        %v733 = vld [vmem:[%s387 + $0x300] sm:$0xff]
        %v734 = vld [vmem:[%s387 + $0x308] sm:$0xff]
        %v735 = vld [vmem:[%s387 + $0x310] sm:$0xff]
        %v736 = vld [vmem:[%s387 + $0x318] sm:$0xff]
        %v737 = vld [vmem:[%s387 + $0x320] sm:$0xff]
        %v738 = vld [vmem:[%s387 + $0x328] sm:$0xff]
        %v739 = vld [vmem:[%s387 + $0x330] sm:$0xff]
        %v740 = vld [vmem:[%s387 + $0x338] sm:$0xff]
        %v741 = vld [vmem:[%s387 + $0x340] sm:$0xff]
        %v742 = vld [vmem:[%s387 + $0x348] sm:$0xff]
        %v743 = vld [vmem:[%s387 + $0x350] sm:$0xff]
        %v744 = vld [vmem:[%s387 + $0x358] sm:$0xff]
        %v745 = vld [vmem:[%s387 + $0x360] sm:$0xff]
        %v746 = vld [vmem:[%s387 + $0x368] sm:$0xff]
        %v747 = vld [vmem:[%s387 + $0x370] sm:$0xff]
        %v748 = vld [vmem:[%s387 + $0x378] sm:$0xff]
        %v749 = vld [vmem:[%s387 + $0x380] sm:$0xff]
        %v750 = vld [vmem:[%s387 + $0x388] sm:$0xff]
        %v751 = vld [vmem:[%s387 + $0x390] sm:$0xff]
        %v752 = vld [vmem:[%s387 + $0x398] sm:$0xff]
        %v753 = vld [vmem:[%s387 + $0x3a0] sm:$0xff]
        %v754 = vld [vmem:[%s387 + $0x3a8] sm:$0xff]
        %v755 = vld [vmem:[%s387 + $0x3b0] sm:$0xff]
        %v756 = vld [vmem:[%s387 + $0x3b8] sm:$0xff]
        %v757 = vld [vmem:[%s387 + $0x3c0] sm:$0xff]
        %v758 = vld [vmem:[%s387 + $0x3c8] sm:$0xff]
        %v759 = vld [vmem:[%s387 + $0x3d0] sm:$0xff]
        %v760 = vld [vmem:[%s387 + $0x3d8] sm:$0xff]
        %v761 = vld [vmem:[%s387 + $0x3e0] sm:$0xff]
        %v762 = vld [vmem:[%s387 + $0x3e8] sm:$0xff]
        %v763 = vld [vmem:[%s387 + $0x3f0] sm:$0xff]
        %v764 = vld [vmem:[%s387 + $0x3f8] sm:$0xff]
        %v765 = vld [vmem:[%s387 + $0x400] sm:$0xff]
        %v766 = vld [vmem:[%s387 + $0x408] sm:$0xff]
        %v767 = vld [vmem:[%s387 + $0x410] sm:$0xff]
        %v768 = vld [vmem:[%s387 + $0x418] sm:$0xff]
        %v769 = vld [vmem:[%s387 + $0x420] sm:$0xff]
        %v770 = vld [vmem:[%s387 + $0x428] sm:$0xff]
        %v771 = vld [vmem:[%s387 + $0x430] sm:$0xff]
        %v772 = vld [vmem:[%s387 + $0x438] sm:$0xff]
        %v773 = vld [vmem:[%s387 + $0x440] sm:$0xff]
        %v774 = vld [vmem:[%s387 + $0x448] sm:$0xff]
        %v775 = vld [vmem:[%s387 + $0x450] sm:$0xff]
        %v776 = vld [vmem:[%s387 + $0x458] sm:$0xff]
        %v777 = vld [vmem:[%s387 + $0x460] sm:$0xff]
        %v778 = vld [vmem:[%s387 + $0x468] sm:$0xff]
        %v779 = vld [vmem:[%s387 + $0x470] sm:$0xff]
        %v780 = vld [vmem:[%s387 + $0x478] sm:$0xff]
        %v781 = vld [vmem:[%s387 + $0x480] sm:$0xff]
        %v782 = vld [vmem:[%s387 + $0x488] sm:$0xff]
        %v783 = vld [vmem:[%s387 + $0x490] sm:$0xff]
        %v784 = vld [vmem:[%s387 + $0x498] sm:$0xff]
        %v785 = vld [vmem:[%s387 + $0x4a0] sm:$0xff]
        %v786 = vld [vmem:[%s387 + $0x4a8] sm:$0xff]
        %v787 = vld [vmem:[%s387 + $0x4b0] sm:$0xff]
        %v788 = vld [vmem:[%s387 + $0x4b8] sm:$0xff]
        %v789 = vld [vmem:[%s387 + $0x4c0] sm:$0xff]
        %v790 = vld [vmem:[%s387 + $0x4c8] sm:$0xff]
        %v791 = vld [vmem:[%s387 + $0x4d0] sm:$0xff]
        %v792 = vld [vmem:[%s387 + $0x4d8] sm:$0xff]
        %v793 = vld [vmem:[%s387 + $0x4e0] sm:$0xff]
        %v794 = vld [vmem:[%s387 + $0x4e8] sm:$0xff]
        %v795 = vld [vmem:[%s387 + $0x4f0] sm:$0xff]
        %v796 = vld [vmem:[%s387 + $0x4f8] sm:$0xff]
        %v797 = vld [vmem:[%s387 + $0x500] sm:$0xff]
        %v798 = vld [vmem:[%s387 + $0x508] sm:$0xff]
        %v799 = vld [vmem:[%s387 + $0x510] sm:$0xff]
        %v800 = vld [vmem:[%s387 + $0x518] sm:$0xff]
        %v801 = vld [vmem:[%s387 + $0x520] sm:$0xff]
        %v802 = vld [vmem:[%s387 + $0x528] sm:$0xff]
        %v803 = vld [vmem:[%s387 + $0x530] sm:$0xff]
        %v804 = vld [vmem:[%s387 + $0x538] sm:$0xff]
        %v805 = vld [vmem:[%s387 + $0x540] sm:$0xff]
        %v806 = vld [vmem:[%s387 + $0x548] sm:$0xff]
        %v807 = vld [vmem:[%s387 + $0x550] sm:$0xff]
        %v808 = vld [vmem:[%s387 + $0x558] sm:$0xff]
        %v809 = vld [vmem:[%s387 + $0x560] sm:$0xff]
        %v810 = vld [vmem:[%s387 + $0x568] sm:$0xff]
        %v811 = vld [vmem:[%s387 + $0x570] sm:$0xff]
        %v812 = vld [vmem:[%s387 + $0x578] sm:$0xff]
        %v813 = vld [vmem:[%s387 + $0x580] sm:$0xff]
        %v814 = vld [vmem:[%s387 + $0x588] sm:$0xff]
        %v815 = vld [vmem:[%s387 + $0x590] sm:$0xff]
        %v816 = vld [vmem:[%s387 + $0x598] sm:$0xff]
        %v817 = vld [vmem:[%s387 + $0x5a0] sm:$0xff]
        %v818 = vld [vmem:[%s387 + $0x5a8] sm:$0xff]
        %v819 = vld [vmem:[%s387 + $0x5b0] sm:$0xff]
        %v820 = vld [vmem:[%s387 + $0x5b8] sm:$0xff]
        %v821 = vld [vmem:[%s387 + $0x5c0] sm:$0xff]
        %v822 = vld [vmem:[%s387 + $0x5c8] sm:$0xff]
        %v823 = vld [vmem:[%s387 + $0x5d0] sm:$0xff]
        %v824 = vld [vmem:[%s387 + $0x5d8] sm:$0xff]
        %v825 = vld [vmem:[%s387 + $0x5e0] sm:$0xff]
        %v826 = vld [vmem:[%s387 + $0x5e8] sm:$0xff]
        %v827 = vld [vmem:[%s387 + $0x5f0] sm:$0xff]
        %v828 = vld [vmem:[%s387 + $0x5f8] sm:$0xff]
        %v829 = vld [vmem:[%s387 + $0x600] sm:$0xff]
        %v830 = vld [vmem:[%s387 + $0x608] sm:$0xff]
        %v831 = vld [vmem:[%s387 + $0x610] sm:$0xff]
        %v832 = vld [vmem:[%s387 + $0x618] sm:$0xff]
        %v833 = vld [vmem:[%s387 + $0x620] sm:$0xff]
        %v834 = vld [vmem:[%s387 + $0x628] sm:$0xff]
        %v835 = vld [vmem:[%s387 + $0x630] sm:$0xff]
        %v836 = vld [vmem:[%s387 + $0x638] sm:$0xff]
        %v837 = vld [vmem:[%s387 + $0x640] sm:$0xff]
        %v838 = vld [vmem:[%s387 + $0x648] sm:$0xff]
        %v839 = vld [vmem:[%s387 + $0x650] sm:$0xff]
        %v840 = vld [vmem:[%s387 + $0x658] sm:$0xff]
        %v841 = vld [vmem:[%s387 + $0x660] sm:$0xff]
        %v842 = vld [vmem:[%s387 + $0x668] sm:$0xff]
        %v843 = vld [vmem:[%s387 + $0x670] sm:$0xff]
        %v844 = vld [vmem:[%s387 + $0x678] sm:$0xff]
        %v845 = vld [vmem:[%s387 + $0x680] sm:$0xff]
        %v846 = vld [vmem:[%s387 + $0x688] sm:$0xff]
        %v847 = vld [vmem:[%s387 + $0x690] sm:$0xff]
        %v848 = vld [vmem:[%s387 + $0x698] sm:$0xff]
        %v849 = vld [vmem:[%s387 + $0x6a0] sm:$0xff]
        %v850 = vld [vmem:[%s387 + $0x6a8] sm:$0xff]
        %v851 = vld [vmem:[%s387 + $0x6b0] sm:$0xff]
        %v852 = vld [vmem:[%s387 + $0x6b8] sm:$0xff]
        %v853 = vld [vmem:[%s387 + $0x6c0] sm:$0xff]
        %v854 = vld [vmem:[%s387 + $0x6c8] sm:$0xff]
        %v855 = vld [vmem:[%s387 + $0x6d0] sm:$0xff]
        %v856 = vld [vmem:[%s387 + $0x6d8] sm:$0xff]
        %v857 = vld [vmem:[%s387 + $0x6e0] sm:$0xff]
        %v858 = vld [vmem:[%s387 + $0x6e8] sm:$0xff]
        %v859 = vld [vmem:[%s387 + $0x6f0] sm:$0xff]
        %v860 = vld [vmem:[%s387 + $0x6f8] sm:$0xff]
        %v861 = vld [vmem:[%s387 + $0x700] sm:$0xff]
        %v862 = vld [vmem:[%s387 + $0x708] sm:$0xff]
        %v863 = vld [vmem:[%s387 + $0x710] sm:$0xff]
        %v864 = vld [vmem:[%s387 + $0x718] sm:$0xff]
        %v865 = vld [vmem:[%s387 + $0x720] sm:$0xff]
        %v866 = vld [vmem:[%s387 + $0x728] sm:$0xff]
        %v867 = vld [vmem:[%s387 + $0x730] sm:$0xff]
        %v868 = vld [vmem:[%s387 + $0x738] sm:$0xff]
        %v869 = vld [vmem:[%s387 + $0x740] sm:$0xff]
        %v870 = vld [vmem:[%s387 + $0x748] sm:$0xff]
        %v871 = vld [vmem:[%s387 + $0x750] sm:$0xff]
        %v872 = vld [vmem:[%s387 + $0x758] sm:$0xff]
        %v873 = vld [vmem:[%s387 + $0x760] sm:$0xff]
        %v874 = vld [vmem:[%s387 + $0x768] sm:$0xff]
        %v875 = vld [vmem:[%s387 + $0x770] sm:$0xff]
        %v876 = vld [vmem:[%s387 + $0x778] sm:$0xff]
        %v877 = vld [vmem:[%s387 + $0x780] sm:$0xff]
        %v878 = vld [vmem:[%s387 + $0x788] sm:$0xff]
        %v879 = vld [vmem:[%s387 + $0x790] sm:$0xff]
        %v880 = vld [vmem:[%s387 + $0x798] sm:$0xff]
        %v881 = vld [vmem:[%s387 + $0x7a0] sm:$0xff]
        %v882 = vld [vmem:[%s387 + $0x7a8] sm:$0xff]
        %v883 = vld [vmem:[%s387 + $0x7b0] sm:$0xff]
        %v884 = vld [vmem:[%s387 + $0x7b8] sm:$0xff]
        %v885 = vld [vmem:[%s387 + $0x7c0] sm:$0xff]
        %v886 = vld [vmem:[%s387 + $0x7c8] sm:$0xff]
        %v887 = vld [vmem:[%s387 + $0x7d0] sm:$0xff]
        %v888 = vld [vmem:[%s387 + $0x7d8] sm:$0xff]
        %v889 = vld [vmem:[%s387 + $0x7e0] sm:$0xff]
        %v890 = vld [vmem:[%s387 + $0x7e8] sm:$0xff]
        %v891 = vld [vmem:[%s387 + $0x7f0] sm:$0xff]
        %v892 = vld [vmem:[%s387 + $0x7f8] sm:$0xff]
        %v893 = vld [vmem:[%s387 + $0x800] sm:$0xff]
        %v894 = vld [vmem:[%s387 + $0x808] sm:$0xff]
        %v895 = vld [vmem:[%s387 + $0x810] sm:$0xff]
        %v896 = vld [vmem:[%s387 + $0x818] sm:$0xff]
        %v897 = vld [vmem:[%s387 + $0x820] sm:$0xff]
        %v898 = vld [vmem:[%s387 + $0x828] sm:$0xff]
        %v899 = vld [vmem:[%s387 + $0x830] sm:$0xff]
        %v900 = vld [vmem:[%s387 + $0x838] sm:$0xff]
        %v901 = vld [vmem:[%s387 + $0x840] sm:$0xff]
        %v902 = vld [vmem:[%s387 + $0x848] sm:$0xff]
        %v903 = vld [vmem:[%s387 + $0x850] sm:$0xff]
        %v904 = vld [vmem:[%s387 + $0x858] sm:$0xff]
        %v905 = vld [vmem:[%s387 + $0x860] sm:$0xff]
        %v906 = vld [vmem:[%s387 + $0x868] sm:$0xff]
        %v907 = vld [vmem:[%s387 + $0x870] sm:$0xff]
        %v908 = vld [vmem:[%s387 + $0x878] sm:$0xff]
        %v909 = vld [vmem:[%s387 + $0x880] sm:$0xff]
        %v910 = vld [vmem:[%s387 + $0x888] sm:$0xff]
        %v911 = vld [vmem:[%s387 + $0x890] sm:$0xff]
        %v912 = vld [vmem:[%s387 + $0x898] sm:$0xff]
        %v913 = vld [vmem:[%s387 + $0x8a0] sm:$0xff]
        %v914 = vld [vmem:[%s387 + $0x8a8] sm:$0xff]
        %v915 = vld [vmem:[%s387 + $0x8b0] sm:$0xff]
        %v916 = vld [vmem:[%s387 + $0x8b8] sm:$0xff]
        %v917 = vld [vmem:[%s387 + $0x8c0] sm:$0xff]
        %v918 = vld [vmem:[%s387 + $0x8c8] sm:$0xff]
        %v919 = vld [vmem:[%s387 + $0x8d0] sm:$0xff]
        %v920 = vld [vmem:[%s387 + $0x8d8] sm:$0xff]
        %v921 = vld [vmem:[%s387 + $0x8e0] sm:$0xff]
        %v922 = vld [vmem:[%s387 + $0x8e8] sm:$0xff]
        %v923 = vld [vmem:[%s387 + $0x8f0] sm:$0xff]
        %v924 = vld [vmem:[%s387 + $0x8f8] sm:$0xff]
        %v925 = vld [vmem:[%s387 + $0x900] sm:$0xff]
        %v926 = vld [vmem:[%s387 + $0x908] sm:$0xff]
        %v927 = vld [vmem:[%s387 + $0x910] sm:$0xff]
        %v928 = vld [vmem:[%s387 + $0x918] sm:$0xff]
        %v929 = vld [vmem:[%s387 + $0x920] sm:$0xff]
        %v930 = vld [vmem:[%s387 + $0x928] sm:$0xff]
        %v931 = vld [vmem:[%s387 + $0x930] sm:$0xff]
        %v932 = vld [vmem:[%s387 + $0x938] sm:$0xff]
        %v933 = vld [vmem:[%s387 + $0x940] sm:$0xff]
        %v934 = vld [vmem:[%s387 + $0x948] sm:$0xff]
        %v935 = vld [vmem:[%s387 + $0x950] sm:$0xff]
        %v936 = vld [vmem:[%s387 + $0x958] sm:$0xff]
        %v937 = vld [vmem:[%s387 + $0x960] sm:$0xff]
        %v938 = vld [vmem:[%s387 + $0x968] sm:$0xff]
        %v939 = vld [vmem:[%s387 + $0x970] sm:$0xff]
        %v940 = vld [vmem:[%s387 + $0x978] sm:$0xff]
        %v941 = vld [vmem:[%s387 + $0x980] sm:$0xff]
        %v942 = vld [vmem:[%s387 + $0x988] sm:$0xff]
        %v943 = vld [vmem:[%s387 + $0x990] sm:$0xff]
        %v944 = vld [vmem:[%s387 + $0x998] sm:$0xff]
        %v945 = vld [vmem:[%s387 + $0x9a0] sm:$0xff]
        %v946 = vld [vmem:[%s387 + $0x9a8] sm:$0xff]
        %v947 = vld [vmem:[%s387 + $0x9b0] sm:$0xff]
        %v948 = vld [vmem:[%s387 + $0x9b8] sm:$0xff]
        %v949 = vld [vmem:[%s387 + $0x9c0] sm:$0xff]
        %v950 = vld [vmem:[%s387 + $0x9c8] sm:$0xff]
        %v951 = vld [vmem:[%s387 + $0x9d0] sm:$0xff]
        %v952 = vld [vmem:[%s387 + $0x9d8] sm:$0xff]
        %v953 = vld [vmem:[%s387 + $0x9e0] sm:$0xff]
        %v954 = vld [vmem:[%s387 + $0x9e8] sm:$0xff]
        %v955 = vld [vmem:[%s387 + $0x9f0] sm:$0xff]
        %v956 = vld [vmem:[%s387 + $0x9f8] sm:$0xff]
        %v957 = vld [vmem:[%s387 + $0xa00] sm:$0xff]
        %v958 = vld [vmem:[%s387 + $0xa08] sm:$0xff]
        %v959 = vld [vmem:[%s387 + $0xa10] sm:$0xff]
        %v960 = vld [vmem:[%s387 + $0xa18] sm:$0xff]
        %v961 = vld [vmem:[%s387 + $0xa20] sm:$0xff]
        %v962 = vld [vmem:[%s387 + $0xa28] sm:$0xff]
        %v963 = vld [vmem:[%s387 + $0xa30] sm:$0xff]
        %v964 = vld [vmem:[%s387 + $0xa38] sm:$0xff]
        %v965 = vld [vmem:[%s387 + $0xa40] sm:$0xff]
        %v966 = vld [vmem:[%s387 + $0xa48] sm:$0xff]
        %v967 = vld [vmem:[%s387 + $0xa50] sm:$0xff]
        %v968 = vld [vmem:[%s387 + $0xa58] sm:$0xff]
        %v969 = vld [vmem:[%s387 + $0xa60] sm:$0xff]
        %v970 = vld [vmem:[%s387 + $0xa68] sm:$0xff]
        %v971 = vld [vmem:[%s387 + $0xa70] sm:$0xff]
        %v972 = vld [vmem:[%s387 + $0xa78] sm:$0xff]
        %v973 = vld [vmem:[%s387 + $0xa80] sm:$0xff]
        %v974 = vld [vmem:[%s387 + $0xa88] sm:$0xff]
        %v975 = vld [vmem:[%s387 + $0xa90] sm:$0xff]
        %v976 = vld [vmem:[%s387 + $0xa98] sm:$0xff]
        %v977 = vld [vmem:[%s387 + $0xaa0] sm:$0xff]
        %v978 = vld [vmem:[%s387 + $0xaa8] sm:$0xff]
        %v979 = vld [vmem:[%s387 + $0xab0] sm:$0xff]
        %v980 = vld [vmem:[%s387 + $0xab8] sm:$0xff]
        %v981 = vld [vmem:[%s387 + $0xac0] sm:$0xff]
        %v982 = vld [vmem:[%s387 + $0xac8] sm:$0xff]
        %v983 = vld [vmem:[%s387 + $0xad0] sm:$0xff]
        %v984 = vld [vmem:[%s387 + $0xad8] sm:$0xff]
        %v985 = vld [vmem:[%s387 + $0xae0] sm:$0xff]
        %v986 = vld [vmem:[%s387 + $0xae8] sm:$0xff]
        %v987 = vld [vmem:[%s387 + $0xaf0] sm:$0xff]
        %v988 = vld [vmem:[%s387 + $0xaf8] sm:$0xff]
        %v989 = vld [vmem:[%s387 + $0xb00] sm:$0xff]
        %v990 = vld [vmem:[%s387 + $0xb08] sm:$0xff]
        %v991 = vld [vmem:[%s387 + $0xb10] sm:$0xff]
        %v992 = vld [vmem:[%s387 + $0xb18] sm:$0xff]
        %v993 = vld [vmem:[%s387 + $0xb20] sm:$0xff]
        %v994 = vld [vmem:[%s387 + $0xb28] sm:$0xff]
        %v995 = vld [vmem:[%s387 + $0xb30] sm:$0xff]
        %v996 = vld [vmem:[%s387 + $0xb38] sm:$0xff]
        %v997 = vld [vmem:[%s387 + $0xb40] sm:$0xff]
        %v998 = vld [vmem:[%s387 + $0xb48] sm:$0xff]
        %v999 = vld [vmem:[%s387 + $0xb50] sm:$0xff]
        %v1000 = vld [vmem:[%s387 + $0xb58] sm:$0xff]
        %v1001 = vld [vmem:[%s387 + $0xb60] sm:$0xff]
        %v1002 = vld [vmem:[%s387 + $0xb68] sm:$0xff]
        %v1003 = vld [vmem:[%s387 + $0xb70] sm:$0xff]
        %v1004 = vld [vmem:[%s387 + $0xb78] sm:$0xff]
        %v1005 = vld [vmem:[%s387 + $0xb80] sm:$0xff]
        %v1006 = vld [vmem:[%s387 + $0xb88] sm:$0xff]
        %v1007 = vld [vmem:[%s387 + $0xb90] sm:$0xff]
        %v1008 = vld [vmem:[%s387 + $0xb98] sm:$0xff]
        %v1009 = vld [vmem:[%s387 + $0xba0] sm:$0xff]
        %v1010 = vld [vmem:[%s387 + $0xba8] sm:$0xff]
        %v1011 = vld [vmem:[%s387 + $0xbb0] sm:$0xff]
        %v1012 = vld [vmem:[%s387 + $0xbb8] sm:$0xff]
        %v1013 = vld [vmem:[%s387 + $0xbc0] sm:$0xff]
        %v1014 = vld [vmem:[%s387 + $0xbc8] sm:$0xff]
        %v1015 = vld [vmem:[%s387 + $0xbd0] sm:$0xff]
        %v1016 = vld [vmem:[%s387 + $0xbd8] sm:$0xff]
        %v1017 = vld [vmem:[%s387 + $0xbe0] sm:$0xff]
        %v1018 = vld [vmem:[%s387 + $0xbe8] sm:$0xff]
        %v1019 = vld [vmem:[%s387 + $0xbf0] sm:$0xff]
        %v1020 = vld [vmem:[%s387 + $0xbf8] sm:$0xff]
        %v1021 = vld [vmem:[%s387 + $0xc00] sm:$0xff]
        %v1022 = vld [vmem:[%s387 + $0xc08] sm:$0xff]
        %v1023 = vld [vmem:[%s387 + $0xc10] sm:$0xff]
        %v1024 = vld [vmem:[%s387 + $0xc18] sm:$0xff]
        %v1025 = vld [vmem:[%s387 + $0xc20] sm:$0xff]
        %v1026 = vld [vmem:[%s387 + $0xc28] sm:$0xff]
        %v1027 = vld [vmem:[%s387 + $0xc30] sm:$0xff]
        %v1028 = vld [vmem:[%s387 + $0xc38] sm:$0xff]
        %v1029 = vld [vmem:[%s387 + $0xc40] sm:$0xff]
        %v1030 = vld [vmem:[%s387 + $0xc48] sm:$0xff]
        %v1031 = vld [vmem:[%s387 + $0xc50] sm:$0xff]
        %v1032 = vld [vmem:[%s387 + $0xc58] sm:$0xff]
        %v1033 = vld [vmem:[%s387 + $0xc60] sm:$0xff]
        %v1034 = vld [vmem:[%s387 + $0xc68] sm:$0xff]
        %v1035 = vld [vmem:[%s387 + $0xc70] sm:$0xff]
        %v1036 = vld [vmem:[%s387 + $0xc78] sm:$0xff]
        %v1037 = vld [vmem:[%s387 + $0xc80] sm:$0xff]
        %v1038 = vld [vmem:[%s387 + $0xc88] sm:$0xff]
        %v1039 = vld [vmem:[%s387 + $0xc90] sm:$0xff]
        %v1040 = vld [vmem:[%s387 + $0xc98] sm:$0xff]
        %v1041 = vld [vmem:[%s387 + $0xca0] sm:$0xff]
        %v1042 = vld [vmem:[%s387 + $0xca8] sm:$0xff]
        %v1043 = vld [vmem:[%s387 + $0xcb0] sm:$0xff]
        %v1044 = vld [vmem:[%s387 + $0xcb8] sm:$0xff]
        %v1045 = vld [vmem:[%s387 + $0xcc0] sm:$0xff]
        %v1046 = vld [vmem:[%s387 + $0xcc8] sm:$0xff]
        %v1047 = vld [vmem:[%s387 + $0xcd0] sm:$0xff]
        %v1048 = vld [vmem:[%s387 + $0xcd8] sm:$0xff]
        %v1049 = vld [vmem:[%s387 + $0xce0] sm:$0xff]
        %v1050 = vld [vmem:[%s387 + $0xce8] sm:$0xff]
        %v1051 = vld [vmem:[%s387 + $0xcf0] sm:$0xff]
        %v1052 = vld [vmem:[%s387 + $0xcf8] sm:$0xff]
        %v1053 = vld [vmem:[%s387 + $0xd00] sm:$0xff]
        %v1054 = vld [vmem:[%s387 + $0xd08] sm:$0xff]
        %v1055 = vld [vmem:[%s387 + $0xd10] sm:$0xff]
        %v1056 = vld [vmem:[%s387 + $0xd18] sm:$0xff]
        %v1057 = vld [vmem:[%s387 + $0xd20] sm:$0xff]
        %v1058 = vld [vmem:[%s387 + $0xd28] sm:$0xff]
        %v1059 = vld [vmem:[%s387 + $0xd30] sm:$0xff]
        %v1060 = vld [vmem:[%s387 + $0xd38] sm:$0xff]
        %v1061 = vld [vmem:[%s387 + $0xd40] sm:$0xff]
        %v1062 = vld [vmem:[%s387 + $0xd48] sm:$0xff]
        %v1063 = vld [vmem:[%s387 + $0xd50] sm:$0xff]
        %v1064 = vld [vmem:[%s387 + $0xd58] sm:$0xff]
        %v1065 = vld [vmem:[%s387 + $0xd60] sm:$0xff]
        %v1066 = vld [vmem:[%s387 + $0xd68] sm:$0xff]
        %v1067 = vld [vmem:[%s387 + $0xd70] sm:$0xff]
        %v1068 = vld [vmem:[%s387 + $0xd78] sm:$0xff]
        %v1069 = vld [vmem:[%s387 + $0xd80] sm:$0xff]
        %v1070 = vld [vmem:[%s387 + $0xd88] sm:$0xff]
        %v1071 = vld [vmem:[%s387 + $0xd90] sm:$0xff]
        %v1072 = vld [vmem:[%s387 + $0xd98] sm:$0xff]
        %v1073 = vld [vmem:[%s387 + $0xda0] sm:$0xff]
        %v1074 = vld [vmem:[%s387 + $0xda8] sm:$0xff]
        %v1075 = vld [vmem:[%s387 + $0xdb0] sm:$0xff]
        %v1076 = vld [vmem:[%s387 + $0xdb8] sm:$0xff]
        %v1077 = vld [vmem:[%s387 + $0xdc0] sm:$0xff]
        %v1078 = vld [vmem:[%s387 + $0xdc8] sm:$0xff]
        %v1079 = vld [vmem:[%s387 + $0xdd0] sm:$0xff]
        %v1080 = vld [vmem:[%s387 + $0xdd8] sm:$0xff]
        %v1081 = vld [vmem:[%s387 + $0xde0] sm:$0xff]
        %v1082 = vld [vmem:[%s387 + $0xde8] sm:$0xff]
        %v1083 = vld [vmem:[%s387 + $0xdf0] sm:$0xff]
        %v1084 = vld [vmem:[%s387 + $0xdf8] sm:$0xff]
        %v1085 = vld [vmem:[%s387 + $0xe00] sm:$0xff]
        %v1086 = vld [vmem:[%s387 + $0xe08] sm:$0xff]
        %v1087 = vld [vmem:[%s387 + $0xe10] sm:$0xff]
        %v1088 = vld [vmem:[%s387 + $0xe18] sm:$0xff]
        %v1089 = vld [vmem:[%s387 + $0xe20] sm:$0xff]
        %v1090 = vld [vmem:[%s387 + $0xe28] sm:$0xff]
        %v1091 = vld [vmem:[%s387 + $0xe30] sm:$0xff]
        %v1092 = vld [vmem:[%s387 + $0xe38] sm:$0xff]
        %v1093 = vld [vmem:[%s387 + $0xe40] sm:$0xff]
        %v1094 = vld [vmem:[%s387 + $0xe48] sm:$0xff]
        %v1095 = vld [vmem:[%s387 + $0xe50] sm:$0xff]
        %v1096 = vld [vmem:[%s387 + $0xe58] sm:$0xff]
        %v1097 = vld [vmem:[%s387 + $0xe60] sm:$0xff]
        %v1098 = vld [vmem:[%s387 + $0xe68] sm:$0xff]
        %v1099 = vld [vmem:[%s387 + $0xe70] sm:$0xff]
        %v1100 = vld [vmem:[%s387 + $0xe78] sm:$0xff]
        %v1101 = vld [vmem:[%s387 + $0xe80] sm:$0xff]
        %v1102 = vld [vmem:[%s387 + $0xe88] sm:$0xff]
        %v1103 = vld [vmem:[%s387 + $0xe90] sm:$0xff]
        %v1104 = vld [vmem:[%s387 + $0xe98] sm:$0xff]
        %v1105 = vld [vmem:[%s387 + $0xea0] sm:$0xff]
        %v1106 = vld [vmem:[%s387 + $0xea8] sm:$0xff]
        %v1107 = vld [vmem:[%s387 + $0xeb0] sm:$0xff]
        %v1108 = vld [vmem:[%s387 + $0xeb8] sm:$0xff]
        %v1109 = vld [vmem:[%s387 + $0xec0] sm:$0xff]
        %v1110 = vld [vmem:[%s387 + $0xec8] sm:$0xff]
        %v1111 = vld [vmem:[%s387 + $0xed0] sm:$0xff]
        %v1112 = vld [vmem:[%s387 + $0xed8] sm:$0xff]
        %v1113 = vld [vmem:[%s387 + $0xee0] sm:$0xff]
        %v1114 = vld [vmem:[%s387 + $0xee8] sm:$0xff]
        %v1115 = vld [vmem:[%s387 + $0xef0] sm:$0xff]
        %v1116 = vld [vmem:[%s387 + $0xef8] sm:$0xff]
        %v1117 = vld [vmem:[%s387 + $0xf00] sm:$0xff]
        %v1118 = vld [vmem:[%s387 + $0xf08] sm:$0xff]
        %v1119 = vld [vmem:[%s387 + $0xf10] sm:$0xff]
        %v1120 = vld [vmem:[%s387 + $0xf18] sm:$0xff]
        %v1121 = vld [vmem:[%s387 + $0xf20] sm:$0xff]
        %v1122 = vld [vmem:[%s387 + $0xf28] sm:$0xff]
        %v1123 = vld [vmem:[%s387 + $0xf30] sm:$0xff]
        %v1124 = vld [vmem:[%s387 + $0xf38] sm:$0xff]
        %v1125 = vld [vmem:[%s387 + $0xf40] sm:$0xff]
        %v1126 = vld [vmem:[%s387 + $0xf48] sm:$0xff]
        %v1127 = vld [vmem:[%s387 + $0xf50] sm:$0xff]
        %v1128 = vld [vmem:[%s387 + $0xf58] sm:$0xff]
        %v1129 = vld [vmem:[%s387 + $0xf60] sm:$0xff]
        %v1130 = vld [vmem:[%s387 + $0xf68] sm:$0xff]
        %v1131 = vld [vmem:[%s387 + $0xf70] sm:$0xff]
        %v1132 = vld [vmem:[%s387 + $0xf78] sm:$0xff]
        %v1133 = vld [vmem:[%s387 + $0xf80] sm:$0xff]
        %v1134 = vld [vmem:[%s387 + $0xf88] sm:$0xff]
        %v1135 = vld [vmem:[%s387 + $0xf90] sm:$0xff]
        %v1136 = vld [vmem:[%s387 + $0xf98] sm:$0xff]
        %v1137 = vld [vmem:[%s387 + $0xfa0] sm:$0xff]
        %v1138 = vld [vmem:[%s387 + $0xfa8] sm:$0xff]
        %v1139 = vld [vmem:[%s387 + $0xfb0] sm:$0xff]
        %v1140 = vld [vmem:[%s387 + $0xfb8] sm:$0xff]
        %v1141 = vld [vmem:[%s387 + $0xfc0] sm:$0xff]
        %v1142 = vld [vmem:[%s387 + $0xfc8] sm:$0xff]
        %v1143 = vld [vmem:[%s387 + $0xfd0] sm:$0xff]
        %v1144 = vld [vmem:[%s387 + $0xfd8] sm:$0xff]
        %v1145 = vld [vmem:[%s387 + $0xfe0] sm:$0xff]
        %v1146 = vld [vmem:[%s387 + $0xfe8] sm:$0xff]
        %v1147 = vld [vmem:[%s387 + $0xff0] sm:$0xff]
        %v1148 = vld [vmem:[%s387 + $0xff8] sm:$0xff]
        %v1149 = vld [vmem:[%s387 + $0x1000] sm:$0xff]
        %v1150 = vld [vmem:[%s387 + $0x1008] sm:$0xff]
        %v1151 = vld [vmem:[%s387 + $0x1010] sm:$0xff]
        %v1152 = vld [vmem:[%s387 + $0x1018] sm:$0xff]
        %v1153 = vld [vmem:[%s387 + $0x1020] sm:$0xff]
        %v1154 = vld [vmem:[%s387 + $0x1028] sm:$0xff]
        %v1155 = vld [vmem:[%s387 + $0x1030] sm:$0xff]
        %v1156 = vld [vmem:[%s387 + $0x1038] sm:$0xff]
        %v1157 = vld [vmem:[%s387 + $0x1040] sm:$0xff]
        %v1158 = vld [vmem:[%s387 + $0x1048] sm:$0xff]
        %v1159 = vld [vmem:[%s387 + $0x1050] sm:$0xff]
        %v1160 = vld [vmem:[%s387 + $0x1058] sm:$0xff]
        %v1161 = vld [vmem:[%s387 + $0x1060] sm:$0xff]
        %v1162 = vld [vmem:[%s387 + $0x1068] sm:$0xff]
        %v1163 = vld [vmem:[%s387 + $0x1070] sm:$0xff]
        %v1164 = vld [vmem:[%s387 + $0x1078] sm:$0xff]
        %v1165 = vld [vmem:[%s387 + $0x1080] sm:$0xff]
        %v1166 = vld [vmem:[%s387 + $0x1088] sm:$0xff]
        %v1167 = vld [vmem:[%s387 + $0x1090] sm:$0xff]
        %v1168 = vld [vmem:[%s387 + $0x1098] sm:$0xff]
        %v1169 = vld [vmem:[%s387 + $0x10a0] sm:$0xff]
        %v1170 = vld [vmem:[%s387 + $0x10a8] sm:$0xff]
        %v1171 = vld [vmem:[%s387 + $0x10b0] sm:$0xff]
        %v1172 = vld [vmem:[%s387 + $0x10b8] sm:$0xff]
        %v1173 = vld [vmem:[%s387 + $0x10c0] sm:$0xff]
        %v1174 = vld [vmem:[%s387 + $0x10c8] sm:$0xff]
        %v1175 = vld [vmem:[%s387 + $0x10d0] sm:$0xff]
        %v1176 = vld [vmem:[%s387 + $0x10d8] sm:$0xff]
        %v1177 = vld [vmem:[%s387 + $0x10e0] sm:$0xff]
        %v1178 = vld [vmem:[%s387 + $0x10e8] sm:$0xff]
        %v1179 = vld [vmem:[%s387 + $0x10f0] sm:$0xff]
        %v1180 = vld [vmem:[%s387 + $0x10f8] sm:$0xff]
        %v1181 = vld [vmem:[%s387 + $0x1100] sm:$0xff]
        %v1182 = vld [vmem:[%s387 + $0x1108] sm:$0xff]
        %v1183 = vld [vmem:[%s387 + $0x1110] sm:$0xff]
        %v1184 = vld [vmem:[%s387 + $0x1118] sm:$0xff]
        %v1185 = vld [vmem:[%s387 + $0x1120] sm:$0xff]
        %v1186 = vld [vmem:[%s387 + $0x1128] sm:$0xff]
        %v1187 = vld [vmem:[%s387 + $0x1130] sm:$0xff]
        %v1188 = vld [vmem:[%s387 + $0x1138] sm:$0xff]
        %v1189 = vld [vmem:[%s387 + $0x1140] sm:$0xff]
        %v1190 = vld [vmem:[%s387 + $0x1148] sm:$0xff]
        %v1191 = vld [vmem:[%s387 + $0x1150] sm:$0xff]
        %v1192 = vld [vmem:[%s387 + $0x1158] sm:$0xff]
        %v1193 = vld [vmem:[%s387 + $0x1160] sm:$0xff]
        %v1194 = vld [vmem:[%s387 + $0x1168] sm:$0xff]
        %v1195 = vld [vmem:[%s387 + $0x1170] sm:$0xff]
        %v1196 = vld [vmem:[%s387 + $0x1178] sm:$0xff]
        %v1197 = vld [vmem:[%s387 + $0x1180] sm:$0xff]
        %v1198 = vld [vmem:[%s387 + $0x1188] sm:$0xff]
        %v1199 = vld [vmem:[%s387 + $0x1190] sm:$0xff]
        %v1200 = vld [vmem:[%s387 + $0x1198] sm:$0xff]
        %v1201 = vld [vmem:[%s387 + $0x11a0] sm:$0xff]
        %v1202 = vld [vmem:[%s387 + $0x11a8] sm:$0xff]
        %v1203 = vld [vmem:[%s387 + $0x11b0] sm:$0xff]
        %v1204 = vld [vmem:[%s387 + $0x11b8] sm:$0xff]
        %v1205 = vld [vmem:[%s387 + $0x11c0] sm:$0xff]
        %v1206 = vld [vmem:[%s387 + $0x11c8] sm:$0xff]
        %v1207 = vld [vmem:[%s387 + $0x11d0] sm:$0xff]
        %v1208 = vld [vmem:[%s387 + $0x11d8] sm:$0xff]
        %v1209 = vld [vmem:[%s387 + $0x11e0] sm:$0xff]
        %v1210 = vld [vmem:[%s387 + $0x11e8] sm:$0xff]
        %v1211 = vld [vmem:[%s387 + $0x11f0] sm:$0xff]
        %v1212 = vld [vmem:[%s387 + $0x11f8] sm:$0xff]
        %v1213 = vld [vmem:[%s387 + $0x1200] sm:$0xff]
        %v1214 = vld [vmem:[%s387 + $0x1208] sm:$0xff]
        %v1215 = vld [vmem:[%s387 + $0x1210] sm:$0xff]
        %v1216 = vld [vmem:[%s387 + $0x1218] sm:$0xff]
        %v1217 = vld [vmem:[%s387 + $0x1220] sm:$0xff]
        %v1218 = vld [vmem:[%s387 + $0x1228] sm:$0xff]
        %v1219 = vld [vmem:[%s387 + $0x1230] sm:$0xff]
        %v1220 = vld [vmem:[%s387 + $0x1238] sm:$0xff]
        %v1221 = vld [vmem:[%s387 + $0x1240] sm:$0xff]
        %v1222 = vld [vmem:[%s387 + $0x1248] sm:$0xff]
        %v1223 = vld [vmem:[%s387 + $0x1250] sm:$0xff]
        %v1224 = vld [vmem:[%s387 + $0x1258] sm:$0xff]
        %v1225 = vld [vmem:[%s387 + $0x1260] sm:$0xff]
        %v1226 = vld [vmem:[%s387 + $0x1268] sm:$0xff]
        %v1227 = vld [vmem:[%s387 + $0x1270] sm:$0xff]
        %v1228 = vld [vmem:[%s387 + $0x1278] sm:$0xff]
        %v1229 = vld [vmem:[%s387 + $0x1280] sm:$0xff]
        %v1230 = vld [vmem:[%s387 + $0x1288] sm:$0xff]
        %v1231 = vld [vmem:[%s387 + $0x1290] sm:$0xff]
        %v1232 = vld [vmem:[%s387 + $0x1298] sm:$0xff]
        %v1233 = vld [vmem:[%s387 + $0x12a0] sm:$0xff]
        %v1234 = vld [vmem:[%s387 + $0x12a8] sm:$0xff]
        %v1235 = vld [vmem:[%s387 + $0x12b0] sm:$0xff]
        %v1236 = vld [vmem:[%s387 + $0x12b8] sm:$0xff]
        %v1237 = vld [vmem:[%s387 + $0x12c0] sm:$0xff]
        %v1238 = vld [vmem:[%s387 + $0x12c8] sm:$0xff]
        %v1239 = vld [vmem:[%s387 + $0x12d0] sm:$0xff]
        %v1240 = vld [vmem:[%s387 + $0x12d8] sm:$0xff]
        %v1241 = vld [vmem:[%s387 + $0x12e0] sm:$0xff]
        %v1242 = vld [vmem:[%s387 + $0x12e8] sm:$0xff]
        %v1243 = vld [vmem:[%s387 + $0x12f0] sm:$0xff]
        %v1244 = vld [vmem:[%s387 + $0x12f8] sm:$0xff]
        %v1245 = vld [vmem:[%s387 + $0x1300] sm:$0xff]
        %v1246 = vld [vmem:[%s387 + $0x1308] sm:$0xff]
        %v1247 = vld [vmem:[%s387 + $0x1310] sm:$0xff]
        %v1248 = vld [vmem:[%s387 + $0x1318] sm:$0xff]
        %v1249 = vld [vmem:[%s387 + $0x1320] sm:$0xff]
        %v1250 = vld [vmem:[%s387 + $0x1328] sm:$0xff]
        %v1251 = vld [vmem:[%s387 + $0x1330] sm:$0xff]
        %v1252 = vld [vmem:[%s387 + $0x1338] sm:$0xff]
        %v1253 = vld [vmem:[%s387 + $0x1340] sm:$0xff]
        %v1254 = vld [vmem:[%s387 + $0x1348] sm:$0xff]
        %v1255 = vld [vmem:[%s387 + $0x1350] sm:$0xff]
        %v1256 = vld [vmem:[%s387 + $0x1358] sm:$0xff]
        %v1257 = vld [vmem:[%s387 + $0x1360] sm:$0xff]
        %v1258 = vld [vmem:[%s387 + $0x1368] sm:$0xff]
        %v1259 = vld [vmem:[%s387 + $0x1370] sm:$0xff]
        %v1260 = vld [vmem:[%s387 + $0x1378] sm:$0xff]
        %v1261 = vld [vmem:[%s387 + $0x1380] sm:$0xff]
        %v1262 = vld [vmem:[%s387 + $0x1388] sm:$0xff]
        %v1263 = vld [vmem:[%s387 + $0x1390] sm:$0xff]
        %v1264 = vld [vmem:[%s387 + $0x1398] sm:$0xff]
        %v1265 = vld [vmem:[%s387 + $0x13a0] sm:$0xff]
        %v1266 = vld [vmem:[%s387 + $0x13a8] sm:$0xff]
        %v1267 = vld [vmem:[%s387 + $0x13b0] sm:$0xff]
        %v1268 = vld [vmem:[%s387 + $0x13b8] sm:$0xff]
        %v1269 = vld [vmem:[%s387 + $0x13c0] sm:$0xff]
        %v1270 = vld [vmem:[%s387 + $0x13c8] sm:$0xff]
        %v1271 = vld [vmem:[%s387 + $0x13d0] sm:$0xff]
        %v1272 = vld [vmem:[%s387 + $0x13d8] sm:$0xff]
        %v1273 = vld [vmem:[%s387 + $0x13e0] sm:$0xff]
        %v1274 = vld [vmem:[%s387 + $0x13e8] sm:$0xff]
        %v1275 = vld [vmem:[%s387 + $0x13f0] sm:$0xff]
        %v1276 = vld [vmem:[%s387 + $0x13f8] sm:$0xff]
        %v1277 = vld [vmem:[%s387 + $0x1400] sm:$0xff]
        %v1278 = vld [vmem:[%s387 + $0x1408] sm:$0xff]
        %v1279 = vld [vmem:[%s387 + $0x1410] sm:$0xff]
        %v1280 = vld [vmem:[%s387 + $0x1418] sm:$0xff]
        %v1281 = vld [vmem:[%s387 + $0x1420] sm:$0xff]
        %v1282 = vld [vmem:[%s387 + $0x1428] sm:$0xff]
        %v1283 = vld [vmem:[%s387 + $0x1430] sm:$0xff]
        %v1284 = vld [vmem:[%s387 + $0x1438] sm:$0xff]
        %v1285 = vld [vmem:[%s387 + $0x1440] sm:$0xff]
        %v1286 = vld [vmem:[%s387 + $0x1448] sm:$0xff]
        %v1287 = vld [vmem:[%s387 + $0x1450] sm:$0xff]
        %v1288 = vld [vmem:[%s387 + $0x1458] sm:$0xff]
        %v1289 = vld [vmem:[%s387 + $0x1460] sm:$0xff]
        %v1290 = vld [vmem:[%s387 + $0x1468] sm:$0xff]
        %v1291 = vld [vmem:[%s387 + $0x1470] sm:$0xff]
        %v1292 = vld [vmem:[%s387 + $0x1478] sm:$0xff]
        %v1293 = vld [vmem:[%s387 + $0x1480] sm:$0xff]
        %v1294 = vld [vmem:[%s387 + $0x1488] sm:$0xff]
        %v1295 = vld [vmem:[%s387 + $0x1490] sm:$0xff]
        %v1296 = vld [vmem:[%s387 + $0x1498] sm:$0xff]
        %v1297 = vld [vmem:[%s387 + $0x14a0] sm:$0xff]
        %v1298 = vld [vmem:[%s387 + $0x14a8] sm:$0xff]
        %v1299 = vld [vmem:[%s387 + $0x14b0] sm:$0xff]
        %v1300 = vld [vmem:[%s387 + $0x14b8] sm:$0xff]
        %v1301 = vld [vmem:[%s387 + $0x14c0] sm:$0xff]
        %v1302 = vld [vmem:[%s387 + $0x14c8] sm:$0xff]
        %v1303 = vld [vmem:[%s387 + $0x14d0] sm:$0xff]
        %v1304 = vld [vmem:[%s387 + $0x14d8] sm:$0xff]
        %v1305 = vld [vmem:[%s387 + $0x14e0] sm:$0xff]
        %v1306 = vld [vmem:[%s387 + $0x14e8] sm:$0xff]
        %v1307 = vld [vmem:[%s387 + $0x14f0] sm:$0xff]
        %v1308 = vld [vmem:[%s387 + $0x14f8] sm:$0xff]
        %v1309 = vld [vmem:[%s387 + $0x1500] sm:$0xff]
        %v1310 = vld [vmem:[%s387 + $0x1508] sm:$0xff]
        %v1311 = vld [vmem:[%s387 + $0x1510] sm:$0xff]
        %v1312 = vld [vmem:[%s387 + $0x1518] sm:$0xff]
        %v1313 = vld [vmem:[%s387 + $0x1520] sm:$0xff]
        %v1314 = vld [vmem:[%s387 + $0x1528] sm:$0xff]
        %v1315 = vld [vmem:[%s387 + $0x1530] sm:$0xff]
        %v1316 = vld [vmem:[%s387 + $0x1538] sm:$0xff]
        %v1317 = vld [vmem:[%s387 + $0x1540] sm:$0xff]
        %v1318 = vld [vmem:[%s387 + $0x1548] sm:$0xff]
        %v1319 = vld [vmem:[%s387 + $0x1550] sm:$0xff]
        %v1320 = vld [vmem:[%s387 + $0x1558] sm:$0xff]
        %v1321 = vld [vmem:[%s387 + $0x1560] sm:$0xff]
        %v1322 = vld [vmem:[%s387 + $0x1568] sm:$0xff]
        %v1323 = vld [vmem:[%s387 + $0x1570] sm:$0xff]
        %v1324 = vld [vmem:[%s387 + $0x1578] sm:$0xff]
        %v1325 = vld [vmem:[%s387 + $0x1580] sm:$0xff]
        %v1326 = vld [vmem:[%s387 + $0x1588] sm:$0xff]
        %v1327 = vld [vmem:[%s387 + $0x1590] sm:$0xff]
        %v1328 = vld [vmem:[%s387 + $0x1598] sm:$0xff]
        %v1329 = vld [vmem:[%s387 + $0x15a0] sm:$0xff]
        %v1330 = vld [vmem:[%s387 + $0x15a8] sm:$0xff]
        %v1331 = vld [vmem:[%s387 + $0x15b0] sm:$0xff]
        %v1332 = vld [vmem:[%s387 + $0x15b8] sm:$0xff]
        %v1333 = vld [vmem:[%s387 + $0x15c0] sm:$0xff]
        %v1334 = vld [vmem:[%s387 + $0x15c8] sm:$0xff]
        %v1335 = vld [vmem:[%s387 + $0x15d0] sm:$0xff]
        %v1336 = vld [vmem:[%s387 + $0x15d8] sm:$0xff]
        %v1337 = vld [vmem:[%s387 + $0x15e0] sm:$0xff]
        %v1338 = vld [vmem:[%s387 + $0x15e8] sm:$0xff]
        %v1339 = vld [vmem:[%s387 + $0x15f0] sm:$0xff]
        %v1340 = vld [vmem:[%s387 + $0x15f8] sm:$0xff]
        %v1341 = vld [vmem:[%s387 + $0x1600] sm:$0xff]
        %v1342 = vld [vmem:[%s387 + $0x1608] sm:$0xff]
        %v1343 = vld [vmem:[%s387 + $0x1610] sm:$0xff]
        %v1344 = vld [vmem:[%s387 + $0x1618] sm:$0xff]
        %v1345 = vld [vmem:[%s387 + $0x1620] sm:$0xff]
        %v1346 = vld [vmem:[%s387 + $0x1628] sm:$0xff]
        %v1347 = vld [vmem:[%s387 + $0x1630] sm:$0xff]
        %v1348 = vld [vmem:[%s387 + $0x1638] sm:$0xff]
        %v1349 = vld [vmem:[%s387 + $0x1640] sm:$0xff]
        %v1350 = vld [vmem:[%s387 + $0x1648] sm:$0xff]
        %v1351 = vld [vmem:[%s387 + $0x1650] sm:$0xff]
        %v1352 = vld [vmem:[%s387 + $0x1658] sm:$0xff]
        %v1353 = vld [vmem:[%s387 + $0x1660] sm:$0xff]
        %v1354 = vld [vmem:[%s387 + $0x1668] sm:$0xff]
        %v1355 = vld [vmem:[%s387 + $0x1670] sm:$0xff]
        %v1356 = vld [vmem:[%s387 + $0x1678] sm:$0xff]
        %v1357 = vld [vmem:[%s387 + $0x1680] sm:$0xff]
        %v1358 = vld [vmem:[%s387 + $0x1688] sm:$0xff]
        %v1359 = vld [vmem:[%s387 + $0x1690] sm:$0xff]
        %v1360 = vld [vmem:[%s387 + $0x1698] sm:$0xff]
        %v1361 = vld [vmem:[%s387 + $0x16a0] sm:$0xff]
        %v1362 = vld [vmem:[%s387 + $0x16a8] sm:$0xff]
        %v1363 = vld [vmem:[%s387 + $0x16b0] sm:$0xff]
        %v1364 = vld [vmem:[%s387 + $0x16b8] sm:$0xff]
        %v1365 = vld [vmem:[%s387 + $0x16c0] sm:$0xff]
        %v1366 = vld [vmem:[%s387 + $0x16c8] sm:$0xff]
        %v1367 = vld [vmem:[%s387 + $0x16d0] sm:$0xff]
        %v1368 = vld [vmem:[%s387 + $0x16d8] sm:$0xff]
        %v1369 = vld [vmem:[%s387 + $0x16e0] sm:$0xff]
        %v1370 = vld [vmem:[%s387 + $0x16e8] sm:$0xff]
        %v1371 = vld [vmem:[%s387 + $0x16f0] sm:$0xff]
        %v1372 = vld [vmem:[%s387 + $0x16f8] sm:$0xff]
        %v1373 = vld [vmem:[%s387 + $0x1700] sm:$0xff]
        %v1374 = vld [vmem:[%s387 + $0x1708] sm:$0xff]
        %v1375 = vld [vmem:[%s387 + $0x1710] sm:$0xff]
        %v1376 = vld [vmem:[%s387 + $0x1718] sm:$0xff]
        %v1377 = vld [vmem:[%s387 + $0x1720] sm:$0xff]
        %v1378 = vld [vmem:[%s387 + $0x1728] sm:$0xff]
        %v1379 = vld [vmem:[%s387 + $0x1730] sm:$0xff]
        %v1380 = vld [vmem:[%s387 + $0x1738] sm:$0xff]
        %v1381 = vld [vmem:[%s387 + $0x1740] sm:$0xff]
        %v1382 = vld [vmem:[%s387 + $0x1748] sm:$0xff]
        %v1383 = vld [vmem:[%s387 + $0x1750] sm:$0xff]
        %v1384 = vld [vmem:[%s387 + $0x1758] sm:$0xff]
        %v1385 = vld [vmem:[%s387 + $0x1760] sm:$0xff]
        %v1386 = vld [vmem:[%s387 + $0x1768] sm:$0xff]
        %v1387 = vld [vmem:[%s387 + $0x1770] sm:$0xff]
        %v1388 = vld [vmem:[%s387 + $0x1778] sm:$0xff]
        %v1389 = vld [vmem:[%s387 + $0x1780] sm:$0xff]
        %v1390 = vld [vmem:[%s387 + $0x1788] sm:$0xff]
        %v1391 = vld [vmem:[%s387 + $0x1790] sm:$0xff]
        %v1392 = vld [vmem:[%s387 + $0x1798] sm:$0xff]
        %v1393 = vld [vmem:[%s387 + $0x17a0] sm:$0xff]
        %v1394 = vld [vmem:[%s387 + $0x17a8] sm:$0xff]
        %v1395 = vld [vmem:[%s387 + $0x17b0] sm:$0xff]
        %v1396 = vld [vmem:[%s387 + $0x17b8] sm:$0xff]
        %v1397 = vld [vmem:[%s387 + $0x17c0] sm:$0xff]
        %v1398 = vld [vmem:[%s387 + $0x17c8] sm:$0xff]
        %v1399 = vld [vmem:[%s387 + $0x17d0] sm:$0xff]
        %v1400 = vld [vmem:[%s387 + $0x17d8] sm:$0xff]
        %v1401 = vld [vmem:[%s387 + $0x17e0] sm:$0xff]
        %v1402 = vld [vmem:[%s387 + $0x17e8] sm:$0xff]
        %v1403 = vld [vmem:[%s387 + $0x17f0] sm:$0xff]
        %v1404 = vld [vmem:[%s387 + $0x17f8] sm:$0xff]
        %v1405 = vld [vmem:[%s387 + $0x1800] sm:$0xff]
        %v1406 = vld [vmem:[%s387 + $0x1808] sm:$0xff]
        %v1407 = vld [vmem:[%s387 + $0x1810] sm:$0xff]
        %v1408 = vld [vmem:[%s387 + $0x1818] sm:$0xff]
        %v1409 = vld [vmem:[%s387 + $0x1820] sm:$0xff]
        %v1410 = vld [vmem:[%s387 + $0x1828] sm:$0xff]
        %v1411 = vld [vmem:[%s387 + $0x1830] sm:$0xff]
        %v1412 = vld [vmem:[%s387 + $0x1838] sm:$0xff]
        %v1413 = vld [vmem:[%s387 + $0x1840] sm:$0xff]
        %v1414 = vld [vmem:[%s387 + $0x1848] sm:$0xff]
        %v1415 = vld [vmem:[%s387 + $0x1850] sm:$0xff]
        %v1416 = vld [vmem:[%s387 + $0x1858] sm:$0xff]
        %v1417 = vld [vmem:[%s387 + $0x1860] sm:$0xff]
        %v1418 = vld [vmem:[%s387 + $0x1868] sm:$0xff]
        %v1419 = vld [vmem:[%s387 + $0x1870] sm:$0xff]
        %v1420 = vld [vmem:[%s387 + $0x1878] sm:$0xff]
        %v1421 = vld [vmem:[%s387 + $0x1880] sm:$0xff]
        %v1422 = vld [vmem:[%s387 + $0x1888] sm:$0xff]
        %v1423 = vld [vmem:[%s387 + $0x1890] sm:$0xff]
        %v1424 = vld [vmem:[%s387 + $0x1898] sm:$0xff]
        %v1425 = vld [vmem:[%s387 + $0x18a0] sm:$0xff]
        %v1426 = vld [vmem:[%s387 + $0x18a8] sm:$0xff]
        %v1427 = vld [vmem:[%s387 + $0x18b0] sm:$0xff]
        %v1428 = vld [vmem:[%s387 + $0x18b8] sm:$0xff]
        %v1429 = vld [vmem:[%s387 + $0x18c0] sm:$0xff]
        %v1430 = vld [vmem:[%s387 + $0x18c8] sm:$0xff]
        %v1431 = vld [vmem:[%s387 + $0x18d0] sm:$0xff]
        %v1432 = vld [vmem:[%s387 + $0x18d8] sm:$0xff]
        %v1433 = vld [vmem:[%s387 + $0x18e0] sm:$0xff]
        %v1434 = vld [vmem:[%s387 + $0x18e8] sm:$0xff]
        %v1435 = vld [vmem:[%s387 + $0x18f0] sm:$0xff]
        %v1436 = vld [vmem:[%s387 + $0x18f8] sm:$0xff]
        %v1437 = vld [vmem:[%s387 + $0x1900] sm:$0xff]
        %v1438 = vld [vmem:[%s387 + $0x1908] sm:$0xff]
        %v1439 = vld [vmem:[%s387 + $0x1910] sm:$0xff]
        %v1440 = vld [vmem:[%s387 + $0x1918] sm:$0xff]
        %v1441 = vld [vmem:[%s387 + $0x1920] sm:$0xff]
        %v1442 = vld [vmem:[%s387 + $0x1928] sm:$0xff]
        %v1443 = vld [vmem:[%s387 + $0x1930] sm:$0xff]
        %v1444 = vld [vmem:[%s387 + $0x1938] sm:$0xff]
        %v1445 = vld [vmem:[%s387 + $0x1940] sm:$0xff]
        %v1446 = vld [vmem:[%s387 + $0x1948] sm:$0xff]
        %v1447 = vld [vmem:[%s387 + $0x1950] sm:$0xff]
        %v1448 = vld [vmem:[%s387 + $0x1958] sm:$0xff]
        %v1449 = vld [vmem:[%s387 + $0x1960] sm:$0xff]
        %v1450 = vld [vmem:[%s387 + $0x1968] sm:$0xff]
        %v1451 = vld [vmem:[%s387 + $0x1970] sm:$0xff]
        %v1452 = vld [vmem:[%s387 + $0x1978] sm:$0xff]
        %v1453 = vld [vmem:[%s387 + $0x1980] sm:$0xff]
        %v1454 = vld [vmem:[%s387 + $0x1988] sm:$0xff]
        %v1455 = vld [vmem:[%s387 + $0x1990] sm:$0xff]
        %v1456 = vld [vmem:[%s387 + $0x1998] sm:$0xff]
        %v1457 = vld [vmem:[%s387 + $0x19a0] sm:$0xff]
        %v1458 = vld [vmem:[%s387 + $0x19a8] sm:$0xff]
        %v1459 = vld [vmem:[%s387 + $0x19b0] sm:$0xff]
        %v1460 = vld [vmem:[%s387 + $0x19b8] sm:$0xff]
        %v1461 = vld [vmem:[%s387 + $0x19c0] sm:$0xff]
        %v1462 = vld [vmem:[%s387 + $0x19c8] sm:$0xff]
        %v1463 = vld [vmem:[%s387 + $0x19d0] sm:$0xff]
        %v1464 = vld [vmem:[%s387 + $0x19d8] sm:$0xff]
        %v1465 = vld [vmem:[%s387 + $0x19e0] sm:$0xff]
        %v1466 = vld [vmem:[%s387 + $0x19e8] sm:$0xff]
        %v1467 = vld [vmem:[%s387 + $0x19f0] sm:$0xff]
        %v1468 = vld [vmem:[%s387 + $0x19f8] sm:$0xff]
        %v1469 = vld [vmem:[%s387 + $0x1a00] sm:$0xff]
        %v1470 = vld [vmem:[%s387 + $0x1a08] sm:$0xff]
        %v1471 = vld [vmem:[%s387 + $0x1a10] sm:$0xff]
        %v1472 = vld [vmem:[%s387 + $0x1a18] sm:$0xff]
        %v1473 = vld [vmem:[%s387 + $0x1a20] sm:$0xff]
        %v1474 = vld [vmem:[%s387 + $0x1a28] sm:$0xff]
        %v1475 = vld [vmem:[%s387 + $0x1a30] sm:$0xff]
        %v1476 = vld [vmem:[%s387 + $0x1a38] sm:$0xff]
        %v1477 = vld [vmem:[%s387 + $0x1a40] sm:$0xff]
        %v1478 = vld [vmem:[%s387 + $0x1a48] sm:$0xff]
        %v1479 = vld [vmem:[%s387 + $0x1a50] sm:$0xff]
        %v1480 = vld [vmem:[%s387 + $0x1a58] sm:$0xff]
        %v1481 = vld [vmem:[%s387 + $0x1a60] sm:$0xff]
        %v1482 = vld [vmem:[%s387 + $0x1a68] sm:$0xff]
        %v1483 = vld [vmem:[%s387 + $0x1a70] sm:$0xff]
        %v1484 = vld [vmem:[%s387 + $0x1a78] sm:$0xff]
        %v1485 = vld [vmem:[%s387 + $0x1a80] sm:$0xff]
        %v1486 = vld [vmem:[%s387 + $0x1a88] sm:$0xff]
        %v1487 = vld [vmem:[%s387 + $0x1a90] sm:$0xff]
        %v1488 = vld [vmem:[%s387 + $0x1a98] sm:$0xff]
        %v1489 = vld [vmem:[%s387 + $0x1aa0] sm:$0xff]
        %v1490 = vld [vmem:[%s387 + $0x1aa8] sm:$0xff]
        %v1491 = vld [vmem:[%s387 + $0x1ab0] sm:$0xff]
        %v1492 = vld [vmem:[%s387 + $0x1ab8] sm:$0xff]
        %v1493 = vld [vmem:[%s387 + $0x1ac0] sm:$0xff]
        %v1494 = vld [vmem:[%s387 + $0x1ac8] sm:$0xff]
        %v1495 = vld [vmem:[%s387 + $0x1ad0] sm:$0xff]
        %v1496 = vld [vmem:[%s387 + $0x1ad8] sm:$0xff]
        %v1497 = vld [vmem:[%s387 + $0x1ae0] sm:$0xff]
        %v1498 = vld [vmem:[%s387 + $0x1ae8] sm:$0xff]
        %v1499 = vld [vmem:[%s387 + $0x1af0] sm:$0xff]
        %v1500 = vld [vmem:[%s387 + $0x1af8] sm:$0xff]
        %v2365 = vunpack.c.l.b16 %v637
        %v2366 = vunpack.c.h.b16 %v637
        %v2367 = vunpack.c.l.b16 %v638
        %v2368 = vunpack.c.h.b16 %v638
        %v2369 = vunpack.c.l.b16 %v639
        %v2370 = vunpack.c.h.b16 %v639
        %v2371 = vunpack.c.l.b16 %v640
        %v2372 = vunpack.c.h.b16 %v640
        %v2373 = vunpack.c.l.b16 %v641
        %v2374 = vunpack.c.h.b16 %v641
        %v2375 = vunpack.c.l.b16 %v642
        %v2376 = vunpack.c.h.b16 %v642
        %v2377 = vunpack.c.l.b16 %v643
        %v2378 = vunpack.c.h.b16 %v643
        %v2379 = vunpack.c.l.b16 %v644
        %v2380 = vunpack.c.h.b16 %v644
        %v2381 = vunpack.c.l.b16 %v645
        %v2382 = vunpack.c.h.b16 %v645
        %v2383 = vunpack.c.l.b16 %v646
        %v2384 = vunpack.c.h.b16 %v646
        %v2385 = vunpack.c.l.b16 %v647
        %v2386 = vunpack.c.h.b16 %v647
        %v2387 = vunpack.c.l.b16 %v648
        %v2388 = vunpack.c.h.b16 %v648
        %v2389 = vunpack.c.l.b16 %v649
        %v2390 = vunpack.c.h.b16 %v649
        %v2391 = vunpack.c.l.b16 %v650
        %v2392 = vunpack.c.h.b16 %v650
        %v2393 = vunpack.c.l.b16 %v651
        %v2394 = vunpack.c.h.b16 %v651
        %v2395 = vunpack.c.l.b16 %v652
        %v2396 = vunpack.c.h.b16 %v652
        %v2397 = vunpack.c.l.b16 %v653
        %v2398 = vunpack.c.h.b16 %v653
        %v2399 = vunpack.c.l.b16 %v654
        %v2400 = vunpack.c.h.b16 %v654
        %v2401 = vunpack.c.l.b16 %v655
        %v2402 = vunpack.c.h.b16 %v655
        %v2403 = vunpack.c.l.b16 %v656
        %v2404 = vunpack.c.h.b16 %v656
        %v2405 = vunpack.c.l.b16 %v657
        %v2406 = vunpack.c.h.b16 %v657
        %v2407 = vunpack.c.l.b16 %v658
        %v2408 = vunpack.c.h.b16 %v658
        %v2409 = vunpack.c.l.b16 %v659
        %v2410 = vunpack.c.h.b16 %v659
        %v2411 = vunpack.c.l.b16 %v660
        %v2412 = vunpack.c.h.b16 %v660
        %v2413 = vunpack.c.l.b16 %v661
        %v2414 = vunpack.c.h.b16 %v661
        %v2415 = vunpack.c.l.b16 %v662
        %v2416 = vunpack.c.h.b16 %v662
        %v2417 = vunpack.c.l.b16 %v663
        %v2418 = vunpack.c.h.b16 %v663
        %v2419 = vunpack.c.l.b16 %v664
        %v2420 = vunpack.c.h.b16 %v664
        %v2421 = vunpack.c.l.b16 %v665
        %v2422 = vunpack.c.h.b16 %v665
        %v2423 = vunpack.c.l.b16 %v666
        %v2424 = vunpack.c.h.b16 %v666
        %v2425 = vunpack.c.l.b16 %v667
        %v2426 = vunpack.c.h.b16 %v667
        %v2427 = vunpack.c.l.b16 %v668
        %v2428 = vunpack.c.h.b16 %v668
        %v2429 = vunpack.c.l.b16 %v669
        %v2430 = vunpack.c.h.b16 %v669
        %v2431 = vunpack.c.l.b16 %v670
        %v2432 = vunpack.c.h.b16 %v670
        %v2433 = vunpack.c.l.b16 %v671
        %v2434 = vunpack.c.h.b16 %v671
        %v2435 = vunpack.c.l.b16 %v672
        %v2436 = vunpack.c.h.b16 %v672
        %v2437 = vunpack.c.l.b16 %v673
        %v2438 = vunpack.c.h.b16 %v673
        %v2439 = vunpack.c.l.b16 %v674
        %v2440 = vunpack.c.h.b16 %v674
        %v2441 = vunpack.c.l.b16 %v675
        %v2442 = vunpack.c.h.b16 %v675
        %v2443 = vunpack.c.l.b16 %v676
        %v2444 = vunpack.c.h.b16 %v676
        %v2445 = vunpack.c.l.b16 %v677
        %v2446 = vunpack.c.h.b16 %v677
        %v2447 = vunpack.c.l.b16 %v678
        %v2448 = vunpack.c.h.b16 %v678
        %v2449 = vunpack.c.l.b16 %v679
        %v2450 = vunpack.c.h.b16 %v679
        %v2451 = vunpack.c.l.b16 %v680
        %v2452 = vunpack.c.h.b16 %v680
        %v2453 = vunpack.c.l.b16 %v681
        %v2454 = vunpack.c.h.b16 %v681
        %v2455 = vunpack.c.l.b16 %v682
        %v2456 = vunpack.c.h.b16 %v682
        %v2457 = vunpack.c.l.b16 %v683
        %v2458 = vunpack.c.h.b16 %v683
        %v2459 = vunpack.c.l.b16 %v684
        %v2460 = vunpack.c.h.b16 %v684
        %v2461 = vunpack.c.l.b16 %v685
        %v2462 = vunpack.c.h.b16 %v685
        %v2463 = vunpack.c.l.b16 %v686
        %v2464 = vunpack.c.h.b16 %v686
        %v2465 = vunpack.c.l.b16 %v687
        %v2466 = vunpack.c.h.b16 %v687
        %v2467 = vunpack.c.l.b16 %v688
        %v2468 = vunpack.c.h.b16 %v688
        %v2469 = vunpack.c.l.b16 %v689
        %v2470 = vunpack.c.h.b16 %v689
        %v2471 = vunpack.c.l.b16 %v690
        %v2472 = vunpack.c.h.b16 %v690
        %v2473 = vunpack.c.l.b16 %v691
        %v2474 = vunpack.c.h.b16 %v691
        %v2475 = vunpack.c.l.b16 %v692
        %v2476 = vunpack.c.h.b16 %v692
        %v2477 = vunpack.c.l.b16 %v693
        %v2478 = vunpack.c.h.b16 %v693
        %v2479 = vunpack.c.l.b16 %v694
        %v2480 = vunpack.c.h.b16 %v694
        %v2481 = vunpack.c.l.b16 %v695
        %v2482 = vunpack.c.h.b16 %v695
        %v2483 = vunpack.c.l.b16 %v696
        %v2484 = vunpack.c.h.b16 %v696
        %v2485 = vunpack.c.l.b16 %v697
        %v2486 = vunpack.c.h.b16 %v697
        %v2487 = vunpack.c.l.b16 %v698
        %v2488 = vunpack.c.h.b16 %v698
        %v2489 = vunpack.c.l.b16 %v699
        %v2490 = vunpack.c.h.b16 %v699
        %v2491 = vunpack.c.l.b16 %v700
        %v2492 = vunpack.c.h.b16 %v700
        %v2493 = vunpack.c.l.b16 %v701
        %v2494 = vunpack.c.h.b16 %v701
        %v2495 = vunpack.c.l.b16 %v702
        %v2496 = vunpack.c.h.b16 %v702
        %v2497 = vunpack.c.l.b16 %v703
        %v2498 = vunpack.c.h.b16 %v703
        %v2499 = vunpack.c.l.b16 %v704
        %v2500 = vunpack.c.h.b16 %v704
        %v2501 = vunpack.c.l.b16 %v705
        %v2502 = vunpack.c.h.b16 %v705
        %v2503 = vunpack.c.l.b16 %v706
        %v2504 = vunpack.c.h.b16 %v706
        %v2505 = vunpack.c.l.b16 %v707
        %v2506 = vunpack.c.h.b16 %v707
        %v2507 = vunpack.c.l.b16 %v708
        %v2508 = vunpack.c.h.b16 %v708
        %v2509 = vunpack.c.l.b16 %v709
        %v2510 = vunpack.c.h.b16 %v709
        %v2511 = vunpack.c.l.b16 %v710
        %v2512 = vunpack.c.h.b16 %v710
        %v2513 = vunpack.c.l.b16 %v711
        %v2514 = vunpack.c.h.b16 %v711
        %v2515 = vunpack.c.l.b16 %v712
        %v2516 = vunpack.c.h.b16 %v712
        %v2517 = vunpack.c.l.b16 %v713
        %v2518 = vunpack.c.h.b16 %v713
        %v2519 = vunpack.c.l.b16 %v714
        %v2520 = vunpack.c.h.b16 %v714
        %v2521 = vunpack.c.l.b16 %v715
        %v2522 = vunpack.c.h.b16 %v715
        %v2523 = vunpack.c.l.b16 %v716
        %v2524 = vunpack.c.h.b16 %v716
        %v2525 = vunpack.c.l.b16 %v717
        %v2526 = vunpack.c.h.b16 %v717
        %v2527 = vunpack.c.l.b16 %v718
        %v2528 = vunpack.c.h.b16 %v718
        %v2529 = vunpack.c.l.b16 %v719
        %v2530 = vunpack.c.h.b16 %v719
        %v2531 = vunpack.c.l.b16 %v720
        %v2532 = vunpack.c.h.b16 %v720
        %v2533 = vunpack.c.l.b16 %v721
        %v2534 = vunpack.c.h.b16 %v721
        %v2535 = vunpack.c.l.b16 %v722
        %v2536 = vunpack.c.h.b16 %v722
        %v2537 = vunpack.c.l.b16 %v723
        %v2538 = vunpack.c.h.b16 %v723
        %v2539 = vunpack.c.l.b16 %v724
        %v2540 = vunpack.c.h.b16 %v724
        %v2541 = vunpack.c.l.b16 %v725
        %v2542 = vunpack.c.h.b16 %v725
        %v2543 = vunpack.c.l.b16 %v726
        %v2544 = vunpack.c.h.b16 %v726
        %v2545 = vunpack.c.l.b16 %v727
        %v2546 = vunpack.c.h.b16 %v727
        %v2547 = vunpack.c.l.b16 %v728
        %v2548 = vunpack.c.h.b16 %v728
        %v2549 = vunpack.c.l.b16 %v729
        %v2550 = vunpack.c.h.b16 %v729
        %v2551 = vunpack.c.l.b16 %v730
        %v2552 = vunpack.c.h.b16 %v730
        %v2553 = vunpack.c.l.b16 %v731
        %v2554 = vunpack.c.h.b16 %v731
        %v2555 = vunpack.c.l.b16 %v732
        %v2556 = vunpack.c.h.b16 %v732
        %v2557 = vunpack.c.l.b16 %v733
        %v2558 = vunpack.c.h.b16 %v733
        %v2559 = vunpack.c.l.b16 %v734
        %v2560 = vunpack.c.h.b16 %v734
        %v2561 = vunpack.c.l.b16 %v735
        %v2562 = vunpack.c.h.b16 %v735
        %v2563 = vunpack.c.l.b16 %v736
        %v2564 = vunpack.c.h.b16 %v736
        %v2565 = vunpack.c.l.b16 %v737
        %v2566 = vunpack.c.h.b16 %v737
        %v2567 = vunpack.c.l.b16 %v738
        %v2568 = vunpack.c.h.b16 %v738
        %v2569 = vunpack.c.l.b16 %v739
        %v2570 = vunpack.c.h.b16 %v739
        %v2571 = vunpack.c.l.b16 %v740
        %v2572 = vunpack.c.h.b16 %v740
        %v2573 = vunpack.c.l.b16 %v741
        %v2574 = vunpack.c.h.b16 %v741
        %v2575 = vunpack.c.l.b16 %v742
        %v2576 = vunpack.c.h.b16 %v742
        %v2577 = vunpack.c.l.b16 %v743
        %v2578 = vunpack.c.h.b16 %v743
        %v2579 = vunpack.c.l.b16 %v744
        %v2580 = vunpack.c.h.b16 %v744
        %v2581 = vunpack.c.l.b16 %v745
        %v2582 = vunpack.c.h.b16 %v745
        %v2583 = vunpack.c.l.b16 %v746
        %v2584 = vunpack.c.h.b16 %v746
        %v2585 = vunpack.c.l.b16 %v747
        %v2586 = vunpack.c.h.b16 %v747
        %v2587 = vunpack.c.l.b16 %v748
        %v2588 = vunpack.c.h.b16 %v748
        %v2589 = vunpack.c.l.b16 %v749
        %v2590 = vunpack.c.h.b16 %v749
        %v2591 = vunpack.c.l.b16 %v750
        %v2592 = vunpack.c.h.b16 %v750
        %v2593 = vunpack.c.l.b16 %v751
        %v2594 = vunpack.c.h.b16 %v751
        %v2595 = vunpack.c.l.b16 %v752
        %v2596 = vunpack.c.h.b16 %v752
        %v2597 = vunpack.c.l.b16 %v753
        %v2598 = vunpack.c.h.b16 %v753
        %v2599 = vunpack.c.l.b16 %v754
        %v2600 = vunpack.c.h.b16 %v754
        %v2601 = vunpack.c.l.b16 %v755
        %v2602 = vunpack.c.h.b16 %v755
        %v2603 = vunpack.c.l.b16 %v756
        %v2604 = vunpack.c.h.b16 %v756
        %v2605 = vunpack.c.l.b16 %v757
        %v2606 = vunpack.c.h.b16 %v757
        %v2607 = vunpack.c.l.b16 %v758
        %v2608 = vunpack.c.h.b16 %v758
        %v2609 = vunpack.c.l.b16 %v759
        %v2610 = vunpack.c.h.b16 %v759
        %v2611 = vunpack.c.l.b16 %v760
        %v2612 = vunpack.c.h.b16 %v760
        %v2613 = vunpack.c.l.b16 %v761
        %v2614 = vunpack.c.h.b16 %v761
        %v2615 = vunpack.c.l.b16 %v762
        %v2616 = vunpack.c.h.b16 %v762
        %v2617 = vunpack.c.l.b16 %v763
        %v2618 = vunpack.c.h.b16 %v763
        %v2619 = vunpack.c.l.b16 %v764
        %v2620 = vunpack.c.h.b16 %v764
        %v2621 = vunpack.c.l.b16 %v765
        %v2622 = vunpack.c.h.b16 %v765
        %v2623 = vunpack.c.l.b16 %v766
        %v2624 = vunpack.c.h.b16 %v766
        %v2625 = vunpack.c.l.b16 %v767
        %v2626 = vunpack.c.h.b16 %v767
        %v2627 = vunpack.c.l.b16 %v768
        %v2628 = vunpack.c.h.b16 %v768
        %v2629 = vunpack.c.l.b16 %v769
        %v2630 = vunpack.c.h.b16 %v769
        %v2631 = vunpack.c.l.b16 %v770
        %v2632 = vunpack.c.h.b16 %v770
        %v2633 = vunpack.c.l.b16 %v771
        %v2634 = vunpack.c.h.b16 %v771
        %v2635 = vunpack.c.l.b16 %v772
        %v2636 = vunpack.c.h.b16 %v772
        %v2637 = vunpack.c.l.b16 %v773
        %v2638 = vunpack.c.h.b16 %v773
        %v2639 = vunpack.c.l.b16 %v774
        %v2640 = vunpack.c.h.b16 %v774
        %v2641 = vunpack.c.l.b16 %v775
        %v2642 = vunpack.c.h.b16 %v775
        %v2643 = vunpack.c.l.b16 %v776
        %v2644 = vunpack.c.h.b16 %v776
        %v2645 = vunpack.c.l.b16 %v777
        %v2646 = vunpack.c.h.b16 %v777
        %v2647 = vunpack.c.l.b16 %v778
        %v2648 = vunpack.c.h.b16 %v778
        %v2649 = vunpack.c.l.b16 %v779
        %v2650 = vunpack.c.h.b16 %v779
        %v2651 = vunpack.c.l.b16 %v780
        %v2652 = vunpack.c.h.b16 %v780
        %v2653 = vunpack.c.l.b16 %v781
        %v2654 = vunpack.c.h.b16 %v781
        %v2655 = vunpack.c.l.b16 %v782
        %v2656 = vunpack.c.h.b16 %v782
        %v2657 = vunpack.c.l.b16 %v783
        %v2658 = vunpack.c.h.b16 %v783
        %v2659 = vunpack.c.l.b16 %v784
        %v2660 = vunpack.c.h.b16 %v784
        %v2661 = vunpack.c.l.b16 %v785
        %v2662 = vunpack.c.h.b16 %v785
        %v2663 = vunpack.c.l.b16 %v786
        %v2664 = vunpack.c.h.b16 %v786
        %v2665 = vunpack.c.l.b16 %v787
        %v2666 = vunpack.c.h.b16 %v787
        %v2667 = vunpack.c.l.b16 %v788
        %v2668 = vunpack.c.h.b16 %v788
        %v2669 = vunpack.c.l.b16 %v789
        %v2670 = vunpack.c.h.b16 %v789
        %v2671 = vunpack.c.l.b16 %v790
        %v2672 = vunpack.c.h.b16 %v790
        %v2673 = vunpack.c.l.b16 %v791
        %v2674 = vunpack.c.h.b16 %v791
        %v2675 = vunpack.c.l.b16 %v792
        %v2676 = vunpack.c.h.b16 %v792
        %v2677 = vunpack.c.l.b16 %v793
        %v2678 = vunpack.c.h.b16 %v793
        %v2679 = vunpack.c.l.b16 %v794
        %v2680 = vunpack.c.h.b16 %v794
        %v2681 = vunpack.c.l.b16 %v795
        %v2682 = vunpack.c.h.b16 %v795
        %v2683 = vunpack.c.l.b16 %v796
        %v2684 = vunpack.c.h.b16 %v796
        %v2685 = vunpack.c.l.b16 %v797
        %v2686 = vunpack.c.h.b16 %v797
        %v2687 = vunpack.c.l.b16 %v798
        %v2688 = vunpack.c.h.b16 %v798
        %v2689 = vunpack.c.l.b16 %v799
        %v2690 = vunpack.c.h.b16 %v799
        %v2691 = vunpack.c.l.b16 %v800
        %v2692 = vunpack.c.h.b16 %v800
        %v2693 = vunpack.c.l.b16 %v801
        %v2694 = vunpack.c.h.b16 %v801
        %v2695 = vunpack.c.l.b16 %v802
        %v2696 = vunpack.c.h.b16 %v802
        %v2697 = vunpack.c.l.b16 %v803
        %v2698 = vunpack.c.h.b16 %v803
        %v2699 = vunpack.c.l.b16 %v804
        %v2700 = vunpack.c.h.b16 %v804
        %v2701 = vunpack.c.l.b16 %v805
        %v2702 = vunpack.c.h.b16 %v805
        %v2703 = vunpack.c.l.b16 %v806
        %v2704 = vunpack.c.h.b16 %v806
        %v2705 = vunpack.c.l.b16 %v807
        %v2706 = vunpack.c.h.b16 %v807
        %v2707 = vunpack.c.l.b16 %v808
        %v2708 = vunpack.c.h.b16 %v808
        %v2709 = vunpack.c.l.b16 %v809
        %v2710 = vunpack.c.h.b16 %v809
        %v2711 = vunpack.c.l.b16 %v810
        %v2712 = vunpack.c.h.b16 %v810
        %v2713 = vunpack.c.l.b16 %v811
        %v2714 = vunpack.c.h.b16 %v811
        %v2715 = vunpack.c.l.b16 %v812
        %v2716 = vunpack.c.h.b16 %v812
        %v2717 = vunpack.c.l.b16 %v813
        %v2718 = vunpack.c.h.b16 %v813
        %v2719 = vunpack.c.l.b16 %v814
        %v2720 = vunpack.c.h.b16 %v814
        %v2721 = vunpack.c.l.b16 %v815
        %v2722 = vunpack.c.h.b16 %v815
        %v2723 = vunpack.c.l.b16 %v816
        %v2724 = vunpack.c.h.b16 %v816
        %v2725 = vunpack.c.l.b16 %v817
        %v2726 = vunpack.c.h.b16 %v817
        %v2727 = vunpack.c.l.b16 %v818
        %v2728 = vunpack.c.h.b16 %v818
        %v2729 = vunpack.c.l.b16 %v819
        %v2730 = vunpack.c.h.b16 %v819
        %v2731 = vunpack.c.l.b16 %v820
        %v2732 = vunpack.c.h.b16 %v820
        %v2733 = vunpack.c.l.b16 %v821
        %v2734 = vunpack.c.h.b16 %v821
        %v2735 = vunpack.c.l.b16 %v822
        %v2736 = vunpack.c.h.b16 %v822
        %v2737 = vunpack.c.l.b16 %v823
        %v2738 = vunpack.c.h.b16 %v823
        %v2739 = vunpack.c.l.b16 %v824
        %v2740 = vunpack.c.h.b16 %v824
        %v2741 = vunpack.c.l.b16 %v825
        %v2742 = vunpack.c.h.b16 %v825
        %v2743 = vunpack.c.l.b16 %v826
        %v2744 = vunpack.c.h.b16 %v826
        %v2745 = vunpack.c.l.b16 %v827
        %v2746 = vunpack.c.h.b16 %v827
        %v2747 = vunpack.c.l.b16 %v828
        %v2748 = vunpack.c.h.b16 %v828
        %v2749 = vunpack.c.l.b16 %v829
        %v2750 = vunpack.c.h.b16 %v829
        %v2751 = vunpack.c.l.b16 %v830
        %v2752 = vunpack.c.h.b16 %v830
        %v2753 = vunpack.c.l.b16 %v831
        %v2754 = vunpack.c.h.b16 %v831
        %v2755 = vunpack.c.l.b16 %v832
        %v2756 = vunpack.c.h.b16 %v832
        %v2757 = vunpack.c.l.b16 %v833
        %v2758 = vunpack.c.h.b16 %v833
        %v2759 = vunpack.c.l.b16 %v834
        %v2760 = vunpack.c.h.b16 %v834
        %v2761 = vunpack.c.l.b16 %v835
        %v2762 = vunpack.c.h.b16 %v835
        %v2763 = vunpack.c.l.b16 %v836
        %v2764 = vunpack.c.h.b16 %v836
        %v2765 = vunpack.c.l.b16 %v837
        %v2766 = vunpack.c.h.b16 %v837
        %v2767 = vunpack.c.l.b16 %v838
        %v2768 = vunpack.c.h.b16 %v838
        %v2769 = vunpack.c.l.b16 %v839
        %v2770 = vunpack.c.h.b16 %v839
        %v2771 = vunpack.c.l.b16 %v840
        %v2772 = vunpack.c.h.b16 %v840
        %v2773 = vunpack.c.l.b16 %v841
        %v2774 = vunpack.c.h.b16 %v841
        %v2775 = vunpack.c.l.b16 %v842
        %v2776 = vunpack.c.h.b16 %v842
        %v2777 = vunpack.c.l.b16 %v843
        %v2778 = vunpack.c.h.b16 %v843
        %v2779 = vunpack.c.l.b16 %v844
        %v2780 = vunpack.c.h.b16 %v844
        %v2781 = vunpack.c.l.b16 %v845
        %v2782 = vunpack.c.h.b16 %v845
        %v2783 = vunpack.c.l.b16 %v846
        %v2784 = vunpack.c.h.b16 %v846
        %v2785 = vunpack.c.l.b16 %v847
        %v2786 = vunpack.c.h.b16 %v847
        %v2787 = vunpack.c.l.b16 %v848
        %v2788 = vunpack.c.h.b16 %v848
        %v2789 = vunpack.c.l.b16 %v849
        %v2790 = vunpack.c.h.b16 %v849
        %v2791 = vunpack.c.l.b16 %v850
        %v2792 = vunpack.c.h.b16 %v850
        %v2793 = vunpack.c.l.b16 %v851
        %v2794 = vunpack.c.h.b16 %v851
        %v2795 = vunpack.c.l.b16 %v852
        %v2796 = vunpack.c.h.b16 %v852
        %v2797 = vunpack.c.l.b16 %v853
        %v2798 = vunpack.c.h.b16 %v853
        %v2799 = vunpack.c.l.b16 %v854
        %v2800 = vunpack.c.h.b16 %v854
        %v2801 = vunpack.c.l.b16 %v855
        %v2802 = vunpack.c.h.b16 %v855
        %v2803 = vunpack.c.l.b16 %v856
        %v2804 = vunpack.c.h.b16 %v856
        %v2805 = vunpack.c.l.b16 %v857
        %v2806 = vunpack.c.h.b16 %v857
        %v2807 = vunpack.c.l.b16 %v858
        %v2808 = vunpack.c.h.b16 %v858
        %v2809 = vunpack.c.l.b16 %v859
        %v2810 = vunpack.c.h.b16 %v859
        %v2811 = vunpack.c.l.b16 %v860
        %v2812 = vunpack.c.h.b16 %v860
        %v2813 = vunpack.c.l.b16 %v861
        %v2814 = vunpack.c.h.b16 %v861
        %v2815 = vunpack.c.l.b16 %v862
        %v2816 = vunpack.c.h.b16 %v862
        %v2817 = vunpack.c.l.b16 %v863
        %v2818 = vunpack.c.h.b16 %v863
        %v2819 = vunpack.c.l.b16 %v864
        %v2820 = vunpack.c.h.b16 %v864
        %v2821 = vunpack.c.l.b16 %v865
        %v2822 = vunpack.c.h.b16 %v865
        %v2823 = vunpack.c.l.b16 %v866
        %v2824 = vunpack.c.h.b16 %v866
        %v2825 = vunpack.c.l.b16 %v867
        %v2826 = vunpack.c.h.b16 %v867
        %v2827 = vunpack.c.l.b16 %v868
        %v2828 = vunpack.c.h.b16 %v868
        %v2829 = vunpack.c.l.b16 %v869
        %v2830 = vunpack.c.h.b16 %v869
        %v2831 = vunpack.c.l.b16 %v870
        %v2832 = vunpack.c.h.b16 %v870
        %v2833 = vunpack.c.l.b16 %v871
        %v2834 = vunpack.c.h.b16 %v871
        %v2835 = vunpack.c.l.b16 %v872
        %v2836 = vunpack.c.h.b16 %v872
        %v2837 = vunpack.c.l.b16 %v873
        %v2838 = vunpack.c.h.b16 %v873
        %v2839 = vunpack.c.l.b16 %v874
        %v2840 = vunpack.c.h.b16 %v874
        %v2841 = vunpack.c.l.b16 %v875
        %v2842 = vunpack.c.h.b16 %v875
        %v2843 = vunpack.c.l.b16 %v876
        %v2844 = vunpack.c.h.b16 %v876
        %v2845 = vunpack.c.l.b16 %v877
        %v2846 = vunpack.c.h.b16 %v877
        %v2847 = vunpack.c.l.b16 %v878
        %v2848 = vunpack.c.h.b16 %v878
        %v2849 = vunpack.c.l.b16 %v879
        %v2850 = vunpack.c.h.b16 %v879
        %v2851 = vunpack.c.l.b16 %v880
        %v2852 = vunpack.c.h.b16 %v880
        %v2853 = vunpack.c.l.b16 %v881
        %v2854 = vunpack.c.h.b16 %v881
        %v2855 = vunpack.c.l.b16 %v882
        %v2856 = vunpack.c.h.b16 %v882
        %v2857 = vunpack.c.l.b16 %v883
        %v2858 = vunpack.c.h.b16 %v883
        %v2859 = vunpack.c.l.b16 %v884
        %v2860 = vunpack.c.h.b16 %v884
        %v2861 = vunpack.c.l.b16 %v885
        %v2862 = vunpack.c.h.b16 %v885
        %v2863 = vunpack.c.l.b16 %v886
        %v2864 = vunpack.c.h.b16 %v886
        %v2865 = vunpack.c.l.b16 %v887
        %v2866 = vunpack.c.h.b16 %v887
        %v2867 = vunpack.c.l.b16 %v888
        %v2868 = vunpack.c.h.b16 %v888
        %v2869 = vunpack.c.l.b16 %v889
        %v2870 = vunpack.c.h.b16 %v889
        %v2871 = vunpack.c.l.b16 %v890
        %v2872 = vunpack.c.h.b16 %v890
        %v2873 = vunpack.c.l.b16 %v891
        %v2874 = vunpack.c.h.b16 %v891
        %v2875 = vunpack.c.l.b16 %v892
        %v2876 = vunpack.c.h.b16 %v892
        %v2877 = vunpack.c.l.b16 %v893
        %v2878 = vunpack.c.h.b16 %v893
        %v2879 = vunpack.c.l.b16 %v894
        %v2880 = vunpack.c.h.b16 %v894
        %v2881 = vunpack.c.l.b16 %v895
        %v2882 = vunpack.c.h.b16 %v895
        %v2883 = vunpack.c.l.b16 %v896
        %v2884 = vunpack.c.h.b16 %v896
        %v2885 = vunpack.c.l.b16 %v897
        %v2886 = vunpack.c.h.b16 %v897
        %v2887 = vunpack.c.l.b16 %v898
        %v2888 = vunpack.c.h.b16 %v898
        %v2889 = vunpack.c.l.b16 %v899
        %v2890 = vunpack.c.h.b16 %v899
        %v2891 = vunpack.c.l.b16 %v900
        %v2892 = vunpack.c.h.b16 %v900
        %v2893 = vunpack.c.l.b16 %v901
        %v2894 = vunpack.c.h.b16 %v901
        %v2895 = vunpack.c.l.b16 %v902
        %v2896 = vunpack.c.h.b16 %v902
        %v2897 = vunpack.c.l.b16 %v903
        %v2898 = vunpack.c.h.b16 %v903
        %v2899 = vunpack.c.l.b16 %v904
        %v2900 = vunpack.c.h.b16 %v904
        %v2901 = vunpack.c.l.b16 %v905
        %v2902 = vunpack.c.h.b16 %v905
        %v2903 = vunpack.c.l.b16 %v906
        %v2904 = vunpack.c.h.b16 %v906
        %v2905 = vunpack.c.l.b16 %v907
        %v2906 = vunpack.c.h.b16 %v907
        %v2907 = vunpack.c.l.b16 %v908
        %v2908 = vunpack.c.h.b16 %v908
        %v2909 = vunpack.c.l.b16 %v909
        %v2910 = vunpack.c.h.b16 %v909
        %v2911 = vunpack.c.l.b16 %v910
        %v2912 = vunpack.c.h.b16 %v910
        %v2913 = vunpack.c.l.b16 %v911
        %v2914 = vunpack.c.h.b16 %v911
        %v2915 = vunpack.c.l.b16 %v912
        %v2916 = vunpack.c.h.b16 %v912
        %v2917 = vunpack.c.l.b16 %v913
        %v2918 = vunpack.c.h.b16 %v913
        %v2919 = vunpack.c.l.b16 %v914
        %v2920 = vunpack.c.h.b16 %v914
        %v2921 = vunpack.c.l.b16 %v915
        %v2922 = vunpack.c.h.b16 %v915
        %v2923 = vunpack.c.l.b16 %v916
        %v2924 = vunpack.c.h.b16 %v916
        %v2925 = vunpack.c.l.b16 %v917
        %v2926 = vunpack.c.h.b16 %v917
        %v2927 = vunpack.c.l.b16 %v918
        %v2928 = vunpack.c.h.b16 %v918
        %v2929 = vunpack.c.l.b16 %v919
        %v2930 = vunpack.c.h.b16 %v919
        %v2931 = vunpack.c.l.b16 %v920
        %v2932 = vunpack.c.h.b16 %v920
        %v2933 = vunpack.c.l.b16 %v921
        %v2934 = vunpack.c.h.b16 %v921
        %v2935 = vunpack.c.l.b16 %v922
        %v2936 = vunpack.c.h.b16 %v922
        %v2937 = vunpack.c.l.b16 %v923
        %v2938 = vunpack.c.h.b16 %v923
        %v2939 = vunpack.c.l.b16 %v924
        %v2940 = vunpack.c.h.b16 %v924
        %v2941 = vunpack.c.l.b16 %v925
        %v2942 = vunpack.c.h.b16 %v925
        %v2943 = vunpack.c.l.b16 %v926
        %v2944 = vunpack.c.h.b16 %v926
        %v2945 = vunpack.c.l.b16 %v927
        %v2946 = vunpack.c.h.b16 %v927
        %v2947 = vunpack.c.l.b16 %v928
        %v2948 = vunpack.c.h.b16 %v928
        %v2949 = vunpack.c.l.b16 %v929
        %v2950 = vunpack.c.h.b16 %v929
        %v2951 = vunpack.c.l.b16 %v930
        %v2952 = vunpack.c.h.b16 %v930
        %v2953 = vunpack.c.l.b16 %v931
        %v2954 = vunpack.c.h.b16 %v931
        %v2955 = vunpack.c.l.b16 %v932
        %v2956 = vunpack.c.h.b16 %v932
        %v2957 = vunpack.c.l.b16 %v933
        %v2958 = vunpack.c.h.b16 %v933
        %v2959 = vunpack.c.l.b16 %v934
        %v2960 = vunpack.c.h.b16 %v934
        %v2961 = vunpack.c.l.b16 %v935
        %v2962 = vunpack.c.h.b16 %v935
        %v2963 = vunpack.c.l.b16 %v936
        %v2964 = vunpack.c.h.b16 %v936
        %v2965 = vunpack.c.l.b16 %v937
        %v2966 = vunpack.c.h.b16 %v937
        %v2967 = vunpack.c.l.b16 %v938
        %v2968 = vunpack.c.h.b16 %v938
        %v2969 = vunpack.c.l.b16 %v939
        %v2970 = vunpack.c.h.b16 %v939
        %v2971 = vunpack.c.l.b16 %v940
        %v2972 = vunpack.c.h.b16 %v940
        %v2973 = vunpack.c.l.b16 %v941
        %v2974 = vunpack.c.h.b16 %v941
        %v2975 = vunpack.c.l.b16 %v942
        %v2976 = vunpack.c.h.b16 %v942
        %v2977 = vunpack.c.l.b16 %v943
        %v2978 = vunpack.c.h.b16 %v943
        %v2979 = vunpack.c.l.b16 %v944
        %v2980 = vunpack.c.h.b16 %v944
        %v2981 = vunpack.c.l.b16 %v945
        %v2982 = vunpack.c.h.b16 %v945
        %v2983 = vunpack.c.l.b16 %v946
        %v2984 = vunpack.c.h.b16 %v946
        %v2985 = vunpack.c.l.b16 %v947
        %v2986 = vunpack.c.h.b16 %v947
        %v2987 = vunpack.c.l.b16 %v948
        %v2988 = vunpack.c.h.b16 %v948
        %v2989 = vunpack.c.l.b16 %v949
        %v2990 = vunpack.c.h.b16 %v949
        %v2991 = vunpack.c.l.b16 %v950
        %v2992 = vunpack.c.h.b16 %v950
        %v2993 = vunpack.c.l.b16 %v951
        %v2994 = vunpack.c.h.b16 %v951
        %v2995 = vunpack.c.l.b16 %v952
        %v2996 = vunpack.c.h.b16 %v952
        %v2997 = vunpack.c.l.b16 %v953
        %v2998 = vunpack.c.h.b16 %v953
        %v2999 = vunpack.c.l.b16 %v954
        %v3000 = vunpack.c.h.b16 %v954
        %v3001 = vunpack.c.l.b16 %v955
        %v3002 = vunpack.c.h.b16 %v955
        %v3003 = vunpack.c.l.b16 %v956
        %v3004 = vunpack.c.h.b16 %v956
        %v3005 = vunpack.c.l.b16 %v957
        %v3006 = vunpack.c.h.b16 %v957
        %v3007 = vunpack.c.l.b16 %v958
        %v3008 = vunpack.c.h.b16 %v958
        %v3009 = vunpack.c.l.b16 %v959
        %v3010 = vunpack.c.h.b16 %v959
        %v3011 = vunpack.c.l.b16 %v960
        %v3012 = vunpack.c.h.b16 %v960
        %v3013 = vunpack.c.l.b16 %v961
        %v3014 = vunpack.c.h.b16 %v961
        %v3015 = vunpack.c.l.b16 %v962
        %v3016 = vunpack.c.h.b16 %v962
        %v3017 = vunpack.c.l.b16 %v963
        %v3018 = vunpack.c.h.b16 %v963
        %v3019 = vunpack.c.l.b16 %v964
        %v3020 = vunpack.c.h.b16 %v964
        %v3021 = vunpack.c.l.b16 %v965
        %v3022 = vunpack.c.h.b16 %v965
        %v3023 = vunpack.c.l.b16 %v966
        %v3024 = vunpack.c.h.b16 %v966
        %v3025 = vunpack.c.l.b16 %v967
        %v3026 = vunpack.c.h.b16 %v967
        %v3027 = vunpack.c.l.b16 %v968
        %v3028 = vunpack.c.h.b16 %v968
        %v3029 = vunpack.c.l.b16 %v969
        %v3030 = vunpack.c.h.b16 %v969
        %v3031 = vunpack.c.l.b16 %v970
        %v3032 = vunpack.c.h.b16 %v970
        %v3033 = vunpack.c.l.b16 %v971
        %v3034 = vunpack.c.h.b16 %v971
        %v3035 = vunpack.c.l.b16 %v972
        %v3036 = vunpack.c.h.b16 %v972
        %v3037 = vunpack.c.l.b16 %v973
        %v3038 = vunpack.c.h.b16 %v973
        %v3039 = vunpack.c.l.b16 %v974
        %v3040 = vunpack.c.h.b16 %v974
        %v3041 = vunpack.c.l.b16 %v975
        %v3042 = vunpack.c.h.b16 %v975
        %v3043 = vunpack.c.l.b16 %v976
        %v3044 = vunpack.c.h.b16 %v976
        %v3045 = vunpack.c.l.b16 %v977
        %v3046 = vunpack.c.h.b16 %v977
        %v3047 = vunpack.c.l.b16 %v978
        %v3048 = vunpack.c.h.b16 %v978
        %v3049 = vunpack.c.l.b16 %v979
        %v3050 = vunpack.c.h.b16 %v979
        %v3051 = vunpack.c.l.b16 %v980
        %v3052 = vunpack.c.h.b16 %v980
        %v3053 = vunpack.c.l.b16 %v981
        %v3054 = vunpack.c.h.b16 %v981
        %v3055 = vunpack.c.l.b16 %v982
        %v3056 = vunpack.c.h.b16 %v982
        %v3057 = vunpack.c.l.b16 %v983
        %v3058 = vunpack.c.h.b16 %v983
        %v3059 = vunpack.c.l.b16 %v984
        %v3060 = vunpack.c.h.b16 %v984
        %v3061 = vunpack.c.l.b16 %v985
        %v3062 = vunpack.c.h.b16 %v985
        %v3063 = vunpack.c.l.b16 %v986
        %v3064 = vunpack.c.h.b16 %v986
        %v3065 = vunpack.c.l.b16 %v987
        %v3066 = vunpack.c.h.b16 %v987
        %v3067 = vunpack.c.l.b16 %v988
        %v3068 = vunpack.c.h.b16 %v988
        %v3069 = vunpack.c.l.b16 %v989
        %v3070 = vunpack.c.h.b16 %v989
        %v3071 = vunpack.c.l.b16 %v990
        %v3072 = vunpack.c.h.b16 %v990
        %v3073 = vunpack.c.l.b16 %v991
        %v3074 = vunpack.c.h.b16 %v991
        %v3075 = vunpack.c.l.b16 %v992
        %v3076 = vunpack.c.h.b16 %v992
        %v3077 = vunpack.c.l.b16 %v993
        %v3078 = vunpack.c.h.b16 %v993
        %v3079 = vunpack.c.l.b16 %v994
        %v3080 = vunpack.c.h.b16 %v994
        %v3081 = vunpack.c.l.b16 %v995
        %v3082 = vunpack.c.h.b16 %v995
        %v3083 = vunpack.c.l.b16 %v996
        %v3084 = vunpack.c.h.b16 %v996
        %v3085 = vunpack.c.l.b16 %v997
        %v3086 = vunpack.c.h.b16 %v997
        %v3087 = vunpack.c.l.b16 %v998
        %v3088 = vunpack.c.h.b16 %v998
        %v3089 = vunpack.c.l.b16 %v999
        %v3090 = vunpack.c.h.b16 %v999
        %v3091 = vunpack.c.l.b16 %v1000
        %v3092 = vunpack.c.h.b16 %v1000
        %v3093 = vunpack.c.l.b16 %v1001
        %v3094 = vunpack.c.h.b16 %v1001
        %v3095 = vunpack.c.l.b16 %v1002
        %v3096 = vunpack.c.h.b16 %v1002
        %v3097 = vunpack.c.l.b16 %v1003
        %v3098 = vunpack.c.h.b16 %v1003
        %v3099 = vunpack.c.l.b16 %v1004
        %v3100 = vunpack.c.h.b16 %v1004
        %v3101 = vunpack.c.l.b16 %v1005
        %v3102 = vunpack.c.h.b16 %v1005
        %v3103 = vunpack.c.l.b16 %v1006
        %v3104 = vunpack.c.h.b16 %v1006
        %v3105 = vunpack.c.l.b16 %v1007
        %v3106 = vunpack.c.h.b16 %v1007
        %v3107 = vunpack.c.l.b16 %v1008
        %v3108 = vunpack.c.h.b16 %v1008
        %v3109 = vunpack.c.l.b16 %v1009
        %v3110 = vunpack.c.h.b16 %v1009
        %v3111 = vunpack.c.l.b16 %v1010
        %v3112 = vunpack.c.h.b16 %v1010
        %v3113 = vunpack.c.l.b16 %v1011
        %v3114 = vunpack.c.h.b16 %v1011
        %v3115 = vunpack.c.l.b16 %v1012
        %v3116 = vunpack.c.h.b16 %v1012
        %v3117 = vunpack.c.l.b16 %v1013
        %v3118 = vunpack.c.h.b16 %v1013
        %v3119 = vunpack.c.l.b16 %v1014
        %v3120 = vunpack.c.h.b16 %v1014
        %v3121 = vunpack.c.l.b16 %v1015
        %v3122 = vunpack.c.h.b16 %v1015
        %v3123 = vunpack.c.l.b16 %v1016
        %v3124 = vunpack.c.h.b16 %v1016
        %v3125 = vunpack.c.l.b16 %v1017
        %v3126 = vunpack.c.h.b16 %v1017
        %v3127 = vunpack.c.l.b16 %v1018
        %v3128 = vunpack.c.h.b16 %v1018
        %v3129 = vunpack.c.l.b16 %v1019
        %v3130 = vunpack.c.h.b16 %v1019
        %v3131 = vunpack.c.l.b16 %v1020
        %v3132 = vunpack.c.h.b16 %v1020
        %v3133 = vunpack.c.l.b16 %v1021
        %v3134 = vunpack.c.h.b16 %v1021
        %v3135 = vunpack.c.l.b16 %v1022
        %v3136 = vunpack.c.h.b16 %v1022
        %v3137 = vunpack.c.l.b16 %v1023
        %v3138 = vunpack.c.h.b16 %v1023
        %v3139 = vunpack.c.l.b16 %v1024
        %v3140 = vunpack.c.h.b16 %v1024
        %v3141 = vunpack.c.l.b16 %v1025
        %v3142 = vunpack.c.h.b16 %v1025
        %v3143 = vunpack.c.l.b16 %v1026
        %v3144 = vunpack.c.h.b16 %v1026
        %v3145 = vunpack.c.l.b16 %v1027
        %v3146 = vunpack.c.h.b16 %v1027
        %v3147 = vunpack.c.l.b16 %v1028
        %v3148 = vunpack.c.h.b16 %v1028
        %v3149 = vunpack.c.l.b16 %v1029
        %v3150 = vunpack.c.h.b16 %v1029
        %v3151 = vunpack.c.l.b16 %v1030
        %v3152 = vunpack.c.h.b16 %v1030
        %v3153 = vunpack.c.l.b16 %v1031
        %v3154 = vunpack.c.h.b16 %v1031
        %v3155 = vunpack.c.l.b16 %v1032
        %v3156 = vunpack.c.h.b16 %v1032
        %v3157 = vunpack.c.l.b16 %v1033
        %v3158 = vunpack.c.h.b16 %v1033
        %v3159 = vunpack.c.l.b16 %v1034
        %v3160 = vunpack.c.h.b16 %v1034
        %v3161 = vunpack.c.l.b16 %v1035
        %v3162 = vunpack.c.h.b16 %v1035
        %v3163 = vunpack.c.l.b16 %v1036
        %v3164 = vunpack.c.h.b16 %v1036
        %v3165 = vunpack.c.l.b16 %v1037
        %v3166 = vunpack.c.h.b16 %v1037
        %v3167 = vunpack.c.l.b16 %v1038
        %v3168 = vunpack.c.h.b16 %v1038
        %v3169 = vunpack.c.l.b16 %v1039
        %v3170 = vunpack.c.h.b16 %v1039
        %v3171 = vunpack.c.l.b16 %v1040
        %v3172 = vunpack.c.h.b16 %v1040
        %v3173 = vunpack.c.l.b16 %v1041
        %v3174 = vunpack.c.h.b16 %v1041
        %v3175 = vunpack.c.l.b16 %v1042
        %v3176 = vunpack.c.h.b16 %v1042
        %v3177 = vunpack.c.l.b16 %v1043
        %v3178 = vunpack.c.h.b16 %v1043
        %v3179 = vunpack.c.l.b16 %v1044
        %v3180 = vunpack.c.h.b16 %v1044
        %v3181 = vunpack.c.l.b16 %v1045
        %v3182 = vunpack.c.h.b16 %v1045
        %v3183 = vunpack.c.l.b16 %v1046
        %v3184 = vunpack.c.h.b16 %v1046
        %v3185 = vunpack.c.l.b16 %v1047
        %v3186 = vunpack.c.h.b16 %v1047
        %v3187 = vunpack.c.l.b16 %v1048
        %v3188 = vunpack.c.h.b16 %v1048
        %v3189 = vunpack.c.l.b16 %v1049
        %v3190 = vunpack.c.h.b16 %v1049
        %v3191 = vunpack.c.l.b16 %v1050
        %v3192 = vunpack.c.h.b16 %v1050
        %v3193 = vunpack.c.l.b16 %v1051
        %v3194 = vunpack.c.h.b16 %v1051
        %v3195 = vunpack.c.l.b16 %v1052
        %v3196 = vunpack.c.h.b16 %v1052
        %v3197 = vunpack.c.l.b16 %v1053
        %v3198 = vunpack.c.h.b16 %v1053
        %v3199 = vunpack.c.l.b16 %v1054
        %v3200 = vunpack.c.h.b16 %v1054
        %v3201 = vunpack.c.l.b16 %v1055
        %v3202 = vunpack.c.h.b16 %v1055
        %v3203 = vunpack.c.l.b16 %v1056
        %v3204 = vunpack.c.h.b16 %v1056
        %v3205 = vunpack.c.l.b16 %v1057
        %v3206 = vunpack.c.h.b16 %v1057
        %v3207 = vunpack.c.l.b16 %v1058
        %v3208 = vunpack.c.h.b16 %v1058
        %v3209 = vunpack.c.l.b16 %v1059
        %v3210 = vunpack.c.h.b16 %v1059
        %v3211 = vunpack.c.l.b16 %v1060
        %v3212 = vunpack.c.h.b16 %v1060
        %v3213 = vunpack.c.l.b16 %v1061
        %v3214 = vunpack.c.h.b16 %v1061
        %v3215 = vunpack.c.l.b16 %v1062
        %v3216 = vunpack.c.h.b16 %v1062
        %v3217 = vunpack.c.l.b16 %v1063
        %v3218 = vunpack.c.h.b16 %v1063
        %v3219 = vunpack.c.l.b16 %v1064
        %v3220 = vunpack.c.h.b16 %v1064
        %v3221 = vunpack.c.l.b16 %v1065
        %v3222 = vunpack.c.h.b16 %v1065
        %v3223 = vunpack.c.l.b16 %v1066
        %v3224 = vunpack.c.h.b16 %v1066
        %v3225 = vunpack.c.l.b16 %v1067
        %v3226 = vunpack.c.h.b16 %v1067
        %v3227 = vunpack.c.l.b16 %v1068
        %v3228 = vunpack.c.h.b16 %v1068
        %v3229 = vunpack.c.l.b16 %v1069
        %v3230 = vunpack.c.h.b16 %v1069
        %v3231 = vunpack.c.l.b16 %v1070
        %v3232 = vunpack.c.h.b16 %v1070
        %v3233 = vunpack.c.l.b16 %v1071
        %v3234 = vunpack.c.h.b16 %v1071
        %v3235 = vunpack.c.l.b16 %v1072
        %v3236 = vunpack.c.h.b16 %v1072
        %v3237 = vunpack.c.l.b16 %v1073
        %v3238 = vunpack.c.h.b16 %v1073
        %v3239 = vunpack.c.l.b16 %v1074
        %v3240 = vunpack.c.h.b16 %v1074
        %v3241 = vunpack.c.l.b16 %v1075
        %v3242 = vunpack.c.h.b16 %v1075
        %v3243 = vunpack.c.l.b16 %v1076
        %v3244 = vunpack.c.h.b16 %v1076
        %v3245 = vunpack.c.l.b16 %v1077
        %v3246 = vunpack.c.h.b16 %v1077
        %v3247 = vunpack.c.l.b16 %v1078
        %v3248 = vunpack.c.h.b16 %v1078
        %v3249 = vunpack.c.l.b16 %v1079
        %v3250 = vunpack.c.h.b16 %v1079
        %v3251 = vunpack.c.l.b16 %v1080
        %v3252 = vunpack.c.h.b16 %v1080
        %v3253 = vunpack.c.l.b16 %v1081
        %v3254 = vunpack.c.h.b16 %v1081
        %v3255 = vunpack.c.l.b16 %v1082
        %v3256 = vunpack.c.h.b16 %v1082
        %v3257 = vunpack.c.l.b16 %v1083
        %v3258 = vunpack.c.h.b16 %v1083
        %v3259 = vunpack.c.l.b16 %v1084
        %v3260 = vunpack.c.h.b16 %v1084
        %v3261 = vunpack.c.l.b16 %v1085
        %v3262 = vunpack.c.h.b16 %v1085
        %v3263 = vunpack.c.l.b16 %v1086
        %v3264 = vunpack.c.h.b16 %v1086
        %v3265 = vunpack.c.l.b16 %v1087
        %v3266 = vunpack.c.h.b16 %v1087
        %v3267 = vunpack.c.l.b16 %v1088
        %v3268 = vunpack.c.h.b16 %v1088
        %v3269 = vunpack.c.l.b16 %v1089
        %v3270 = vunpack.c.h.b16 %v1089
        %v3271 = vunpack.c.l.b16 %v1090
        %v3272 = vunpack.c.h.b16 %v1090
        %v3273 = vunpack.c.l.b16 %v1091
        %v3274 = vunpack.c.h.b16 %v1091
        %v3275 = vunpack.c.l.b16 %v1092
        %v3276 = vunpack.c.h.b16 %v1092
        %v3277 = vunpack.c.l.b16 %v1093
        %v3278 = vunpack.c.h.b16 %v1093
        %v3279 = vunpack.c.l.b16 %v1094
        %v3280 = vunpack.c.h.b16 %v1094
        %v3281 = vunpack.c.l.b16 %v1095
        %v3282 = vunpack.c.h.b16 %v1095
        %v3283 = vunpack.c.l.b16 %v1096
        %v3284 = vunpack.c.h.b16 %v1096
        %v3285 = vunpack.c.l.b16 %v1097
        %v3286 = vunpack.c.h.b16 %v1097
        %v3287 = vunpack.c.l.b16 %v1098
        %v3288 = vunpack.c.h.b16 %v1098
        %v3289 = vunpack.c.l.b16 %v1099
        %v3290 = vunpack.c.h.b16 %v1099
        %v3291 = vunpack.c.l.b16 %v1100
        %v3292 = vunpack.c.h.b16 %v1100
        %v3293 = vunpack.c.l.b16 %v1101
        %v3294 = vunpack.c.h.b16 %v1101
        %v3295 = vunpack.c.l.b16 %v1102
        %v3296 = vunpack.c.h.b16 %v1102
        %v3297 = vunpack.c.l.b16 %v1103
        %v3298 = vunpack.c.h.b16 %v1103
        %v3299 = vunpack.c.l.b16 %v1104
        %v3300 = vunpack.c.h.b16 %v1104
        %v3301 = vunpack.c.l.b16 %v1105
        %v3302 = vunpack.c.h.b16 %v1105
        %v3303 = vunpack.c.l.b16 %v1106
        %v3304 = vunpack.c.h.b16 %v1106
        %v3305 = vunpack.c.l.b16 %v1107
        %v3306 = vunpack.c.h.b16 %v1107
        %v3307 = vunpack.c.l.b16 %v1108
        %v3308 = vunpack.c.h.b16 %v1108
        %v3309 = vunpack.c.l.b16 %v1109
        %v3310 = vunpack.c.h.b16 %v1109
        %v3311 = vunpack.c.l.b16 %v1110
        %v3312 = vunpack.c.h.b16 %v1110
        %v3313 = vunpack.c.l.b16 %v1111
        %v3314 = vunpack.c.h.b16 %v1111
        %v3315 = vunpack.c.l.b16 %v1112
        %v3316 = vunpack.c.h.b16 %v1112
        %v3317 = vunpack.c.l.b16 %v1113
        %v3318 = vunpack.c.h.b16 %v1113
        %v3319 = vunpack.c.l.b16 %v1114
        %v3320 = vunpack.c.h.b16 %v1114
        %v3321 = vunpack.c.l.b16 %v1115
        %v3322 = vunpack.c.h.b16 %v1115
        %v3323 = vunpack.c.l.b16 %v1116
        %v3324 = vunpack.c.h.b16 %v1116
        %v3325 = vunpack.c.l.b16 %v1117
        %v3326 = vunpack.c.h.b16 %v1117
        %v3327 = vunpack.c.l.b16 %v1118
        %v3328 = vunpack.c.h.b16 %v1118
        %v3329 = vunpack.c.l.b16 %v1119
        %v3330 = vunpack.c.h.b16 %v1119
        %v3331 = vunpack.c.l.b16 %v1120
        %v3332 = vunpack.c.h.b16 %v1120
        %v3333 = vunpack.c.l.b16 %v1121
        %v3334 = vunpack.c.h.b16 %v1121
        %v3335 = vunpack.c.l.b16 %v1122
        %v3336 = vunpack.c.h.b16 %v1122
        %v3337 = vunpack.c.l.b16 %v1123
        %v3338 = vunpack.c.h.b16 %v1123
        %v3339 = vunpack.c.l.b16 %v1124
        %v3340 = vunpack.c.h.b16 %v1124
        %v3341 = vunpack.c.l.b16 %v1125
        %v3342 = vunpack.c.h.b16 %v1125
        %v3343 = vunpack.c.l.b16 %v1126
        %v3344 = vunpack.c.h.b16 %v1126
        %v3345 = vunpack.c.l.b16 %v1127
        %v3346 = vunpack.c.h.b16 %v1127
        %v3347 = vunpack.c.l.b16 %v1128
        %v3348 = vunpack.c.h.b16 %v1128
        %v3349 = vunpack.c.l.b16 %v1129
        %v3350 = vunpack.c.h.b16 %v1129
        %v3351 = vunpack.c.l.b16 %v1130
        %v3352 = vunpack.c.h.b16 %v1130
        %v3353 = vunpack.c.l.b16 %v1131
        %v3354 = vunpack.c.h.b16 %v1131
        %v3355 = vunpack.c.l.b16 %v1132
        %v3356 = vunpack.c.h.b16 %v1132
        %v3357 = vunpack.c.l.b16 %v1133
        %v3358 = vunpack.c.h.b16 %v1133
        %v3359 = vunpack.c.l.b16 %v1134
        %v3360 = vunpack.c.h.b16 %v1134
        %v3361 = vunpack.c.l.b16 %v1135
        %v3362 = vunpack.c.h.b16 %v1135
        %v3363 = vunpack.c.l.b16 %v1136
        %v3364 = vunpack.c.h.b16 %v1136
        %v3365 = vunpack.c.l.b16 %v1137
        %v3366 = vunpack.c.h.b16 %v1137
        %v3367 = vunpack.c.l.b16 %v1138
        %v3368 = vunpack.c.h.b16 %v1138
        %v3369 = vunpack.c.l.b16 %v1139
        %v3370 = vunpack.c.h.b16 %v1139
        %v3371 = vunpack.c.l.b16 %v1140
        %v3372 = vunpack.c.h.b16 %v1140
        %v3373 = vunpack.c.l.b16 %v1141
        %v3374 = vunpack.c.h.b16 %v1141
        %v3375 = vunpack.c.l.b16 %v1142
        %v3376 = vunpack.c.h.b16 %v1142
        %v3377 = vunpack.c.l.b16 %v1143
        %v3378 = vunpack.c.h.b16 %v1143
        %v3379 = vunpack.c.l.b16 %v1144
        %v3380 = vunpack.c.h.b16 %v1144
        %v3381 = vunpack.c.l.b16 %v1145
        %v3382 = vunpack.c.h.b16 %v1145
        %v3383 = vunpack.c.l.b16 %v1146
        %v3384 = vunpack.c.h.b16 %v1146
        %v3385 = vunpack.c.l.b16 %v1147
        %v3386 = vunpack.c.h.b16 %v1147
        %v3387 = vunpack.c.l.b16 %v1148
        %v3388 = vunpack.c.h.b16 %v1148
        %v3389 = vunpack.c.l.b16 %v1149
        %v3390 = vunpack.c.h.b16 %v1149
        %v3391 = vunpack.c.l.b16 %v1150
        %v3392 = vunpack.c.h.b16 %v1150
        %v3393 = vunpack.c.l.b16 %v1151
        %v3394 = vunpack.c.h.b16 %v1151
        %v3395 = vunpack.c.l.b16 %v1152
        %v3396 = vunpack.c.h.b16 %v1152
        %v3397 = vunpack.c.l.b16 %v1153
        %v3398 = vunpack.c.h.b16 %v1153
        %v3399 = vunpack.c.l.b16 %v1154
        %v3400 = vunpack.c.h.b16 %v1154
        %v3401 = vunpack.c.l.b16 %v1155
        %v3402 = vunpack.c.h.b16 %v1155
        %v3403 = vunpack.c.l.b16 %v1156
        %v3404 = vunpack.c.h.b16 %v1156
        %v3405 = vunpack.c.l.b16 %v1157
        %v3406 = vunpack.c.h.b16 %v1157
        %v3407 = vunpack.c.l.b16 %v1158
        %v3408 = vunpack.c.h.b16 %v1158
        %v3409 = vunpack.c.l.b16 %v1159
        %v3410 = vunpack.c.h.b16 %v1159
        %v3411 = vunpack.c.l.b16 %v1160
        %v3412 = vunpack.c.h.b16 %v1160
        %v3413 = vunpack.c.l.b16 %v1161
        %v3414 = vunpack.c.h.b16 %v1161
        %v3415 = vunpack.c.l.b16 %v1162
        %v3416 = vunpack.c.h.b16 %v1162
        %v3417 = vunpack.c.l.b16 %v1163
        %v3418 = vunpack.c.h.b16 %v1163
        %v3419 = vunpack.c.l.b16 %v1164
        %v3420 = vunpack.c.h.b16 %v1164
        %v3421 = vunpack.c.l.b16 %v1165
        %v3422 = vunpack.c.h.b16 %v1165
        %v3423 = vunpack.c.l.b16 %v1166
        %v3424 = vunpack.c.h.b16 %v1166
        %v3425 = vunpack.c.l.b16 %v1167
        %v3426 = vunpack.c.h.b16 %v1167
        %v3427 = vunpack.c.l.b16 %v1168
        %v3428 = vunpack.c.h.b16 %v1168
        %v3429 = vunpack.c.l.b16 %v1169
        %v3430 = vunpack.c.h.b16 %v1169
        %v3431 = vunpack.c.l.b16 %v1170
        %v3432 = vunpack.c.h.b16 %v1170
        %v3433 = vunpack.c.l.b16 %v1171
        %v3434 = vunpack.c.h.b16 %v1171
        %v3435 = vunpack.c.l.b16 %v1172
        %v3436 = vunpack.c.h.b16 %v1172
        %v3437 = vunpack.c.l.b16 %v1173
        %v3438 = vunpack.c.h.b16 %v1173
        %v3439 = vunpack.c.l.b16 %v1174
        %v3440 = vunpack.c.h.b16 %v1174
        %v3441 = vunpack.c.l.b16 %v1175
        %v3442 = vunpack.c.h.b16 %v1175
        %v3443 = vunpack.c.l.b16 %v1176
        %v3444 = vunpack.c.h.b16 %v1176
        %v3445 = vunpack.c.l.b16 %v1177
        %v3446 = vunpack.c.h.b16 %v1177
        %v3447 = vunpack.c.l.b16 %v1178
        %v3448 = vunpack.c.h.b16 %v1178
        %v3449 = vunpack.c.l.b16 %v1179
        %v3450 = vunpack.c.h.b16 %v1179
        %v3451 = vunpack.c.l.b16 %v1180
        %v3452 = vunpack.c.h.b16 %v1180
        %v3453 = vunpack.c.l.b16 %v1181
        %v3454 = vunpack.c.h.b16 %v1181
        %v3455 = vunpack.c.l.b16 %v1182
        %v3456 = vunpack.c.h.b16 %v1182
        %v3457 = vunpack.c.l.b16 %v1183
        %v3458 = vunpack.c.h.b16 %v1183
        %v3459 = vunpack.c.l.b16 %v1184
        %v3460 = vunpack.c.h.b16 %v1184
        %v3461 = vunpack.c.l.b16 %v1185
        %v3462 = vunpack.c.h.b16 %v1185
        %v3463 = vunpack.c.l.b16 %v1186
        %v3464 = vunpack.c.h.b16 %v1186
        %v3465 = vunpack.c.l.b16 %v1187
        %v3466 = vunpack.c.h.b16 %v1187
        %v3467 = vunpack.c.l.b16 %v1188
        %v3468 = vunpack.c.h.b16 %v1188
        %v3469 = vunpack.c.l.b16 %v1189
        %v3470 = vunpack.c.h.b16 %v1189
        %v3471 = vunpack.c.l.b16 %v1190
        %v3472 = vunpack.c.h.b16 %v1190
        %v3473 = vunpack.c.l.b16 %v1191
        %v3474 = vunpack.c.h.b16 %v1191
        %v3475 = vunpack.c.l.b16 %v1192
        %v3476 = vunpack.c.h.b16 %v1192
        %v3477 = vunpack.c.l.b16 %v1193
        %v3478 = vunpack.c.h.b16 %v1193
        %v3479 = vunpack.c.l.b16 %v1194
        %v3480 = vunpack.c.h.b16 %v1194
        %v3481 = vunpack.c.l.b16 %v1195
        %v3482 = vunpack.c.h.b16 %v1195
        %v3483 = vunpack.c.l.b16 %v1196
        %v3484 = vunpack.c.h.b16 %v1196
        %v3485 = vunpack.c.l.b16 %v1197
        %v3486 = vunpack.c.h.b16 %v1197
        %v3487 = vunpack.c.l.b16 %v1198
        %v3488 = vunpack.c.h.b16 %v1198
        %v3489 = vunpack.c.l.b16 %v1199
        %v3490 = vunpack.c.h.b16 %v1199
        %v3491 = vunpack.c.l.b16 %v1200
        %v3492 = vunpack.c.h.b16 %v1200
        %v3493 = vunpack.c.l.b16 %v1201
        %v3494 = vunpack.c.h.b16 %v1201
        %v3495 = vunpack.c.l.b16 %v1202
        %v3496 = vunpack.c.h.b16 %v1202
        %v3497 = vunpack.c.l.b16 %v1203
        %v3498 = vunpack.c.h.b16 %v1203
        %v3499 = vunpack.c.l.b16 %v1204
        %v3500 = vunpack.c.h.b16 %v1204
        %v3501 = vunpack.c.l.b16 %v1205
        %v3502 = vunpack.c.h.b16 %v1205
        %v3503 = vunpack.c.l.b16 %v1206
        %v3504 = vunpack.c.h.b16 %v1206
        %v3505 = vunpack.c.l.b16 %v1207
        %v3506 = vunpack.c.h.b16 %v1207
        %v3507 = vunpack.c.l.b16 %v1208
        %v3508 = vunpack.c.h.b16 %v1208
        %v3509 = vunpack.c.l.b16 %v1209
        %v3510 = vunpack.c.h.b16 %v1209
        %v3511 = vunpack.c.l.b16 %v1210
        %v3512 = vunpack.c.h.b16 %v1210
        %v3513 = vunpack.c.l.b16 %v1211
        %v3514 = vunpack.c.h.b16 %v1211
        %v3515 = vunpack.c.l.b16 %v1212
        %v3516 = vunpack.c.h.b16 %v1212
        %v3517 = vunpack.c.l.b16 %v1213
        %v3518 = vunpack.c.h.b16 %v1213
        %v3519 = vunpack.c.l.b16 %v1214
        %v3520 = vunpack.c.h.b16 %v1214
        %v3521 = vunpack.c.l.b16 %v1215
        %v3522 = vunpack.c.h.b16 %v1215
        %v3523 = vunpack.c.l.b16 %v1216
        %v3524 = vunpack.c.h.b16 %v1216
        %v3525 = vunpack.c.l.b16 %v1217
        %v3526 = vunpack.c.h.b16 %v1217
        %v3527 = vunpack.c.l.b16 %v1218
        %v3528 = vunpack.c.h.b16 %v1218
        %v3529 = vunpack.c.l.b16 %v1219
        %v3530 = vunpack.c.h.b16 %v1219
        %v3531 = vunpack.c.l.b16 %v1220
        %v3532 = vunpack.c.h.b16 %v1220
        %v3533 = vunpack.c.l.b16 %v1221
        %v3534 = vunpack.c.h.b16 %v1221
        %v3535 = vunpack.c.l.b16 %v1222
        %v3536 = vunpack.c.h.b16 %v1222
        %v3537 = vunpack.c.l.b16 %v1223
        %v3538 = vunpack.c.h.b16 %v1223
        %v3539 = vunpack.c.l.b16 %v1224
        %v3540 = vunpack.c.h.b16 %v1224
        %v3541 = vunpack.c.l.b16 %v1225
        %v3542 = vunpack.c.h.b16 %v1225
        %v3543 = vunpack.c.l.b16 %v1226
        %v3544 = vunpack.c.h.b16 %v1226
        %v3545 = vunpack.c.l.b16 %v1227
        %v3546 = vunpack.c.h.b16 %v1227
        %v3547 = vunpack.c.l.b16 %v1228
        %v3548 = vunpack.c.h.b16 %v1228
        %v3549 = vunpack.c.l.b16 %v1229
        %v3550 = vunpack.c.h.b16 %v1229
        %v3551 = vunpack.c.l.b16 %v1230
        %v3552 = vunpack.c.h.b16 %v1230
        %v3553 = vunpack.c.l.b16 %v1231
        %v3554 = vunpack.c.h.b16 %v1231
        %v3555 = vunpack.c.l.b16 %v1232
        %v3556 = vunpack.c.h.b16 %v1232
        %v3557 = vunpack.c.l.b16 %v1233
        %v3558 = vunpack.c.h.b16 %v1233
        %v3559 = vunpack.c.l.b16 %v1234
        %v3560 = vunpack.c.h.b16 %v1234
        %v3561 = vunpack.c.l.b16 %v1235
        %v3562 = vunpack.c.h.b16 %v1235
        %v3563 = vunpack.c.l.b16 %v1236
        %v3564 = vunpack.c.h.b16 %v1236
        %v3565 = vunpack.c.l.b16 %v1237
        %v3566 = vunpack.c.h.b16 %v1237
        %v3567 = vunpack.c.l.b16 %v1238
        %v3568 = vunpack.c.h.b16 %v1238
        %v3569 = vunpack.c.l.b16 %v1239
        %v3570 = vunpack.c.h.b16 %v1239
        %v3571 = vunpack.c.l.b16 %v1240
        %v3572 = vunpack.c.h.b16 %v1240
        %v3573 = vunpack.c.l.b16 %v1241
        %v3574 = vunpack.c.h.b16 %v1241
        %v3575 = vunpack.c.l.b16 %v1242
        %v3576 = vunpack.c.h.b16 %v1242
        %v3577 = vunpack.c.l.b16 %v1243
        %v3578 = vunpack.c.h.b16 %v1243
        %v3579 = vunpack.c.l.b16 %v1244
        %v3580 = vunpack.c.h.b16 %v1244
        %v3581 = vunpack.c.l.b16 %v1245
        %v3582 = vunpack.c.h.b16 %v1245
        %v3583 = vunpack.c.l.b16 %v1246
        %v3584 = vunpack.c.h.b16 %v1246
        %v3585 = vunpack.c.l.b16 %v1247
        %v3586 = vunpack.c.h.b16 %v1247
        %v3587 = vunpack.c.l.b16 %v1248
        %v3588 = vunpack.c.h.b16 %v1248
        %v3589 = vunpack.c.l.b16 %v1249
        %v3590 = vunpack.c.h.b16 %v1249
        %v3591 = vunpack.c.l.b16 %v1250
        %v3592 = vunpack.c.h.b16 %v1250
        %v3593 = vunpack.c.l.b16 %v1251
        %v3594 = vunpack.c.h.b16 %v1251
        %v3595 = vunpack.c.l.b16 %v1252
        %v3596 = vunpack.c.h.b16 %v1252
        %v3597 = vunpack.c.l.b16 %v1253
        %v3598 = vunpack.c.h.b16 %v1253
        %v3599 = vunpack.c.l.b16 %v1254
        %v3600 = vunpack.c.h.b16 %v1254
        %v3601 = vunpack.c.l.b16 %v1255
        %v3602 = vunpack.c.h.b16 %v1255
        %v3603 = vunpack.c.l.b16 %v1256
        %v3604 = vunpack.c.h.b16 %v1256
        %v3605 = vunpack.c.l.b16 %v1257
        %v3606 = vunpack.c.h.b16 %v1257
        %v3607 = vunpack.c.l.b16 %v1258
        %v3608 = vunpack.c.h.b16 %v1258
        %v3609 = vunpack.c.l.b16 %v1259
        %v3610 = vunpack.c.h.b16 %v1259
        %v3611 = vunpack.c.l.b16 %v1260
        %v3612 = vunpack.c.h.b16 %v1260
        %v3613 = vunpack.c.l.b16 %v1261
        %v3614 = vunpack.c.h.b16 %v1261
        %v3615 = vunpack.c.l.b16 %v1262
        %v3616 = vunpack.c.h.b16 %v1262
        %v3617 = vunpack.c.l.b16 %v1263
        %v3618 = vunpack.c.h.b16 %v1263
        %v3619 = vunpack.c.l.b16 %v1264
        %v3620 = vunpack.c.h.b16 %v1264
        %v3621 = vunpack.c.l.b16 %v1265
        %v3622 = vunpack.c.h.b16 %v1265
        %v3623 = vunpack.c.l.b16 %v1266
        %v3624 = vunpack.c.h.b16 %v1266
        %v3625 = vunpack.c.l.b16 %v1267
        %v3626 = vunpack.c.h.b16 %v1267
        %v3627 = vunpack.c.l.b16 %v1268
        %v3628 = vunpack.c.h.b16 %v1268
        %v3629 = vunpack.c.l.b16 %v1269
        %v3630 = vunpack.c.h.b16 %v1269
        %v3631 = vunpack.c.l.b16 %v1270
        %v3632 = vunpack.c.h.b16 %v1270
        %v3633 = vunpack.c.l.b16 %v1271
        %v3634 = vunpack.c.h.b16 %v1271
        %v3635 = vunpack.c.l.b16 %v1272
        %v3636 = vunpack.c.h.b16 %v1272
        %v3637 = vunpack.c.l.b16 %v1273
        %v3638 = vunpack.c.h.b16 %v1273
        %v3639 = vunpack.c.l.b16 %v1274
        %v3640 = vunpack.c.h.b16 %v1274
        %v3641 = vunpack.c.l.b16 %v1275
        %v3642 = vunpack.c.h.b16 %v1275
        %v3643 = vunpack.c.l.b16 %v1276
        %v3644 = vunpack.c.h.b16 %v1276
        %v3645 = vunpack.c.l.b16 %v1277
        %v3646 = vunpack.c.h.b16 %v1277
        %v3647 = vunpack.c.l.b16 %v1278
        %v3648 = vunpack.c.h.b16 %v1278
        %v3649 = vunpack.c.l.b16 %v1279
        %v3650 = vunpack.c.h.b16 %v1279
        %v3651 = vunpack.c.l.b16 %v1280
        %v3652 = vunpack.c.h.b16 %v1280
        %v3653 = vunpack.c.l.b16 %v1281
        %v3654 = vunpack.c.h.b16 %v1281
        %v3655 = vunpack.c.l.b16 %v1282
        %v3656 = vunpack.c.h.b16 %v1282
        %v3657 = vunpack.c.l.b16 %v1283
        %v3658 = vunpack.c.h.b16 %v1283
        %v3659 = vunpack.c.l.b16 %v1284
        %v3660 = vunpack.c.h.b16 %v1284
        %v3661 = vunpack.c.l.b16 %v1285
        %v3662 = vunpack.c.h.b16 %v1285
        %v3663 = vunpack.c.l.b16 %v1286
        %v3664 = vunpack.c.h.b16 %v1286
        %v3665 = vunpack.c.l.b16 %v1287
        %v3666 = vunpack.c.h.b16 %v1287
        %v3667 = vunpack.c.l.b16 %v1288
        %v3668 = vunpack.c.h.b16 %v1288
        %v3669 = vunpack.c.l.b16 %v1289
        %v3670 = vunpack.c.h.b16 %v1289
        %v3671 = vunpack.c.l.b16 %v1290
        %v3672 = vunpack.c.h.b16 %v1290
        %v3673 = vunpack.c.l.b16 %v1291
        %v3674 = vunpack.c.h.b16 %v1291
        %v3675 = vunpack.c.l.b16 %v1292
        %v3676 = vunpack.c.h.b16 %v1292
        %v3677 = vunpack.c.l.b16 %v1293
        %v3678 = vunpack.c.h.b16 %v1293
        %v3679 = vunpack.c.l.b16 %v1294
        %v3680 = vunpack.c.h.b16 %v1294
        %v3681 = vunpack.c.l.b16 %v1295
        %v3682 = vunpack.c.h.b16 %v1295
        %v3683 = vunpack.c.l.b16 %v1296
        %v3684 = vunpack.c.h.b16 %v1296
        %v3685 = vunpack.c.l.b16 %v1297
        %v3686 = vunpack.c.h.b16 %v1297
        %v3687 = vunpack.c.l.b16 %v1298
        %v3688 = vunpack.c.h.b16 %v1298
        %v3689 = vunpack.c.l.b16 %v1299
        %v3690 = vunpack.c.h.b16 %v1299
        %v3691 = vunpack.c.l.b16 %v1300
        %v3692 = vunpack.c.h.b16 %v1300
        %v3693 = vunpack.c.l.b16 %v1301
        %v3694 = vunpack.c.h.b16 %v1301
        %v3695 = vunpack.c.l.b16 %v1302
        %v3696 = vunpack.c.h.b16 %v1302
        %v3697 = vunpack.c.l.b16 %v1303
        %v3698 = vunpack.c.h.b16 %v1303
        %v3699 = vunpack.c.l.b16 %v1304
        %v3700 = vunpack.c.h.b16 %v1304
        %v3701 = vunpack.c.l.b16 %v1305
        %v3702 = vunpack.c.h.b16 %v1305
        %v3703 = vunpack.c.l.b16 %v1306
        %v3704 = vunpack.c.h.b16 %v1306
        %v3705 = vunpack.c.l.b16 %v1307
        %v3706 = vunpack.c.h.b16 %v1307
        %v3707 = vunpack.c.l.b16 %v1308
        %v3708 = vunpack.c.h.b16 %v1308
        %v3709 = vunpack.c.l.b16 %v1309
        %v3710 = vunpack.c.h.b16 %v1309
        %v3711 = vunpack.c.l.b16 %v1310
        %v3712 = vunpack.c.h.b16 %v1310
        %v3713 = vunpack.c.l.b16 %v1311
        %v3714 = vunpack.c.h.b16 %v1311
        %v3715 = vunpack.c.l.b16 %v1312
        %v3716 = vunpack.c.h.b16 %v1312
        %v3717 = vunpack.c.l.b16 %v1313
        %v3718 = vunpack.c.h.b16 %v1313
        %v3719 = vunpack.c.l.b16 %v1314
        %v3720 = vunpack.c.h.b16 %v1314
        %v3721 = vunpack.c.l.b16 %v1315
        %v3722 = vunpack.c.h.b16 %v1315
        %v3723 = vunpack.c.l.b16 %v1316
        %v3724 = vunpack.c.h.b16 %v1316
        %v3725 = vunpack.c.l.b16 %v1317
        %v3726 = vunpack.c.h.b16 %v1317
        %v3727 = vunpack.c.l.b16 %v1318
        %v3728 = vunpack.c.h.b16 %v1318
        %v3729 = vunpack.c.l.b16 %v1319
        %v3730 = vunpack.c.h.b16 %v1319
        %v3731 = vunpack.c.l.b16 %v1320
        %v3732 = vunpack.c.h.b16 %v1320
        %v3733 = vunpack.c.l.b16 %v1321
        %v3734 = vunpack.c.h.b16 %v1321
        %v3735 = vunpack.c.l.b16 %v1322
        %v3736 = vunpack.c.h.b16 %v1322
        %v3737 = vunpack.c.l.b16 %v1323
        %v3738 = vunpack.c.h.b16 %v1323
        %v3739 = vunpack.c.l.b16 %v1324
        %v3740 = vunpack.c.h.b16 %v1324
        %v3741 = vunpack.c.l.b16 %v1325
        %v3742 = vunpack.c.h.b16 %v1325
        %v3743 = vunpack.c.l.b16 %v1326
        %v3744 = vunpack.c.h.b16 %v1326
        %v3745 = vunpack.c.l.b16 %v1327
        %v3746 = vunpack.c.h.b16 %v1327
        %v3747 = vunpack.c.l.b16 %v1328
        %v3748 = vunpack.c.h.b16 %v1328
        %v3749 = vunpack.c.l.b16 %v1329
        %v3750 = vunpack.c.h.b16 %v1329
        %v3751 = vunpack.c.l.b16 %v1330
        %v3752 = vunpack.c.h.b16 %v1330
        %v3753 = vunpack.c.l.b16 %v1331
        %v3754 = vunpack.c.h.b16 %v1331
        %v3755 = vunpack.c.l.b16 %v1332
        %v3756 = vunpack.c.h.b16 %v1332
        %v3757 = vunpack.c.l.b16 %v1333
        %v3758 = vunpack.c.h.b16 %v1333
        %v3759 = vunpack.c.l.b16 %v1334
        %v3760 = vunpack.c.h.b16 %v1334
        %v3761 = vunpack.c.l.b16 %v1335
        %v3762 = vunpack.c.h.b16 %v1335
        %v3763 = vunpack.c.l.b16 %v1336
        %v3764 = vunpack.c.h.b16 %v1336
        %v3765 = vunpack.c.l.b16 %v1337
        %v3766 = vunpack.c.h.b16 %v1337
        %v3767 = vunpack.c.l.b16 %v1338
        %v3768 = vunpack.c.h.b16 %v1338
        %v3769 = vunpack.c.l.b16 %v1339
        %v3770 = vunpack.c.h.b16 %v1339
        %v3771 = vunpack.c.l.b16 %v1340
        %v3772 = vunpack.c.h.b16 %v1340
        %v3773 = vunpack.c.l.b16 %v1341
        %v3774 = vunpack.c.h.b16 %v1341
        %v3775 = vunpack.c.l.b16 %v1342
        %v3776 = vunpack.c.h.b16 %v1342
        %v3777 = vunpack.c.l.b16 %v1343
        %v3778 = vunpack.c.h.b16 %v1343
        %v3779 = vunpack.c.l.b16 %v1344
        %v3780 = vunpack.c.h.b16 %v1344
        %v3781 = vunpack.c.l.b16 %v1345
        %v3782 = vunpack.c.h.b16 %v1345
        %v3783 = vunpack.c.l.b16 %v1346
        %v3784 = vunpack.c.h.b16 %v1346
        %v3785 = vunpack.c.l.b16 %v1347
        %v3786 = vunpack.c.h.b16 %v1347
        %v3787 = vunpack.c.l.b16 %v1348
        %v3788 = vunpack.c.h.b16 %v1348
        %v3789 = vunpack.c.l.b16 %v1349
        %v3790 = vunpack.c.h.b16 %v1349
        %v3791 = vunpack.c.l.b16 %v1350
        %v3792 = vunpack.c.h.b16 %v1350
        %v3793 = vunpack.c.l.b16 %v1351
        %v3794 = vunpack.c.h.b16 %v1351
        %v3795 = vunpack.c.l.b16 %v1352
        %v3796 = vunpack.c.h.b16 %v1352
        %v3797 = vunpack.c.l.b16 %v1353
        %v3798 = vunpack.c.h.b16 %v1353
        %v3799 = vunpack.c.l.b16 %v1354
        %v3800 = vunpack.c.h.b16 %v1354
        %v3801 = vunpack.c.l.b16 %v1355
        %v3802 = vunpack.c.h.b16 %v1355
        %v3803 = vunpack.c.l.b16 %v1356
        %v3804 = vunpack.c.h.b16 %v1356
        %v3805 = vunpack.c.l.b16 %v1357
        %v3806 = vunpack.c.h.b16 %v1357
        %v3807 = vunpack.c.l.b16 %v1358
        %v3808 = vunpack.c.h.b16 %v1358
        %v3809 = vunpack.c.l.b16 %v1359
        %v3810 = vunpack.c.h.b16 %v1359
        %v3811 = vunpack.c.l.b16 %v1360
        %v3812 = vunpack.c.h.b16 %v1360
        %v3813 = vunpack.c.l.b16 %v1361
        %v3814 = vunpack.c.h.b16 %v1361
        %v3815 = vunpack.c.l.b16 %v1362
        %v3816 = vunpack.c.h.b16 %v1362
        %v3817 = vunpack.c.l.b16 %v1363
        %v3818 = vunpack.c.h.b16 %v1363
        %v3819 = vunpack.c.l.b16 %v1364
        %v3820 = vunpack.c.h.b16 %v1364
        %v3821 = vunpack.c.l.b16 %v1365
        %v3822 = vunpack.c.h.b16 %v1365
        %v3823 = vunpack.c.l.b16 %v1366
        %v3824 = vunpack.c.h.b16 %v1366
        %v3825 = vunpack.c.l.b16 %v1367
        %v3826 = vunpack.c.h.b16 %v1367
        %v3827 = vunpack.c.l.b16 %v1368
        %v3828 = vunpack.c.h.b16 %v1368
        %v3829 = vunpack.c.l.b16 %v1369
        %v3830 = vunpack.c.h.b16 %v1369
        %v3831 = vunpack.c.l.b16 %v1370
        %v3832 = vunpack.c.h.b16 %v1370
        %v3833 = vunpack.c.l.b16 %v1371
        %v3834 = vunpack.c.h.b16 %v1371
        %v3835 = vunpack.c.l.b16 %v1372
        %v3836 = vunpack.c.h.b16 %v1372
        %v3837 = vunpack.c.l.b16 %v1373
        %v3838 = vunpack.c.h.b16 %v1373
        %v3839 = vunpack.c.l.b16 %v1374
        %v3840 = vunpack.c.h.b16 %v1374
        %v3841 = vunpack.c.l.b16 %v1375
        %v3842 = vunpack.c.h.b16 %v1375
        %v3843 = vunpack.c.l.b16 %v1376
        %v3844 = vunpack.c.h.b16 %v1376
        %v3845 = vunpack.c.l.b16 %v1377
        %v3846 = vunpack.c.h.b16 %v1377
        %v3847 = vunpack.c.l.b16 %v1378
        %v3848 = vunpack.c.h.b16 %v1378
        %v3849 = vunpack.c.l.b16 %v1379
        %v3850 = vunpack.c.h.b16 %v1379
        %v3851 = vunpack.c.l.b16 %v1380
        %v3852 = vunpack.c.h.b16 %v1380
        %v3853 = vunpack.c.l.b16 %v1381
        %v3854 = vunpack.c.h.b16 %v1381
        %v3855 = vunpack.c.l.b16 %v1382
        %v3856 = vunpack.c.h.b16 %v1382
        %v3857 = vunpack.c.l.b16 %v1383
        %v3858 = vunpack.c.h.b16 %v1383
        %v3859 = vunpack.c.l.b16 %v1384
        %v3860 = vunpack.c.h.b16 %v1384
        %v3861 = vunpack.c.l.b16 %v1385
        %v3862 = vunpack.c.h.b16 %v1385
        %v3863 = vunpack.c.l.b16 %v1386
        %v3864 = vunpack.c.h.b16 %v1386
        %v3865 = vunpack.c.l.b16 %v1387
        %v3866 = vunpack.c.h.b16 %v1387
        %v3867 = vunpack.c.l.b16 %v1388
        %v3868 = vunpack.c.h.b16 %v1388
        %v3869 = vunpack.c.l.b16 %v1389
        %v3870 = vunpack.c.h.b16 %v1389
        %v3871 = vunpack.c.l.b16 %v1390
        %v3872 = vunpack.c.h.b16 %v1390
        %v3873 = vunpack.c.l.b16 %v1391
        %v3874 = vunpack.c.h.b16 %v1391
        %v3875 = vunpack.c.l.b16 %v1392
        %v3876 = vunpack.c.h.b16 %v1392
        %v3877 = vunpack.c.l.b16 %v1393
        %v3878 = vunpack.c.h.b16 %v1393
        %v3879 = vunpack.c.l.b16 %v1394
        %v3880 = vunpack.c.h.b16 %v1394
        %v3881 = vunpack.c.l.b16 %v1395
        %v3882 = vunpack.c.h.b16 %v1395
        %v3883 = vunpack.c.l.b16 %v1396
        %v3884 = vunpack.c.h.b16 %v1396
        %v3885 = vunpack.c.l.b16 %v1397
        %v3886 = vunpack.c.h.b16 %v1397
        %v3887 = vunpack.c.l.b16 %v1398
        %v3888 = vunpack.c.h.b16 %v1398
        %v3889 = vunpack.c.l.b16 %v1399
        %v3890 = vunpack.c.h.b16 %v1399
        %v3891 = vunpack.c.l.b16 %v1400
        %v3892 = vunpack.c.h.b16 %v1400
        %v3893 = vunpack.c.l.b16 %v1401
        %v3894 = vunpack.c.h.b16 %v1401
        %v3895 = vunpack.c.l.b16 %v1402
        %v3896 = vunpack.c.h.b16 %v1402
        %v3897 = vunpack.c.l.b16 %v1403
        %v3898 = vunpack.c.h.b16 %v1403
        %v3899 = vunpack.c.l.b16 %v1404
        %v3900 = vunpack.c.h.b16 %v1404
        %v3901 = vunpack.c.l.b16 %v1405
        %v3902 = vunpack.c.h.b16 %v1405
        %v3903 = vunpack.c.l.b16 %v1406
        %v3904 = vunpack.c.h.b16 %v1406
        %v3905 = vunpack.c.l.b16 %v1407
        %v3906 = vunpack.c.h.b16 %v1407
        %v3907 = vunpack.c.l.b16 %v1408
        %v3908 = vunpack.c.h.b16 %v1408
        %v3909 = vunpack.c.l.b16 %v1409
        %v3910 = vunpack.c.h.b16 %v1409
        %v3911 = vunpack.c.l.b16 %v1410
        %v3912 = vunpack.c.h.b16 %v1410
        %v3913 = vunpack.c.l.b16 %v1411
        %v3914 = vunpack.c.h.b16 %v1411
        %v3915 = vunpack.c.l.b16 %v1412
        %v3916 = vunpack.c.h.b16 %v1412
        %v3917 = vunpack.c.l.b16 %v1413
        %v3918 = vunpack.c.h.b16 %v1413
        %v3919 = vunpack.c.l.b16 %v1414
        %v3920 = vunpack.c.h.b16 %v1414
        %v3921 = vunpack.c.l.b16 %v1415
        %v3922 = vunpack.c.h.b16 %v1415
        %v3923 = vunpack.c.l.b16 %v1416
        %v3924 = vunpack.c.h.b16 %v1416
        %v3925 = vunpack.c.l.b16 %v1417
        %v3926 = vunpack.c.h.b16 %v1417
        %v3927 = vunpack.c.l.b16 %v1418
        %v3928 = vunpack.c.h.b16 %v1418
        %v3929 = vunpack.c.l.b16 %v1419
        %v3930 = vunpack.c.h.b16 %v1419
        %v3931 = vunpack.c.l.b16 %v1420
        %v3932 = vunpack.c.h.b16 %v1420
        %v3933 = vunpack.c.l.b16 %v1421
        %v3934 = vunpack.c.h.b16 %v1421
        %v3935 = vunpack.c.l.b16 %v1422
        %v3936 = vunpack.c.h.b16 %v1422
        %v3937 = vunpack.c.l.b16 %v1423
        %v3938 = vunpack.c.h.b16 %v1423
        %v3939 = vunpack.c.l.b16 %v1424
        %v3940 = vunpack.c.h.b16 %v1424
        %v3941 = vunpack.c.l.b16 %v1425
        %v3942 = vunpack.c.h.b16 %v1425
        %v3943 = vunpack.c.l.b16 %v1426
        %v3944 = vunpack.c.h.b16 %v1426
        %v3945 = vunpack.c.l.b16 %v1427
        %v3946 = vunpack.c.h.b16 %v1427
        %v3947 = vunpack.c.l.b16 %v1428
        %v3948 = vunpack.c.h.b16 %v1428
        %v3949 = vunpack.c.l.b16 %v1429
        %v3950 = vunpack.c.h.b16 %v1429
        %v3951 = vunpack.c.l.b16 %v1430
        %v3952 = vunpack.c.h.b16 %v1430
        %v3953 = vunpack.c.l.b16 %v1431
        %v3954 = vunpack.c.h.b16 %v1431
        %v3955 = vunpack.c.l.b16 %v1432
        %v3956 = vunpack.c.h.b16 %v1432
        %v3957 = vunpack.c.l.b16 %v1433
        %v3958 = vunpack.c.h.b16 %v1433
        %v3959 = vunpack.c.l.b16 %v1434
        %v3960 = vunpack.c.h.b16 %v1434
        %v3961 = vunpack.c.l.b16 %v1435
        %v3962 = vunpack.c.h.b16 %v1435
        %v3963 = vunpack.c.l.b16 %v1436
        %v3964 = vunpack.c.h.b16 %v1436
        %v3965 = vunpack.c.l.b16 %v1437
        %v3966 = vunpack.c.h.b16 %v1437
        %v3967 = vunpack.c.l.b16 %v1438
        %v3968 = vunpack.c.h.b16 %v1438
        %v3969 = vunpack.c.l.b16 %v1439
        %v3970 = vunpack.c.h.b16 %v1439
        %v3971 = vunpack.c.l.b16 %v1440
        %v3972 = vunpack.c.h.b16 %v1440
        %v3973 = vunpack.c.l.b16 %v1441
        %v3974 = vunpack.c.h.b16 %v1441
        %v3975 = vunpack.c.l.b16 %v1442
        %v3976 = vunpack.c.h.b16 %v1442
        %v3977 = vunpack.c.l.b16 %v1443
        %v3978 = vunpack.c.h.b16 %v1443
        %v3979 = vunpack.c.l.b16 %v1444
        %v3980 = vunpack.c.h.b16 %v1444
        %v3981 = vunpack.c.l.b16 %v1445
        %v3982 = vunpack.c.h.b16 %v1445
        %v3983 = vunpack.c.l.b16 %v1446
        %v3984 = vunpack.c.h.b16 %v1446
        %v3985 = vunpack.c.l.b16 %v1447
        %v3986 = vunpack.c.h.b16 %v1447
        %v3987 = vunpack.c.l.b16 %v1448
        %v3988 = vunpack.c.h.b16 %v1448
        %v3989 = vunpack.c.l.b16 %v1449
        %v3990 = vunpack.c.h.b16 %v1449
        %v3991 = vunpack.c.l.b16 %v1450
        %v3992 = vunpack.c.h.b16 %v1450
        %v3993 = vunpack.c.l.b16 %v1451
        %v3994 = vunpack.c.h.b16 %v1451
        %v3995 = vunpack.c.l.b16 %v1452
        %v3996 = vunpack.c.h.b16 %v1452
        %v3997 = vunpack.c.l.b16 %v1453
        %v3998 = vunpack.c.h.b16 %v1453
        %v3999 = vunpack.c.l.b16 %v1454
        %v4000 = vunpack.c.h.b16 %v1454
        %v4001 = vunpack.c.l.b16 %v1455
        %v4002 = vunpack.c.h.b16 %v1455
        %v4003 = vunpack.c.l.b16 %v1456
        %v4004 = vunpack.c.h.b16 %v1456
        %v4005 = vunpack.c.l.b16 %v1457
        %v4006 = vunpack.c.h.b16 %v1457
        %v4007 = vunpack.c.l.b16 %v1458
        %v4008 = vunpack.c.h.b16 %v1458
        %v4009 = vunpack.c.l.b16 %v1459
        %v4010 = vunpack.c.h.b16 %v1459
        %v4011 = vunpack.c.l.b16 %v1460
        %v4012 = vunpack.c.h.b16 %v1460
        %v4013 = vunpack.c.l.b16 %v1461
        %v4014 = vunpack.c.h.b16 %v1461
        %v4015 = vunpack.c.l.b16 %v1462
        %v4016 = vunpack.c.h.b16 %v1462
        %v4017 = vunpack.c.l.b16 %v1463
        %v4018 = vunpack.c.h.b16 %v1463
        %v4019 = vunpack.c.l.b16 %v1464
        %v4020 = vunpack.c.h.b16 %v1464
        %v4021 = vunpack.c.l.b16 %v1465
        %v4022 = vunpack.c.h.b16 %v1465
        %v4023 = vunpack.c.l.b16 %v1466
        %v4024 = vunpack.c.h.b16 %v1466
        %v4025 = vunpack.c.l.b16 %v1467
        %v4026 = vunpack.c.h.b16 %v1467
        %v4027 = vunpack.c.l.b16 %v1468
        %v4028 = vunpack.c.h.b16 %v1468
        %v4029 = vunpack.c.l.b16 %v1469
        %v4030 = vunpack.c.h.b16 %v1469
        %v4031 = vunpack.c.l.b16 %v1470
        %v4032 = vunpack.c.h.b16 %v1470
        %v4033 = vunpack.c.l.b16 %v1471
        %v4034 = vunpack.c.h.b16 %v1471
        %v4035 = vunpack.c.l.b16 %v1472
        %v4036 = vunpack.c.h.b16 %v1472
        %v4037 = vunpack.c.l.b16 %v1473
        %v4038 = vunpack.c.h.b16 %v1473
        %v4039 = vunpack.c.l.b16 %v1474
        %v4040 = vunpack.c.h.b16 %v1474
        %v4041 = vunpack.c.l.b16 %v1475
        %v4042 = vunpack.c.h.b16 %v1475
        %v4043 = vunpack.c.l.b16 %v1476
        %v4044 = vunpack.c.h.b16 %v1476
        %v4045 = vunpack.c.l.b16 %v1477
        %v4046 = vunpack.c.h.b16 %v1477
        %v4047 = vunpack.c.l.b16 %v1478
        %v4048 = vunpack.c.h.b16 %v1478
        %v4049 = vunpack.c.l.b16 %v1479
        %v4050 = vunpack.c.h.b16 %v1479
        %v4051 = vunpack.c.l.b16 %v1480
        %v4052 = vunpack.c.h.b16 %v1480
        %v4053 = vunpack.c.l.b16 %v1481
        %v4054 = vunpack.c.h.b16 %v1481
        %v4055 = vunpack.c.l.b16 %v1482
        %v4056 = vunpack.c.h.b16 %v1482
        %v4057 = vunpack.c.l.b16 %v1483
        %v4058 = vunpack.c.h.b16 %v1483
        %v4059 = vunpack.c.l.b16 %v1484
        %v4060 = vunpack.c.h.b16 %v1484
        %v4061 = vunpack.c.l.b16 %v1485
        %v4062 = vunpack.c.h.b16 %v1485
        %v4063 = vunpack.c.l.b16 %v1486
        %v4064 = vunpack.c.h.b16 %v1486
        %v4065 = vunpack.c.l.b16 %v1487
        %v4066 = vunpack.c.h.b16 %v1487
        %v4067 = vunpack.c.l.b16 %v1488
        %v4068 = vunpack.c.h.b16 %v1488
        %v4069 = vunpack.c.l.b16 %v1489
        %v4070 = vunpack.c.h.b16 %v1489
        %v4071 = vunpack.c.l.b16 %v1490
        %v4072 = vunpack.c.h.b16 %v1490
        %v4073 = vunpack.c.l.b16 %v1491
        %v4074 = vunpack.c.h.b16 %v1491
        %v4075 = vunpack.c.l.b16 %v1492
        %v4076 = vunpack.c.h.b16 %v1492
        %v4077 = vunpack.c.l.b16 %v1493
        %v4078 = vunpack.c.h.b16 %v1493
        %v4079 = vunpack.c.l.b16 %v1494
        %v4080 = vunpack.c.h.b16 %v1494
        %v4081 = vunpack.c.l.b16 %v1495
        %v4082 = vunpack.c.h.b16 %v1495
        %v4083 = vunpack.c.l.b16 %v1496
        %v4084 = vunpack.c.h.b16 %v1496
        %v4085 = vunpack.c.l.b16 %v1497
        %v4086 = vunpack.c.h.b16 %v1497
        %v4087 = vunpack.c.l.b16 %v1498
        %v4088 = vunpack.c.h.b16 %v1498
        %v4089 = vunpack.c.l.b16 %v1499
        %v4090 = vunpack.c.h.b16 %v1499
        %v4091 = vunpack.c.l.b16 %v1500
        %v4092 = vunpack.c.h.b16 %v1500
        %v4093 = vpack.c.b16 %v2369, %v2365
        %v4094 = vpack.c.b16 %v2370, %v2366
        %v4095 = vpack.c.b16 %v2371, %v2367
        %v4096 = vpack.c.b16 %v2372, %v2368
        %v4097 = vpack.c.b16 %v2377, %v2373
        %v4098 = vpack.c.b16 %v2378, %v2374
        %v4099 = vpack.c.b16 %v2379, %v2375
        %v4100 = vpack.c.b16 %v2380, %v2376
        %v4101 = vpack.c.b16 %v2385, %v2381
        %v4102 = vpack.c.b16 %v2386, %v2382
        %v4103 = vpack.c.b16 %v2387, %v2383
        %v4104 = vpack.c.b16 %v2388, %v2384
        %v4105 = vpack.c.b16 %v2393, %v2389
        %v4106 = vpack.c.b16 %v2394, %v2390
        %v4107 = vpack.c.b16 %v2395, %v2391
        %v4108 = vpack.c.b16 %v2396, %v2392
        %v4109 = vpack.c.b16 %v2401, %v2397
        %v4110 = vpack.c.b16 %v2402, %v2398
        %v4111 = vpack.c.b16 %v2403, %v2399
        %v4112 = vpack.c.b16 %v2404, %v2400
        %v4113 = vpack.c.b16 %v2409, %v2405
        %v4114 = vpack.c.b16 %v2410, %v2406
        %v4115 = vpack.c.b16 %v2411, %v2407
        %v4116 = vpack.c.b16 %v2412, %v2408
        %v4117 = vpack.c.b16 %v2417, %v2413
        %v4118 = vpack.c.b16 %v2418, %v2414
        %v4119 = vpack.c.b16 %v2419, %v2415
        %v4120 = vpack.c.b16 %v2420, %v2416
        %v4121 = vpack.c.b16 %v2425, %v2421
        %v4122 = vpack.c.b16 %v2426, %v2422
        %v4123 = vpack.c.b16 %v2427, %v2423
        %v4124 = vpack.c.b16 %v2428, %v2424
        %v4125 = vpack.c.b16 %v2433, %v2429
        %v4126 = vpack.c.b16 %v2434, %v2430
        %v4127 = vpack.c.b16 %v2435, %v2431
        %v4128 = vpack.c.b16 %v2436, %v2432
        %v4129 = vpack.c.b16 %v2441, %v2437
        %v4130 = vpack.c.b16 %v2442, %v2438
        %v4131 = vpack.c.b16 %v2443, %v2439
        %v4132 = vpack.c.b16 %v2444, %v2440
        %v4133 = vpack.c.b16 %v2449, %v2445
        %v4134 = vpack.c.b16 %v2450, %v2446
        %v4135 = vpack.c.b16 %v2451, %v2447
        %v4136 = vpack.c.b16 %v2452, %v2448
        %v4137 = vpack.c.b16 %v2457, %v2453
        %v4138 = vpack.c.b16 %v2458, %v2454
        %v4139 = vpack.c.b16 %v2459, %v2455
        %v4140 = vpack.c.b16 %v2460, %v2456
        %v4141 = vpack.c.b16 %v2465, %v2461
        %v4142 = vpack.c.b16 %v2466, %v2462
        %v4143 = vpack.c.b16 %v2467, %v2463
        %v4144 = vpack.c.b16 %v2468, %v2464
        %v4145 = vpack.c.b16 %v2473, %v2469
        %v4146 = vpack.c.b16 %v2474, %v2470
        %v4147 = vpack.c.b16 %v2475, %v2471
        %v4148 = vpack.c.b16 %v2476, %v2472
        %v4149 = vpack.c.b16 %v2481, %v2477
        %v4150 = vpack.c.b16 %v2482, %v2478
        %v4151 = vpack.c.b16 %v2483, %v2479
        %v4152 = vpack.c.b16 %v2484, %v2480
        %v4153 = vpack.c.b16 %v2489, %v2485
        %v4154 = vpack.c.b16 %v2490, %v2486
        %v4155 = vpack.c.b16 %v2491, %v2487
        %v4156 = vpack.c.b16 %v2492, %v2488
        %v4157 = vpack.c.b16 %v2497, %v2493
        %v4158 = vpack.c.b16 %v2498, %v2494
        %v4159 = vpack.c.b16 %v2499, %v2495
        %v4160 = vpack.c.b16 %v2500, %v2496
        %v4161 = vpack.c.b16 %v2505, %v2501
        %v4162 = vpack.c.b16 %v2506, %v2502
        %v4163 = vpack.c.b16 %v2507, %v2503
        %v4164 = vpack.c.b16 %v2508, %v2504
        %v4165 = vpack.c.b16 %v2513, %v2509
        %v4166 = vpack.c.b16 %v2514, %v2510
        %v4167 = vpack.c.b16 %v2515, %v2511
        %v4168 = vpack.c.b16 %v2516, %v2512
        %v4169 = vpack.c.b16 %v2521, %v2517
        %v4170 = vpack.c.b16 %v2522, %v2518
        %v4171 = vpack.c.b16 %v2523, %v2519
        %v4172 = vpack.c.b16 %v2524, %v2520
        %v4173 = vpack.c.b16 %v2529, %v2525
        %v4174 = vpack.c.b16 %v2530, %v2526
        %v4175 = vpack.c.b16 %v2531, %v2527
        %v4176 = vpack.c.b16 %v2532, %v2528
        %v4177 = vpack.c.b16 %v2537, %v2533
        %v4178 = vpack.c.b16 %v2538, %v2534
        %v4179 = vpack.c.b16 %v2539, %v2535
        %v4180 = vpack.c.b16 %v2540, %v2536
        %v4181 = vpack.c.b16 %v2545, %v2541
        %v4182 = vpack.c.b16 %v2546, %v2542
        %v4183 = vpack.c.b16 %v2547, %v2543
        %v4184 = vpack.c.b16 %v2548, %v2544
        %v4185 = vpack.c.b16 %v2553, %v2549
        %v4186 = vpack.c.b16 %v2554, %v2550
        %v4187 = vpack.c.b16 %v2555, %v2551
        %v4188 = vpack.c.b16 %v2556, %v2552
        %v4189 = vpack.c.b16 %v2561, %v2557
        %v4190 = vpack.c.b16 %v2562, %v2558
        %v4191 = vpack.c.b16 %v2563, %v2559
        %v4192 = vpack.c.b16 %v2564, %v2560
        %v4193 = vpack.c.b16 %v2569, %v2565
        %v4194 = vpack.c.b16 %v2570, %v2566
        %v4195 = vpack.c.b16 %v2571, %v2567
        %v4196 = vpack.c.b16 %v2572, %v2568
        %v4197 = vpack.c.b16 %v2577, %v2573
        %v4198 = vpack.c.b16 %v2578, %v2574
        %v4199 = vpack.c.b16 %v2579, %v2575
        %v4200 = vpack.c.b16 %v2580, %v2576
        %v4201 = vpack.c.b16 %v2585, %v2581
        %v4202 = vpack.c.b16 %v2586, %v2582
        %v4203 = vpack.c.b16 %v2587, %v2583
        %v4204 = vpack.c.b16 %v2588, %v2584
        %v4205 = vpack.c.b16 %v2593, %v2589
        %v4206 = vpack.c.b16 %v2594, %v2590
        %v4207 = vpack.c.b16 %v2595, %v2591
        %v4208 = vpack.c.b16 %v2596, %v2592
        %v4209 = vpack.c.b16 %v2601, %v2597
        %v4210 = vpack.c.b16 %v2602, %v2598
        %v4211 = vpack.c.b16 %v2603, %v2599
        %v4212 = vpack.c.b16 %v2604, %v2600
        %v4213 = vpack.c.b16 %v2609, %v2605
        %v4214 = vpack.c.b16 %v2610, %v2606
        %v4215 = vpack.c.b16 %v2611, %v2607
        %v4216 = vpack.c.b16 %v2612, %v2608
        %v4217 = vpack.c.b16 %v2617, %v2613
        %v4218 = vpack.c.b16 %v2618, %v2614
        %v4219 = vpack.c.b16 %v2619, %v2615
        %v4220 = vpack.c.b16 %v2620, %v2616
        %v4221 = vpack.c.b16 %v2625, %v2621
        %v4222 = vpack.c.b16 %v2626, %v2622
        %v4223 = vpack.c.b16 %v2627, %v2623
        %v4224 = vpack.c.b16 %v2628, %v2624
        %v4225 = vpack.c.b16 %v2633, %v2629
        %v4226 = vpack.c.b16 %v2634, %v2630
        %v4227 = vpack.c.b16 %v2635, %v2631
        %v4228 = vpack.c.b16 %v2636, %v2632
        %v4229 = vpack.c.b16 %v2641, %v2637
        %v4230 = vpack.c.b16 %v2642, %v2638
        %v4231 = vpack.c.b16 %v2643, %v2639
        %v4232 = vpack.c.b16 %v2644, %v2640
        %v4233 = vpack.c.b16 %v2649, %v2645
        %v4234 = vpack.c.b16 %v2650, %v2646
        %v4235 = vpack.c.b16 %v2651, %v2647
        %v4236 = vpack.c.b16 %v2652, %v2648
        %v4237 = vpack.c.b16 %v2657, %v2653
        %v4238 = vpack.c.b16 %v2658, %v2654
        %v4239 = vpack.c.b16 %v2659, %v2655
        %v4240 = vpack.c.b16 %v2660, %v2656
        %v4241 = vpack.c.b16 %v2665, %v2661
        %v4242 = vpack.c.b16 %v2666, %v2662
        %v4243 = vpack.c.b16 %v2667, %v2663
        %v4244 = vpack.c.b16 %v2668, %v2664
        %v4245 = vpack.c.b16 %v2673, %v2669
        %v4246 = vpack.c.b16 %v2674, %v2670
        %v4247 = vpack.c.b16 %v2675, %v2671
        %v4248 = vpack.c.b16 %v2676, %v2672
        %v4249 = vpack.c.b16 %v2681, %v2677
        %v4250 = vpack.c.b16 %v2682, %v2678
        %v4251 = vpack.c.b16 %v2683, %v2679
        %v4252 = vpack.c.b16 %v2684, %v2680
        %v4253 = vpack.c.b16 %v2689, %v2685
        %v4254 = vpack.c.b16 %v2690, %v2686
        %v4255 = vpack.c.b16 %v2691, %v2687
        %v4256 = vpack.c.b16 %v2692, %v2688
        %v4257 = vpack.c.b16 %v2697, %v2693
        %v4258 = vpack.c.b16 %v2698, %v2694
        %v4259 = vpack.c.b16 %v2699, %v2695
        %v4260 = vpack.c.b16 %v2700, %v2696
        %v4261 = vpack.c.b16 %v2705, %v2701
        %v4262 = vpack.c.b16 %v2706, %v2702
        %v4263 = vpack.c.b16 %v2707, %v2703
        %v4264 = vpack.c.b16 %v2708, %v2704
        %v4265 = vpack.c.b16 %v2713, %v2709
        %v4266 = vpack.c.b16 %v2714, %v2710
        %v4267 = vpack.c.b16 %v2715, %v2711
        %v4268 = vpack.c.b16 %v2716, %v2712
        %v4269 = vpack.c.b16 %v2721, %v2717
        %v4270 = vpack.c.b16 %v2722, %v2718
        %v4271 = vpack.c.b16 %v2723, %v2719
        %v4272 = vpack.c.b16 %v2724, %v2720
        %v4273 = vpack.c.b16 %v2729, %v2725
        %v4274 = vpack.c.b16 %v2730, %v2726
        %v4275 = vpack.c.b16 %v2731, %v2727
        %v4276 = vpack.c.b16 %v2732, %v2728
        %v4277 = vpack.c.b16 %v2737, %v2733
        %v4278 = vpack.c.b16 %v2738, %v2734
        %v4279 = vpack.c.b16 %v2739, %v2735
        %v4280 = vpack.c.b16 %v2740, %v2736
        %v4281 = vpack.c.b16 %v2745, %v2741
        %v4282 = vpack.c.b16 %v2746, %v2742
        %v4283 = vpack.c.b16 %v2747, %v2743
        %v4284 = vpack.c.b16 %v2748, %v2744
        %v4285 = vpack.c.b16 %v2753, %v2749
        %v4286 = vpack.c.b16 %v2754, %v2750
        %v4287 = vpack.c.b16 %v2755, %v2751
        %v4288 = vpack.c.b16 %v2756, %v2752
        %v4289 = vpack.c.b16 %v2761, %v2757
        %v4290 = vpack.c.b16 %v2762, %v2758
        %v4291 = vpack.c.b16 %v2763, %v2759
        %v4292 = vpack.c.b16 %v2764, %v2760
        %v4293 = vpack.c.b16 %v2769, %v2765
        %v4294 = vpack.c.b16 %v2770, %v2766
        %v4295 = vpack.c.b16 %v2771, %v2767
        %v4296 = vpack.c.b16 %v2772, %v2768
        %v4297 = vpack.c.b16 %v2777, %v2773
        %v4298 = vpack.c.b16 %v2778, %v2774
        %v4299 = vpack.c.b16 %v2779, %v2775
        %v4300 = vpack.c.b16 %v2780, %v2776
        %v4301 = vpack.c.b16 %v2785, %v2781
        %v4302 = vpack.c.b16 %v2786, %v2782
        %v4303 = vpack.c.b16 %v2787, %v2783
        %v4304 = vpack.c.b16 %v2788, %v2784
        %v4305 = vpack.c.b16 %v2793, %v2789
        %v4306 = vpack.c.b16 %v2794, %v2790
        %v4307 = vpack.c.b16 %v2795, %v2791
        %v4308 = vpack.c.b16 %v2796, %v2792
        %v4309 = vpack.c.b16 %v2801, %v2797
        %v4310 = vpack.c.b16 %v2802, %v2798
        %v4311 = vpack.c.b16 %v2803, %v2799
        %v4312 = vpack.c.b16 %v2804, %v2800
        %v4313 = vpack.c.b16 %v2809, %v2805
        %v4314 = vpack.c.b16 %v2810, %v2806
        %v4315 = vpack.c.b16 %v2811, %v2807
        %v4316 = vpack.c.b16 %v2812, %v2808
        %v4317 = vpack.c.b16 %v2817, %v2813
        %v4318 = vpack.c.b16 %v2818, %v2814
        %v4319 = vpack.c.b16 %v2819, %v2815
        %v4320 = vpack.c.b16 %v2820, %v2816
        %v4321 = vpack.c.b16 %v2825, %v2821
        %v4322 = vpack.c.b16 %v2826, %v2822
        %v4323 = vpack.c.b16 %v2827, %v2823
        %v4324 = vpack.c.b16 %v2828, %v2824
        %v4325 = vpack.c.b16 %v2833, %v2829
        %v4326 = vpack.c.b16 %v2834, %v2830
        %v4327 = vpack.c.b16 %v2835, %v2831
        %v4328 = vpack.c.b16 %v2836, %v2832
        %v4329 = vpack.c.b16 %v2841, %v2837
        %v4330 = vpack.c.b16 %v2842, %v2838
        %v4331 = vpack.c.b16 %v2843, %v2839
        %v4332 = vpack.c.b16 %v2844, %v2840
        %v4333 = vpack.c.b16 %v2849, %v2845
        %v4334 = vpack.c.b16 %v2850, %v2846
        %v4335 = vpack.c.b16 %v2851, %v2847
        %v4336 = vpack.c.b16 %v2852, %v2848
        %v4337 = vpack.c.b16 %v2857, %v2853
        %v4338 = vpack.c.b16 %v2858, %v2854
        %v4339 = vpack.c.b16 %v2859, %v2855
        %v4340 = vpack.c.b16 %v2860, %v2856
        %v4341 = vpack.c.b16 %v2865, %v2861
        %v4342 = vpack.c.b16 %v2866, %v2862
        %v4343 = vpack.c.b16 %v2867, %v2863
        %v4344 = vpack.c.b16 %v2868, %v2864
        %v4345 = vpack.c.b16 %v2873, %v2869
        %v4346 = vpack.c.b16 %v2874, %v2870
        %v4347 = vpack.c.b16 %v2875, %v2871
        %v4348 = vpack.c.b16 %v2876, %v2872
        %v4349 = vpack.c.b16 %v2881, %v2877
        %v4350 = vpack.c.b16 %v2882, %v2878
        %v4351 = vpack.c.b16 %v2883, %v2879
        %v4352 = vpack.c.b16 %v2884, %v2880
        %v4353 = vpack.c.b16 %v2889, %v2885
        %v4354 = vpack.c.b16 %v2890, %v2886
        %v4355 = vpack.c.b16 %v2891, %v2887
        %v4356 = vpack.c.b16 %v2892, %v2888
        %v4357 = vpack.c.b16 %v2897, %v2893
        %v4358 = vpack.c.b16 %v2898, %v2894
        %v4359 = vpack.c.b16 %v2899, %v2895
        %v4360 = vpack.c.b16 %v2900, %v2896
        %v4361 = vpack.c.b16 %v2905, %v2901
        %v4362 = vpack.c.b16 %v2906, %v2902
        %v4363 = vpack.c.b16 %v2907, %v2903
        %v4364 = vpack.c.b16 %v2908, %v2904
        %v4365 = vpack.c.b16 %v2913, %v2909
        %v4366 = vpack.c.b16 %v2914, %v2910
        %v4367 = vpack.c.b16 %v2915, %v2911
        %v4368 = vpack.c.b16 %v2916, %v2912
        %v4369 = vpack.c.b16 %v2921, %v2917
        %v4370 = vpack.c.b16 %v2922, %v2918
        %v4371 = vpack.c.b16 %v2923, %v2919
        %v4372 = vpack.c.b16 %v2924, %v2920
        %v4373 = vpack.c.b16 %v2929, %v2925
        %v4374 = vpack.c.b16 %v2930, %v2926
        %v4375 = vpack.c.b16 %v2931, %v2927
        %v4376 = vpack.c.b16 %v2932, %v2928
        %v4377 = vpack.c.b16 %v2937, %v2933
        %v4378 = vpack.c.b16 %v2938, %v2934
        %v4379 = vpack.c.b16 %v2939, %v2935
        %v4380 = vpack.c.b16 %v2940, %v2936
        %v4381 = vpack.c.b16 %v2945, %v2941
        %v4382 = vpack.c.b16 %v2946, %v2942
        %v4383 = vpack.c.b16 %v2947, %v2943
        %v4384 = vpack.c.b16 %v2948, %v2944
        %v4385 = vpack.c.b16 %v2953, %v2949
        %v4386 = vpack.c.b16 %v2954, %v2950
        %v4387 = vpack.c.b16 %v2955, %v2951
        %v4388 = vpack.c.b16 %v2956, %v2952
        %v4389 = vpack.c.b16 %v2961, %v2957
        %v4390 = vpack.c.b16 %v2962, %v2958
        %v4391 = vpack.c.b16 %v2963, %v2959
        %v4392 = vpack.c.b16 %v2964, %v2960
        %v4393 = vpack.c.b16 %v2969, %v2965
        %v4394 = vpack.c.b16 %v2970, %v2966
        %v4395 = vpack.c.b16 %v2971, %v2967
        %v4396 = vpack.c.b16 %v2972, %v2968
        %v4397 = vpack.c.b16 %v2977, %v2973
        %v4398 = vpack.c.b16 %v2978, %v2974
        %v4399 = vpack.c.b16 %v2979, %v2975
        %v4400 = vpack.c.b16 %v2980, %v2976
        %v4401 = vpack.c.b16 %v2985, %v2981
        %v4402 = vpack.c.b16 %v2986, %v2982
        %v4403 = vpack.c.b16 %v2987, %v2983
        %v4404 = vpack.c.b16 %v2988, %v2984
        %v4405 = vpack.c.b16 %v2993, %v2989
        %v4406 = vpack.c.b16 %v2994, %v2990
        %v4407 = vpack.c.b16 %v2995, %v2991
        %v4408 = vpack.c.b16 %v2996, %v2992
        %v4409 = vpack.c.b16 %v3001, %v2997
        %v4410 = vpack.c.b16 %v3002, %v2998
        %v4411 = vpack.c.b16 %v3003, %v2999
        %v4412 = vpack.c.b16 %v3004, %v3000
        %v4413 = vpack.c.b16 %v3009, %v3005
        %v4414 = vpack.c.b16 %v3010, %v3006
        %v4415 = vpack.c.b16 %v3011, %v3007
        %v4416 = vpack.c.b16 %v3012, %v3008
        %v4417 = vpack.c.b16 %v3017, %v3013
        %v4418 = vpack.c.b16 %v3018, %v3014
        %v4419 = vpack.c.b16 %v3019, %v3015
        %v4420 = vpack.c.b16 %v3020, %v3016
        %v4421 = vpack.c.b16 %v3025, %v3021
        %v4422 = vpack.c.b16 %v3026, %v3022
        %v4423 = vpack.c.b16 %v3027, %v3023
        %v4424 = vpack.c.b16 %v3028, %v3024
        %v4425 = vpack.c.b16 %v3033, %v3029
        %v4426 = vpack.c.b16 %v3034, %v3030
        %v4427 = vpack.c.b16 %v3035, %v3031
        %v4428 = vpack.c.b16 %v3036, %v3032
        %v4429 = vpack.c.b16 %v3041, %v3037
        %v4430 = vpack.c.b16 %v3042, %v3038
        %v4431 = vpack.c.b16 %v3043, %v3039
        %v4432 = vpack.c.b16 %v3044, %v3040
        %v4433 = vpack.c.b16 %v3049, %v3045
        %v4434 = vpack.c.b16 %v3050, %v3046
        %v4435 = vpack.c.b16 %v3051, %v3047
        %v4436 = vpack.c.b16 %v3052, %v3048
        %v4437 = vpack.c.b16 %v3057, %v3053
        %v4438 = vpack.c.b16 %v3058, %v3054
        %v4439 = vpack.c.b16 %v3059, %v3055
        %v4440 = vpack.c.b16 %v3060, %v3056
        %v4441 = vpack.c.b16 %v3065, %v3061
        %v4442 = vpack.c.b16 %v3066, %v3062
        %v4443 = vpack.c.b16 %v3067, %v3063
        %v4444 = vpack.c.b16 %v3068, %v3064
        %v4445 = vpack.c.b16 %v3073, %v3069
        %v4446 = vpack.c.b16 %v3074, %v3070
        %v4447 = vpack.c.b16 %v3075, %v3071
        %v4448 = vpack.c.b16 %v3076, %v3072
        %v4449 = vpack.c.b16 %v3081, %v3077
        %v4450 = vpack.c.b16 %v3082, %v3078
        %v4451 = vpack.c.b16 %v3083, %v3079
        %v4452 = vpack.c.b16 %v3084, %v3080
        %v4453 = vpack.c.b16 %v3089, %v3085
        %v4454 = vpack.c.b16 %v3090, %v3086
        %v4455 = vpack.c.b16 %v3091, %v3087
        %v4456 = vpack.c.b16 %v3092, %v3088
        %v4457 = vpack.c.b16 %v3097, %v3093
        %v4458 = vpack.c.b16 %v3098, %v3094
        %v4459 = vpack.c.b16 %v3099, %v3095
        %v4460 = vpack.c.b16 %v3100, %v3096
        %v4461 = vpack.c.b16 %v3105, %v3101
        %v4462 = vpack.c.b16 %v3106, %v3102
        %v4463 = vpack.c.b16 %v3107, %v3103
        %v4464 = vpack.c.b16 %v3108, %v3104
        %v4465 = vpack.c.b16 %v3113, %v3109
        %v4466 = vpack.c.b16 %v3114, %v3110
        %v4467 = vpack.c.b16 %v3115, %v3111
        %v4468 = vpack.c.b16 %v3116, %v3112
        %v4469 = vpack.c.b16 %v3121, %v3117
        %v4470 = vpack.c.b16 %v3122, %v3118
        %v4471 = vpack.c.b16 %v3123, %v3119
        %v4472 = vpack.c.b16 %v3124, %v3120
        %v4473 = vpack.c.b16 %v3129, %v3125
        %v4474 = vpack.c.b16 %v3130, %v3126
        %v4475 = vpack.c.b16 %v3131, %v3127
        %v4476 = vpack.c.b16 %v3132, %v3128
        %v4477 = vpack.c.b16 %v3137, %v3133
        %v4478 = vpack.c.b16 %v3138, %v3134
        %v4479 = vpack.c.b16 %v3139, %v3135
        %v4480 = vpack.c.b16 %v3140, %v3136
        %v4481 = vpack.c.b16 %v3145, %v3141
        %v4482 = vpack.c.b16 %v3146, %v3142
        %v4483 = vpack.c.b16 %v3147, %v3143
        %v4484 = vpack.c.b16 %v3148, %v3144
        %v4485 = vpack.c.b16 %v3153, %v3149
        %v4486 = vpack.c.b16 %v3154, %v3150
        %v4487 = vpack.c.b16 %v3155, %v3151
        %v4488 = vpack.c.b16 %v3156, %v3152
        %v4489 = vpack.c.b16 %v3161, %v3157
        %v4490 = vpack.c.b16 %v3162, %v3158
        %v4491 = vpack.c.b16 %v3163, %v3159
        %v4492 = vpack.c.b16 %v3164, %v3160
        %v4493 = vpack.c.b16 %v3169, %v3165
        %v4494 = vpack.c.b16 %v3170, %v3166
        %v4495 = vpack.c.b16 %v3171, %v3167
        %v4496 = vpack.c.b16 %v3172, %v3168
        %v4497 = vpack.c.b16 %v3177, %v3173
        %v4498 = vpack.c.b16 %v3178, %v3174
        %v4499 = vpack.c.b16 %v3179, %v3175
        %v4500 = vpack.c.b16 %v3180, %v3176
        %v4501 = vpack.c.b16 %v3185, %v3181
        %v4502 = vpack.c.b16 %v3186, %v3182
        %v4503 = vpack.c.b16 %v3187, %v3183
        %v4504 = vpack.c.b16 %v3188, %v3184
        %v4505 = vpack.c.b16 %v3193, %v3189
        %v4506 = vpack.c.b16 %v3194, %v3190
        %v4507 = vpack.c.b16 %v3195, %v3191
        %v4508 = vpack.c.b16 %v3196, %v3192
        %v4509 = vpack.c.b16 %v3201, %v3197
        %v4510 = vpack.c.b16 %v3202, %v3198
        %v4511 = vpack.c.b16 %v3203, %v3199
        %v4512 = vpack.c.b16 %v3204, %v3200
        %v4513 = vpack.c.b16 %v3209, %v3205
        %v4514 = vpack.c.b16 %v3210, %v3206
        %v4515 = vpack.c.b16 %v3211, %v3207
        %v4516 = vpack.c.b16 %v3212, %v3208
        %v4517 = vpack.c.b16 %v3217, %v3213
        %v4518 = vpack.c.b16 %v3218, %v3214
        %v4519 = vpack.c.b16 %v3219, %v3215
        %v4520 = vpack.c.b16 %v3220, %v3216
        %v4521 = vpack.c.b16 %v3225, %v3221
        %v4522 = vpack.c.b16 %v3226, %v3222
        %v4523 = vpack.c.b16 %v3227, %v3223
        %v4524 = vpack.c.b16 %v3228, %v3224
        %v4525 = vpack.c.b16 %v3233, %v3229
        %v4526 = vpack.c.b16 %v3234, %v3230
        %v4527 = vpack.c.b16 %v3235, %v3231
        %v4528 = vpack.c.b16 %v3236, %v3232
        %v4529 = vpack.c.b16 %v3241, %v3237
        %v4530 = vpack.c.b16 %v3242, %v3238
        %v4531 = vpack.c.b16 %v3243, %v3239
        %v4532 = vpack.c.b16 %v3244, %v3240
        %v4533 = vpack.c.b16 %v3249, %v3245
        %v4534 = vpack.c.b16 %v3250, %v3246
        %v4535 = vpack.c.b16 %v3251, %v3247
        %v4536 = vpack.c.b16 %v3252, %v3248
        %v4537 = vpack.c.b16 %v3257, %v3253
        %v4538 = vpack.c.b16 %v3258, %v3254
        %v4539 = vpack.c.b16 %v3259, %v3255
        %v4540 = vpack.c.b16 %v3260, %v3256
        %v4541 = vpack.c.b16 %v3265, %v3261
        %v4542 = vpack.c.b16 %v3266, %v3262
        %v4543 = vpack.c.b16 %v3267, %v3263
        %v4544 = vpack.c.b16 %v3268, %v3264
        %v4545 = vpack.c.b16 %v3273, %v3269
        %v4546 = vpack.c.b16 %v3274, %v3270
        %v4547 = vpack.c.b16 %v3275, %v3271
        %v4548 = vpack.c.b16 %v3276, %v3272
        %v4549 = vpack.c.b16 %v3281, %v3277
        %v4550 = vpack.c.b16 %v3282, %v3278
        %v4551 = vpack.c.b16 %v3283, %v3279
        %v4552 = vpack.c.b16 %v3284, %v3280
        %v4553 = vpack.c.b16 %v3289, %v3285
        %v4554 = vpack.c.b16 %v3290, %v3286
        %v4555 = vpack.c.b16 %v3291, %v3287
        %v4556 = vpack.c.b16 %v3292, %v3288
        %v4557 = vpack.c.b16 %v3297, %v3293
        %v4558 = vpack.c.b16 %v3298, %v3294
        %v4559 = vpack.c.b16 %v3299, %v3295
        %v4560 = vpack.c.b16 %v3300, %v3296
        %v4561 = vpack.c.b16 %v3305, %v3301
        %v4562 = vpack.c.b16 %v3306, %v3302
        %v4563 = vpack.c.b16 %v3307, %v3303
        %v4564 = vpack.c.b16 %v3308, %v3304
        %v4565 = vpack.c.b16 %v3313, %v3309
        %v4566 = vpack.c.b16 %v3314, %v3310
        %v4567 = vpack.c.b16 %v3315, %v3311
        %v4568 = vpack.c.b16 %v3316, %v3312
        %v4569 = vpack.c.b16 %v3321, %v3317
        %v4570 = vpack.c.b16 %v3322, %v3318
        %v4571 = vpack.c.b16 %v3323, %v3319
        %v4572 = vpack.c.b16 %v3324, %v3320
        %v4573 = vpack.c.b16 %v3329, %v3325
        %v4574 = vpack.c.b16 %v3330, %v3326
        %v4575 = vpack.c.b16 %v3331, %v3327
        %v4576 = vpack.c.b16 %v3332, %v3328
        %v4577 = vpack.c.b16 %v3337, %v3333
        %v4578 = vpack.c.b16 %v3338, %v3334
        %v4579 = vpack.c.b16 %v3339, %v3335
        %v4580 = vpack.c.b16 %v3340, %v3336
        %v4581 = vpack.c.b16 %v3345, %v3341
        %v4582 = vpack.c.b16 %v3346, %v3342
        %v4583 = vpack.c.b16 %v3347, %v3343
        %v4584 = vpack.c.b16 %v3348, %v3344
        %v4585 = vpack.c.b16 %v3353, %v3349
        %v4586 = vpack.c.b16 %v3354, %v3350
        %v4587 = vpack.c.b16 %v3355, %v3351
        %v4588 = vpack.c.b16 %v3356, %v3352
        %v4589 = vpack.c.b16 %v3361, %v3357
        %v4590 = vpack.c.b16 %v3362, %v3358
        %v4591 = vpack.c.b16 %v3363, %v3359
        %v4592 = vpack.c.b16 %v3364, %v3360
        %v4593 = vpack.c.b16 %v3369, %v3365
        %v4594 = vpack.c.b16 %v3370, %v3366
        %v4595 = vpack.c.b16 %v3371, %v3367
        %v4596 = vpack.c.b16 %v3372, %v3368
        %v4597 = vpack.c.b16 %v3377, %v3373
        %v4598 = vpack.c.b16 %v3378, %v3374
        %v4599 = vpack.c.b16 %v3379, %v3375
        %v4600 = vpack.c.b16 %v3380, %v3376
        %v4601 = vpack.c.b16 %v3385, %v3381
        %v4602 = vpack.c.b16 %v3386, %v3382
        %v4603 = vpack.c.b16 %v3387, %v3383
        %v4604 = vpack.c.b16 %v3388, %v3384
        %v4605 = vpack.c.b16 %v3393, %v3389
        %v4606 = vpack.c.b16 %v3394, %v3390
        %v4607 = vpack.c.b16 %v3395, %v3391
        %v4608 = vpack.c.b16 %v3396, %v3392
        %v4609 = vpack.c.b16 %v3401, %v3397
        %v4610 = vpack.c.b16 %v3402, %v3398
        %v4611 = vpack.c.b16 %v3403, %v3399
        %v4612 = vpack.c.b16 %v3404, %v3400
        %v4613 = vpack.c.b16 %v3409, %v3405
        %v4614 = vpack.c.b16 %v3410, %v3406
        %v4615 = vpack.c.b16 %v3411, %v3407
        %v4616 = vpack.c.b16 %v3412, %v3408
        %v4617 = vpack.c.b16 %v3417, %v3413
        %v4618 = vpack.c.b16 %v3418, %v3414
        %v4619 = vpack.c.b16 %v3419, %v3415
        %v4620 = vpack.c.b16 %v3420, %v3416
        %v4621 = vpack.c.b16 %v3425, %v3421
        %v4622 = vpack.c.b16 %v3426, %v3422
        %v4623 = vpack.c.b16 %v3427, %v3423
        %v4624 = vpack.c.b16 %v3428, %v3424
        %v4625 = vpack.c.b16 %v3433, %v3429
        %v4626 = vpack.c.b16 %v3434, %v3430
        %v4627 = vpack.c.b16 %v3435, %v3431
        %v4628 = vpack.c.b16 %v3436, %v3432
        %v4629 = vpack.c.b16 %v3441, %v3437
        %v4630 = vpack.c.b16 %v3442, %v3438
        %v4631 = vpack.c.b16 %v3443, %v3439
        %v4632 = vpack.c.b16 %v3444, %v3440
        %v4633 = vpack.c.b16 %v3449, %v3445
        %v4634 = vpack.c.b16 %v3450, %v3446
        %v4635 = vpack.c.b16 %v3451, %v3447
        %v4636 = vpack.c.b16 %v3452, %v3448
        %v4637 = vpack.c.b16 %v3457, %v3453
        %v4638 = vpack.c.b16 %v3458, %v3454
        %v4639 = vpack.c.b16 %v3459, %v3455
        %v4640 = vpack.c.b16 %v3460, %v3456
        %v4641 = vpack.c.b16 %v3465, %v3461
        %v4642 = vpack.c.b16 %v3466, %v3462
        %v4643 = vpack.c.b16 %v3467, %v3463
        %v4644 = vpack.c.b16 %v3468, %v3464
        %v4645 = vpack.c.b16 %v3473, %v3469
        %v4646 = vpack.c.b16 %v3474, %v3470
        %v4647 = vpack.c.b16 %v3475, %v3471
        %v4648 = vpack.c.b16 %v3476, %v3472
        %v4649 = vpack.c.b16 %v3481, %v3477
        %v4650 = vpack.c.b16 %v3482, %v3478
        %v4651 = vpack.c.b16 %v3483, %v3479
        %v4652 = vpack.c.b16 %v3484, %v3480
        %v4653 = vpack.c.b16 %v3489, %v3485
        %v4654 = vpack.c.b16 %v3490, %v3486
        %v4655 = vpack.c.b16 %v3491, %v3487
        %v4656 = vpack.c.b16 %v3492, %v3488
        %v4657 = vpack.c.b16 %v3497, %v3493
        %v4658 = vpack.c.b16 %v3498, %v3494
        %v4659 = vpack.c.b16 %v3499, %v3495
        %v4660 = vpack.c.b16 %v3500, %v3496
        %v4661 = vpack.c.b16 %v3505, %v3501
        %v4662 = vpack.c.b16 %v3506, %v3502
        %v4663 = vpack.c.b16 %v3507, %v3503
        %v4664 = vpack.c.b16 %v3508, %v3504
        %v4665 = vpack.c.b16 %v3513, %v3509
        %v4666 = vpack.c.b16 %v3514, %v3510
        %v4667 = vpack.c.b16 %v3515, %v3511
        %v4668 = vpack.c.b16 %v3516, %v3512
        %v4669 = vpack.c.b16 %v3521, %v3517
        %v4670 = vpack.c.b16 %v3522, %v3518
        %v4671 = vpack.c.b16 %v3523, %v3519
        %v4672 = vpack.c.b16 %v3524, %v3520
        %v4673 = vpack.c.b16 %v3529, %v3525
        %v4674 = vpack.c.b16 %v3530, %v3526
        %v4675 = vpack.c.b16 %v3531, %v3527
        %v4676 = vpack.c.b16 %v3532, %v3528
        %v4677 = vpack.c.b16 %v3537, %v3533
        %v4678 = vpack.c.b16 %v3538, %v3534
        %v4679 = vpack.c.b16 %v3539, %v3535
        %v4680 = vpack.c.b16 %v3540, %v3536
        %v4681 = vpack.c.b16 %v3545, %v3541
        %v4682 = vpack.c.b16 %v3546, %v3542
        %v4683 = vpack.c.b16 %v3547, %v3543
        %v4684 = vpack.c.b16 %v3548, %v3544
        %v4685 = vpack.c.b16 %v3553, %v3549
        %v4686 = vpack.c.b16 %v3554, %v3550
        %v4687 = vpack.c.b16 %v3555, %v3551
        %v4688 = vpack.c.b16 %v3556, %v3552
        %v4689 = vpack.c.b16 %v3561, %v3557
        %v4690 = vpack.c.b16 %v3562, %v3558
        %v4691 = vpack.c.b16 %v3563, %v3559
        %v4692 = vpack.c.b16 %v3564, %v3560
        %v4693 = vpack.c.b16 %v3569, %v3565
        %v4694 = vpack.c.b16 %v3570, %v3566
        %v4695 = vpack.c.b16 %v3571, %v3567
        %v4696 = vpack.c.b16 %v3572, %v3568
        %v4697 = vpack.c.b16 %v3577, %v3573
        %v4698 = vpack.c.b16 %v3578, %v3574
        %v4699 = vpack.c.b16 %v3579, %v3575
        %v4700 = vpack.c.b16 %v3580, %v3576
        %v4701 = vpack.c.b16 %v3585, %v3581
        %v4702 = vpack.c.b16 %v3586, %v3582
        %v4703 = vpack.c.b16 %v3587, %v3583
        %v4704 = vpack.c.b16 %v3588, %v3584
        %v4705 = vpack.c.b16 %v3593, %v3589
        %v4706 = vpack.c.b16 %v3594, %v3590
        %v4707 = vpack.c.b16 %v3595, %v3591
        %v4708 = vpack.c.b16 %v3596, %v3592
        %v4709 = vpack.c.b16 %v3601, %v3597
        %v4710 = vpack.c.b16 %v3602, %v3598
        %v4711 = vpack.c.b16 %v3603, %v3599
        %v4712 = vpack.c.b16 %v3604, %v3600
        %v4713 = vpack.c.b16 %v3609, %v3605
        %v4714 = vpack.c.b16 %v3610, %v3606
        %v4715 = vpack.c.b16 %v3611, %v3607
        %v4716 = vpack.c.b16 %v3612, %v3608
        %v4717 = vpack.c.b16 %v3617, %v3613
        %v4718 = vpack.c.b16 %v3618, %v3614
        %v4719 = vpack.c.b16 %v3619, %v3615
        %v4720 = vpack.c.b16 %v3620, %v3616
        %v4721 = vpack.c.b16 %v3625, %v3621
        %v4722 = vpack.c.b16 %v3626, %v3622
        %v4723 = vpack.c.b16 %v3627, %v3623
        %v4724 = vpack.c.b16 %v3628, %v3624
        %v4725 = vpack.c.b16 %v3633, %v3629
        %v4726 = vpack.c.b16 %v3634, %v3630
        %v4727 = vpack.c.b16 %v3635, %v3631
        %v4728 = vpack.c.b16 %v3636, %v3632
        %v4729 = vpack.c.b16 %v3641, %v3637
        %v4730 = vpack.c.b16 %v3642, %v3638
        %v4731 = vpack.c.b16 %v3643, %v3639
        %v4732 = vpack.c.b16 %v3644, %v3640
        %v4733 = vpack.c.b16 %v3649, %v3645
        %v4734 = vpack.c.b16 %v3650, %v3646
        %v4735 = vpack.c.b16 %v3651, %v3647
        %v4736 = vpack.c.b16 %v3652, %v3648
        %v4737 = vpack.c.b16 %v3657, %v3653
        %v4738 = vpack.c.b16 %v3658, %v3654
        %v4739 = vpack.c.b16 %v3659, %v3655
        %v4740 = vpack.c.b16 %v3660, %v3656
        %v4741 = vpack.c.b16 %v3665, %v3661
        %v4742 = vpack.c.b16 %v3666, %v3662
        %v4743 = vpack.c.b16 %v3667, %v3663
        %v4744 = vpack.c.b16 %v3668, %v3664
        %v4745 = vpack.c.b16 %v3673, %v3669
        %v4746 = vpack.c.b16 %v3674, %v3670
        %v4747 = vpack.c.b16 %v3675, %v3671
        %v4748 = vpack.c.b16 %v3676, %v3672
        %v4749 = vpack.c.b16 %v3681, %v3677
        %v4750 = vpack.c.b16 %v3682, %v3678
        %v4751 = vpack.c.b16 %v3683, %v3679
        %v4752 = vpack.c.b16 %v3684, %v3680
        %v4753 = vpack.c.b16 %v3689, %v3685
        %v4754 = vpack.c.b16 %v3690, %v3686
        %v4755 = vpack.c.b16 %v3691, %v3687
        %v4756 = vpack.c.b16 %v3692, %v3688
        %v4757 = vpack.c.b16 %v3697, %v3693
        %v4758 = vpack.c.b16 %v3698, %v3694
        %v4759 = vpack.c.b16 %v3699, %v3695
        %v4760 = vpack.c.b16 %v3700, %v3696
        %v4761 = vpack.c.b16 %v3705, %v3701
        %v4762 = vpack.c.b16 %v3706, %v3702
        %v4763 = vpack.c.b16 %v3707, %v3703
        %v4764 = vpack.c.b16 %v3708, %v3704
        %v4765 = vpack.c.b16 %v3713, %v3709
        %v4766 = vpack.c.b16 %v3714, %v3710
        %v4767 = vpack.c.b16 %v3715, %v3711
        %v4768 = vpack.c.b16 %v3716, %v3712
        %v4769 = vpack.c.b16 %v3721, %v3717
        %v4770 = vpack.c.b16 %v3722, %v3718
        %v4771 = vpack.c.b16 %v3723, %v3719
        %v4772 = vpack.c.b16 %v3724, %v3720
        %v4773 = vpack.c.b16 %v3729, %v3725
        %v4774 = vpack.c.b16 %v3730, %v3726
        %v4775 = vpack.c.b16 %v3731, %v3727
        %v4776 = vpack.c.b16 %v3732, %v3728
        %v4777 = vpack.c.b16 %v3737, %v3733
        %v4778 = vpack.c.b16 %v3738, %v3734
        %v4779 = vpack.c.b16 %v3739, %v3735
        %v4780 = vpack.c.b16 %v3740, %v3736
        %v4781 = vpack.c.b16 %v3745, %v3741
        %v4782 = vpack.c.b16 %v3746, %v3742
        %v4783 = vpack.c.b16 %v3747, %v3743
        %v4784 = vpack.c.b16 %v3748, %v3744
        %v4785 = vpack.c.b16 %v3753, %v3749
        %v4786 = vpack.c.b16 %v3754, %v3750
        %v4787 = vpack.c.b16 %v3755, %v3751
        %v4788 = vpack.c.b16 %v3756, %v3752
        %v4789 = vpack.c.b16 %v3761, %v3757
        %v4790 = vpack.c.b16 %v3762, %v3758
        %v4791 = vpack.c.b16 %v3763, %v3759
        %v4792 = vpack.c.b16 %v3764, %v3760
        %v4793 = vpack.c.b16 %v3769, %v3765
        %v4794 = vpack.c.b16 %v3770, %v3766
        %v4795 = vpack.c.b16 %v3771, %v3767
        %v4796 = vpack.c.b16 %v3772, %v3768
        %v4797 = vpack.c.b16 %v3777, %v3773
        %v4798 = vpack.c.b16 %v3778, %v3774
        %v4799 = vpack.c.b16 %v3779, %v3775
        %v4800 = vpack.c.b16 %v3780, %v3776
        %v4801 = vpack.c.b16 %v3785, %v3781
        %v4802 = vpack.c.b16 %v3786, %v3782
        %v4803 = vpack.c.b16 %v3787, %v3783
        %v4804 = vpack.c.b16 %v3788, %v3784
        %v4805 = vpack.c.b16 %v3793, %v3789
        %v4806 = vpack.c.b16 %v3794, %v3790
        %v4807 = vpack.c.b16 %v3795, %v3791
        %v4808 = vpack.c.b16 %v3796, %v3792
        %v4809 = vpack.c.b16 %v3801, %v3797
        %v4810 = vpack.c.b16 %v3802, %v3798
        %v4811 = vpack.c.b16 %v3803, %v3799
        %v4812 = vpack.c.b16 %v3804, %v3800
        %v4813 = vpack.c.b16 %v3809, %v3805
        %v4814 = vpack.c.b16 %v3810, %v3806
        %v4815 = vpack.c.b16 %v3811, %v3807
        %v4816 = vpack.c.b16 %v3812, %v3808
        %v4817 = vpack.c.b16 %v3817, %v3813
        %v4818 = vpack.c.b16 %v3818, %v3814
        %v4819 = vpack.c.b16 %v3819, %v3815
        %v4820 = vpack.c.b16 %v3820, %v3816
        %v4821 = vpack.c.b16 %v3825, %v3821
        %v4822 = vpack.c.b16 %v3826, %v3822
        %v4823 = vpack.c.b16 %v3827, %v3823
        %v4824 = vpack.c.b16 %v3828, %v3824
        %v4825 = vpack.c.b16 %v3833, %v3829
        %v4826 = vpack.c.b16 %v3834, %v3830
        %v4827 = vpack.c.b16 %v3835, %v3831
        %v4828 = vpack.c.b16 %v3836, %v3832
        %v4829 = vpack.c.b16 %v3841, %v3837
        %v4830 = vpack.c.b16 %v3842, %v3838
        %v4831 = vpack.c.b16 %v3843, %v3839
        %v4832 = vpack.c.b16 %v3844, %v3840
        %v4833 = vpack.c.b16 %v3849, %v3845
        %v4834 = vpack.c.b16 %v3850, %v3846
        %v4835 = vpack.c.b16 %v3851, %v3847
        %v4836 = vpack.c.b16 %v3852, %v3848
        %v4837 = vpack.c.b16 %v3857, %v3853
        %v4838 = vpack.c.b16 %v3858, %v3854
        %v4839 = vpack.c.b16 %v3859, %v3855
        %v4840 = vpack.c.b16 %v3860, %v3856
        %v4841 = vpack.c.b16 %v3865, %v3861
        %v4842 = vpack.c.b16 %v3866, %v3862
        %v4843 = vpack.c.b16 %v3867, %v3863
        %v4844 = vpack.c.b16 %v3868, %v3864
        %v4845 = vpack.c.b16 %v3873, %v3869
        %v4846 = vpack.c.b16 %v3874, %v3870
        %v4847 = vpack.c.b16 %v3875, %v3871
        %v4848 = vpack.c.b16 %v3876, %v3872
        %v4849 = vpack.c.b16 %v3881, %v3877
        %v4850 = vpack.c.b16 %v3882, %v3878
        %v4851 = vpack.c.b16 %v3883, %v3879
        %v4852 = vpack.c.b16 %v3884, %v3880
        %v4853 = vpack.c.b16 %v3889, %v3885
        %v4854 = vpack.c.b16 %v3890, %v3886
        %v4855 = vpack.c.b16 %v3891, %v3887
        %v4856 = vpack.c.b16 %v3892, %v3888
        %v4857 = vpack.c.b16 %v3897, %v3893
        %v4858 = vpack.c.b16 %v3898, %v3894
        %v4859 = vpack.c.b16 %v3899, %v3895
        %v4860 = vpack.c.b16 %v3900, %v3896
        %v4861 = vpack.c.b16 %v3905, %v3901
        %v4862 = vpack.c.b16 %v3906, %v3902
        %v4863 = vpack.c.b16 %v3907, %v3903
        %v4864 = vpack.c.b16 %v3908, %v3904
        %v4865 = vpack.c.b16 %v3913, %v3909
        %v4866 = vpack.c.b16 %v3914, %v3910
        %v4867 = vpack.c.b16 %v3915, %v3911
        %v4868 = vpack.c.b16 %v3916, %v3912
        %v4869 = vpack.c.b16 %v3921, %v3917
        %v4870 = vpack.c.b16 %v3922, %v3918
        %v4871 = vpack.c.b16 %v3923, %v3919
        %v4872 = vpack.c.b16 %v3924, %v3920
        %v4873 = vpack.c.b16 %v3929, %v3925
        %v4874 = vpack.c.b16 %v3930, %v3926
        %v4875 = vpack.c.b16 %v3931, %v3927
        %v4876 = vpack.c.b16 %v3932, %v3928
        %v4877 = vpack.c.b16 %v3937, %v3933
        %v4878 = vpack.c.b16 %v3938, %v3934
        %v4879 = vpack.c.b16 %v3939, %v3935
        %v4880 = vpack.c.b16 %v3940, %v3936
        %v4881 = vpack.c.b16 %v3945, %v3941
        %v4882 = vpack.c.b16 %v3946, %v3942
        %v4883 = vpack.c.b16 %v3947, %v3943
        %v4884 = vpack.c.b16 %v3948, %v3944
        %v4885 = vpack.c.b16 %v3953, %v3949
        %v4886 = vpack.c.b16 %v3954, %v3950
        %v4887 = vpack.c.b16 %v3955, %v3951
        %v4888 = vpack.c.b16 %v3956, %v3952
        %v4889 = vpack.c.b16 %v3961, %v3957
        %v4890 = vpack.c.b16 %v3962, %v3958
        %v4891 = vpack.c.b16 %v3963, %v3959
        %v4892 = vpack.c.b16 %v3964, %v3960
        %v4893 = vpack.c.b16 %v3969, %v3965
        %v4894 = vpack.c.b16 %v3970, %v3966
        %v4895 = vpack.c.b16 %v3971, %v3967
        %v4896 = vpack.c.b16 %v3972, %v3968
        %v4897 = vpack.c.b16 %v3977, %v3973
        %v4898 = vpack.c.b16 %v3978, %v3974
        %v4899 = vpack.c.b16 %v3979, %v3975
        %v4900 = vpack.c.b16 %v3980, %v3976
        %v4901 = vpack.c.b16 %v3985, %v3981
        %v4902 = vpack.c.b16 %v3986, %v3982
        %v4903 = vpack.c.b16 %v3987, %v3983
        %v4904 = vpack.c.b16 %v3988, %v3984
        %v4905 = vpack.c.b16 %v3993, %v3989
        %v4906 = vpack.c.b16 %v3994, %v3990
        %v4907 = vpack.c.b16 %v3995, %v3991
        %v4908 = vpack.c.b16 %v3996, %v3992
        %v4909 = vpack.c.b16 %v4001, %v3997
        %v4910 = vpack.c.b16 %v4002, %v3998
        %v4911 = vpack.c.b16 %v4003, %v3999
        %v4912 = vpack.c.b16 %v4004, %v4000
        %v4913 = vpack.c.b16 %v4009, %v4005
        %v4914 = vpack.c.b16 %v4010, %v4006
        %v4915 = vpack.c.b16 %v4011, %v4007
        %v4916 = vpack.c.b16 %v4012, %v4008
        %v4917 = vpack.c.b16 %v4017, %v4013
        %v4918 = vpack.c.b16 %v4018, %v4014
        %v4919 = vpack.c.b16 %v4019, %v4015
        %v4920 = vpack.c.b16 %v4020, %v4016
        %v4921 = vpack.c.b16 %v4025, %v4021
        %v4922 = vpack.c.b16 %v4026, %v4022
        %v4923 = vpack.c.b16 %v4027, %v4023
        %v4924 = vpack.c.b16 %v4028, %v4024
        %v4925 = vpack.c.b16 %v4033, %v4029
        %v4926 = vpack.c.b16 %v4034, %v4030
        %v4927 = vpack.c.b16 %v4035, %v4031
        %v4928 = vpack.c.b16 %v4036, %v4032
        %v4929 = vpack.c.b16 %v4041, %v4037
        %v4930 = vpack.c.b16 %v4042, %v4038
        %v4931 = vpack.c.b16 %v4043, %v4039
        %v4932 = vpack.c.b16 %v4044, %v4040
        %v4933 = vpack.c.b16 %v4049, %v4045
        %v4934 = vpack.c.b16 %v4050, %v4046
        %v4935 = vpack.c.b16 %v4051, %v4047
        %v4936 = vpack.c.b16 %v4052, %v4048
        %v4937 = vpack.c.b16 %v4057, %v4053
        %v4938 = vpack.c.b16 %v4058, %v4054
        %v4939 = vpack.c.b16 %v4059, %v4055
        %v4940 = vpack.c.b16 %v4060, %v4056
        %v4941 = vpack.c.b16 %v4065, %v4061
        %v4942 = vpack.c.b16 %v4066, %v4062
        %v4943 = vpack.c.b16 %v4067, %v4063
        %v4944 = vpack.c.b16 %v4068, %v4064
        %v4945 = vpack.c.b16 %v4073, %v4069
        %v4946 = vpack.c.b16 %v4074, %v4070
        %v4947 = vpack.c.b16 %v4075, %v4071
        %v4948 = vpack.c.b16 %v4076, %v4072
        %v4949 = vpack.c.b16 %v4081, %v4077
        %v4950 = vpack.c.b16 %v4082, %v4078
        %v4951 = vpack.c.b16 %v4083, %v4079
        %v4952 = vpack.c.b16 %v4084, %v4080
        %v4953 = vpack.c.b16 %v4089, %v4085
        %v4954 = vpack.c.b16 %v4090, %v4086
        %v4955 = vpack.c.b16 %v4091, %v4087
        %v4956 = vpack.c.b16 %v4092, %v4088
        %5821 = vmatprep.subr.bf16.mxu0 %v4094
        %5822 = vmatpush1.bf16.msra.mxu0 %v4093
        %5823 = vmatprep.subr.bf16.mxu0 %v4098
        %5824 = vmatpush1.bf16.msra.mxu0 %v4097
        %5825 = vmatprep.subr.bf16.mxu0 %v4102
        %5826 = vmatpush1.bf16.msra.mxu0 %v4101
        %5827 = vmatprep.subr.bf16.mxu0 %v4106
        %5828 = vmatpush1.bf16.msra.mxu0 %v4105
        %5829 = vmatprep.subr.bf16.mxu0 %v4110
        %5830 = vmatpush1.bf16.msra.mxu0 %v4109
        %5831 = vmatprep.subr.bf16.mxu0 %v4114
        %5832 = vmatpush1.bf16.msra.mxu0 %v4113
        %5833 = vmatprep.subr.bf16.mxu0 %v4118
        %5834 = vmatpush1.bf16.msra.mxu0 %v4117
        %5835 = vmatprep.subr.bf16.mxu0 %v4122
        %5836 = vmatpush1.bf16.msra.mxu0 %v4121
        %5837 = vmatprep.subr.bf16.mxu0 %v4126
        %5838 = vmatpush1.bf16.msra.mxu0 %v4125
        %5839 = vmatprep.subr.bf16.mxu0 %v4130
        %5840 = vmatpush1.bf16.msra.mxu0 %v4129
        %5841 = vmatprep.subr.bf16.mxu0 %v4134
        %5842 = vmatpush1.bf16.msra.mxu0 %v4133
        %5843 = vmatprep.subr.bf16.mxu0 %v4138
        %5844 = vmatpush1.bf16.msra.mxu0 %v4137
        %5845 = vmatprep.subr.bf16.mxu0 %v4142
        %5846 = vmatpush1.bf16.msra.mxu0 %v4141
        %5847 = vmatprep.subr.bf16.mxu0 %v4146
        %5848 = vmatpush1.bf16.msra.mxu0 %v4145
        %5849 = vmatprep.subr.bf16.mxu0 %v4150
        %5850 = vmatpush1.bf16.msra.mxu0 %v4149
        %5851 = vmatprep.subr.bf16.mxu0 %v4154
        %5852 = vmatpush1.bf16.msra.mxu0 %v4153
        %5853 = vmatprep.mubr.bf16.mxu0 %v611
        %5854 = vmatmul.mubr.bf16.gmra.mrb[0].mxu0 %v610
        %v5855 = vpop.f32.mrb[0].mxu0
        %v5856 = vadd.f32 0.0, %v5855
        %v5857 = vpop.f32.mrb[0].mxu0
        %v5858 = vadd.f32 0.0, %v5857
        %v5859 = vpop.f32.mrb[0].mxu0
        %v5860 = vpop.f32.mrb[0].mxu0
        %5861 = vdwg.mxu0
        %5862 = vmatprep.subr.bf16.mxu0 %v4158
        %5863 = vmatpush1.bf16.msra.mxu0 %v4157
        %5864 = vmatprep.subr.bf16.mxu0 %v4162
        %5865 = vmatpush1.bf16.msra.mxu0 %v4161
        %5866 = vmatprep.subr.bf16.mxu0 %v4166
        %5867 = vmatpush1.bf16.msra.mxu0 %v4165
        %5868 = vmatprep.subr.bf16.mxu0 %v4170
        %5869 = vmatpush1.bf16.msra.mxu0 %v4169
        %5870 = vmatprep.subr.bf16.mxu0 %v4174
        %5871 = vmatpush1.bf16.msra.mxu0 %v4173
        %5872 = vmatprep.subr.bf16.mxu0 %v4178
        %5873 = vmatpush1.bf16.msra.mxu0 %v4177
        %5874 = vmatprep.subr.bf16.mxu0 %v4182
        %5875 = vmatpush1.bf16.msra.mxu0 %v4181
        %5876 = vmatprep.subr.bf16.mxu0 %v4186
        %5877 = vmatpush1.bf16.msra.mxu0 %v4185
        %5878 = vmatprep.subr.bf16.mxu0 %v4190
        %5879 = vmatpush1.bf16.msra.mxu0 %v4189
        %5880 = vmatprep.subr.bf16.mxu0 %v4194
        %5881 = vmatpush1.bf16.msra.mxu0 %v4193
        %5882 = vmatprep.subr.bf16.mxu0 %v4198
        %5883 = vmatpush1.bf16.msra.mxu0 %v4197
        %5884 = vmatprep.subr.bf16.mxu0 %v4202
        %5885 = vmatpush1.bf16.msra.mxu0 %v4201
        %5886 = vmatprep.subr.bf16.mxu0 %v4206
        %5887 = vmatpush1.bf16.msra.mxu0 %v4205
        %5888 = vmatprep.subr.bf16.mxu0 %v4210
        %5889 = vmatpush1.bf16.msra.mxu0 %v4209
        %5890 = vmatprep.subr.bf16.mxu0 %v4214
        %5891 = vmatpush1.bf16.msra.mxu0 %v4213
        %5892 = vmatprep.subr.bf16.mxu0 %v4218
        %5893 = vmatpush1.bf16.msra.mxu0 %v4217
        %5894 = vmatprep.mubr.bf16.mxu0 %v613
        %5895 = vmatmul.mubr.bf16.gmra.mrb[0].mxu0 %v612
        %v5896 = vpop.f32.mrb[0].mxu0
        %v5897 = vadd.f32 %v5856, %v5896
        %v5898 = vpop.f32.mrb[0].mxu0
        %v5899 = vadd.f32 %v5858, %v5898
        %v5900 = vpop.f32.mrb[0].mxu0
        %v5901 = vpop.f32.mrb[0].mxu0
        %5902 = vdwg.mxu0
        %5903 = vmatprep.subr.bf16.mxu0 %v4222
        %5904 = vmatpush1.bf16.msra.mxu0 %v4221
        %5905 = vmatprep.subr.bf16.mxu0 %v4226
        %5906 = vmatpush1.bf16.msra.mxu0 %v4225
        %5907 = vmatprep.subr.bf16.mxu0 %v4230
        %5908 = vmatpush1.bf16.msra.mxu0 %v4229
        %5909 = vmatprep.subr.bf16.mxu0 %v4234
        %5910 = vmatpush1.bf16.msra.mxu0 %v4233
        %5911 = vmatprep.subr.bf16.mxu0 %v4238
        %5912 = vmatpush1.bf16.msra.mxu0 %v4237
        %5913 = vmatprep.subr.bf16.mxu0 %v4242
        %5914 = vmatpush1.bf16.msra.mxu0 %v4241
        %5915 = vmatprep.subr.bf16.mxu0 %v4246
        %5916 = vmatpush1.bf16.msra.mxu0 %v4245
        %5917 = vmatprep.subr.bf16.mxu0 %v4250
        %5918 = vmatpush1.bf16.msra.mxu0 %v4249
        %5919 = vmatprep.subr.bf16.mxu0 %v4254
        %5920 = vmatpush1.bf16.msra.mxu0 %v4253
        %5921 = vmatprep.subr.bf16.mxu0 %v4258
        %5922 = vmatpush1.bf16.msra.mxu0 %v4257
        %5923 = vmatprep.subr.bf16.mxu0 %v4262
        %5924 = vmatpush1.bf16.msra.mxu0 %v4261
        %5925 = vmatprep.subr.bf16.mxu0 %v4266
        %5926 = vmatpush1.bf16.msra.mxu0 %v4265
        %5927 = vmatprep.subr.bf16.mxu0 %v4270
        %5928 = vmatpush1.bf16.msra.mxu0 %v4269
        %5929 = vmatprep.subr.bf16.mxu0 %v4274
        %5930 = vmatpush1.bf16.msra.mxu0 %v4273
        %5931 = vmatprep.subr.bf16.mxu0 %v4278
        %5932 = vmatpush1.bf16.msra.mxu0 %v4277
        %5933 = vmatprep.subr.bf16.mxu0 %v4282
        %5934 = vmatpush1.bf16.msra.mxu0 %v4281
        %5935 = vmatprep.mubr.bf16.mxu0 %v615
        %5936 = vmatmul.mubr.bf16.gmra.mrb[0].mxu0 %v614
        %v5937 = vpop.f32.mrb[0].mxu0
        %v5938 = vadd.f32 %v5897, %v5937
        %v5939 = vpop.f32.mrb[0].mxu0
        %v5940 = vadd.f32 %v5899, %v5939
        %v5941 = vpop.f32.mrb[0].mxu0
        %v5942 = vpop.f32.mrb[0].mxu0
        %5943 = vdwg.mxu0
        %5944 = vmatprep.subr.bf16.mxu0 %v4286
        %5945 = vmatpush1.bf16.msra.mxu0 %v4285
        %5946 = vmatprep.subr.bf16.mxu0 %v4290
        %5947 = vmatpush1.bf16.msra.mxu0 %v4289
        %5948 = vmatprep.subr.bf16.mxu0 %v4294
        %5949 = vmatpush1.bf16.msra.mxu0 %v4293
        %5950 = vmatprep.subr.bf16.mxu0 %v4298
        %5951 = vmatpush1.bf16.msra.mxu0 %v4297
        %5952 = vmatprep.subr.bf16.mxu0 %v4302
        %5953 = vmatpush1.bf16.msra.mxu0 %v4301
        %5954 = vmatprep.subr.bf16.mxu0 %v4306
        %5955 = vmatpush1.bf16.msra.mxu0 %v4305
        %5956 = vmatprep.subr.bf16.mxu0 %v4310
        %5957 = vmatpush1.bf16.msra.mxu0 %v4309
        %5958 = vmatprep.subr.bf16.mxu0 %v4314
        %5959 = vmatpush1.bf16.msra.mxu0 %v4313
        %5960 = vmatprep.subr.bf16.mxu0 %v4318
        %5961 = vmatpush1.bf16.msra.mxu0 %v4317
        %5962 = vmatprep.subr.bf16.mxu0 %v4322
        %5963 = vmatpush1.bf16.msra.mxu0 %v4321
        %5964 = vmatprep.subr.bf16.mxu0 %v4326
        %5965 = vmatpush1.bf16.msra.mxu0 %v4325
        %5966 = vmatprep.subr.bf16.mxu0 %v4330
        %5967 = vmatpush1.bf16.msra.mxu0 %v4329
        %5968 = vmatprep.subr.bf16.mxu0 %v4334
        %5969 = vmatpush1.bf16.msra.mxu0 %v4333
        %5970 = vmatprep.subr.bf16.mxu0 %v4338
        %5971 = vmatpush1.bf16.msra.mxu0 %v4337
        %5972 = vmatprep.subr.bf16.mxu0 %v4342
        %5973 = vmatpush1.bf16.msra.mxu0 %v4341
        %5974 = vmatprep.subr.bf16.mxu0 %v4346
        %5975 = vmatpush1.bf16.msra.mxu0 %v4345
        %5976 = vmatprep.mubr.bf16.mxu0 %v617
        %5977 = vmatmul.mubr.bf16.gmra.mrb[0].mxu0 %v616
        %v5978 = vpop.f32.mrb[0].mxu0
        %v5979 = vadd.f32 %v5938, %v5978
        %v5980 = vpop.f32.mrb[0].mxu0
        %v5981 = vadd.f32 %v5940, %v5980
        %v5982 = vpop.f32.mrb[0].mxu0
        %v5983 = vpop.f32.mrb[0].mxu0
        %5984 = vdwg.mxu0
        %5985 = vmatprep.subr.bf16.mxu0 %v4350
        %5986 = vmatpush1.bf16.msra.mxu0 %v4349
        %5987 = vmatprep.subr.bf16.mxu0 %v4354
        %5988 = vmatpush1.bf16.msra.mxu0 %v4353
        %5989 = vmatprep.subr.bf16.mxu0 %v4358
        %5990 = vmatpush1.bf16.msra.mxu0 %v4357
        %5991 = vmatprep.subr.bf16.mxu0 %v4362
        %5992 = vmatpush1.bf16.msra.mxu0 %v4361
        %5993 = vmatprep.subr.bf16.mxu0 %v4366
        %5994 = vmatpush1.bf16.msra.mxu0 %v4365
        %5995 = vmatprep.subr.bf16.mxu0 %v4370
        %5996 = vmatpush1.bf16.msra.mxu0 %v4369
        %5997 = vmatprep.subr.bf16.mxu0 %v4374
        %5998 = vmatpush1.bf16.msra.mxu0 %v4373
        %5999 = vmatprep.subr.bf16.mxu0 %v4378
        %6000 = vmatpush1.bf16.msra.mxu0 %v4377
        %6001 = vmatprep.subr.bf16.mxu0 %v4382
        %6002 = vmatpush1.bf16.msra.mxu0 %v4381
        %6003 = vmatprep.subr.bf16.mxu0 %v4386
        %6004 = vmatpush1.bf16.msra.mxu0 %v4385
        %6005 = vmatprep.subr.bf16.mxu0 %v4390
        %6006 = vmatpush1.bf16.msra.mxu0 %v4389
        %6007 = vmatprep.subr.bf16.mxu0 %v4394
        %6008 = vmatpush1.bf16.msra.mxu0 %v4393
        %6009 = vmatprep.subr.bf16.mxu0 %v4398
        %6010 = vmatpush1.bf16.msra.mxu0 %v4397
        %6011 = vmatprep.subr.bf16.mxu0 %v4402
        %6012 = vmatpush1.bf16.msra.mxu0 %v4401
        %6013 = vmatprep.subr.bf16.mxu0 %v4406
        %6014 = vmatpush1.bf16.msra.mxu0 %v4405
        %6015 = vmatprep.subr.bf16.mxu0 %v4410
        %6016 = vmatpush1.bf16.msra.mxu0 %v4409
        %6017 = vmatprep.mubr.bf16.mxu0 %v619
        %6018 = vmatmul.mubr.bf16.gmra.mrb[0].mxu0 %v618
        %v6019 = vpop.f32.mrb[0].mxu0
        %v6020 = vadd.f32 %v5979, %v6019
        %v6021 = vpop.f32.mrb[0].mxu0
        %v6022 = vadd.f32 %v5981, %v6021
        %v6023 = vpop.f32.mrb[0].mxu0
        %v6024 = vpop.f32.mrb[0].mxu0
        %6025 = vdwg.mxu0
        %6026 = vmatprep.subr.bf16.mxu0 %v4414
        %6027 = vmatpush1.bf16.msra.mxu0 %v4413
        %6028 = vmatprep.subr.bf16.mxu0 %v4418
        %6029 = vmatpush1.bf16.msra.mxu0 %v4417
        %6030 = vmatprep.subr.bf16.mxu0 %v4422
        %6031 = vmatpush1.bf16.msra.mxu0 %v4421
        %6032 = vmatprep.subr.bf16.mxu0 %v4426
        %6033 = vmatpush1.bf16.msra.mxu0 %v4425
        %6034 = vmatprep.subr.bf16.mxu0 %v4430
        %6035 = vmatpush1.bf16.msra.mxu0 %v4429
        %6036 = vmatprep.subr.bf16.mxu0 %v4434
        %6037 = vmatpush1.bf16.msra.mxu0 %v4433
        %6038 = vmatprep.subr.bf16.mxu0 %v4438
        %6039 = vmatpush1.bf16.msra.mxu0 %v4437
        %6040 = vmatprep.subr.bf16.mxu0 %v4442
        %6041 = vmatpush1.bf16.msra.mxu0 %v4441
        %6042 = vmatprep.subr.bf16.mxu0 %v4446
        %6043 = vmatpush1.bf16.msra.mxu0 %v4445
        %6044 = vmatprep.subr.bf16.mxu0 %v4450
        %6045 = vmatpush1.bf16.msra.mxu0 %v4449
        %6046 = vmatprep.subr.bf16.mxu0 %v4454
        %6047 = vmatpush1.bf16.msra.mxu0 %v4453
        %6048 = vmatprep.subr.bf16.mxu0 %v4458
        %6049 = vmatpush1.bf16.msra.mxu0 %v4457
        %6050 = vmatprep.subr.bf16.mxu0 %v4462
        %6051 = vmatpush1.bf16.msra.mxu0 %v4461
        %6052 = vmatprep.subr.bf16.mxu0 %v4466
        %6053 = vmatpush1.bf16.msra.mxu0 %v4465
        %6054 = vmatprep.subr.bf16.mxu0 %v4470
        %6055 = vmatpush1.bf16.msra.mxu0 %v4469
        %6056 = vmatprep.subr.bf16.mxu0 %v4474
        %6057 = vmatpush1.bf16.msra.mxu0 %v4473
        %6058 = vmatprep.mubr.bf16.mxu0 %v621
        %6059 = vmatmul.mubr.bf16.gmra.mrb[0].mxu0 %v620
        %v6060 = vpop.f32.mrb[0].mxu0
        %v6061 = vadd.f32 %v6020, %v6060
        %v6062 = vpop.f32.mrb[0].mxu0
        %v6063 = vadd.f32 %v6022, %v6062
        %v6064 = vpop.f32.mrb[0].mxu0
        %v6065 = vpop.f32.mrb[0].mxu0
        %6066 = vdwg.mxu0
        %6067 = vmatprep.subr.bf16.mxu0 %v4478
        %6068 = vmatpush1.bf16.msra.mxu0 %v4477
        %6069 = vmatprep.subr.bf16.mxu0 %v4482
        %6070 = vmatpush1.bf16.msra.mxu0 %v4481
        %6071 = vmatprep.subr.bf16.mxu0 %v4486
        %6072 = vmatpush1.bf16.msra.mxu0 %v4485
        %6073 = vmatprep.subr.bf16.mxu0 %v4490
        %6074 = vmatpush1.bf16.msra.mxu0 %v4489
        %6075 = vmatprep.subr.bf16.mxu0 %v4494
        %6076 = vmatpush1.bf16.msra.mxu0 %v4493
        %6077 = vmatprep.subr.bf16.mxu0 %v4498
        %6078 = vmatpush1.bf16.msra.mxu0 %v4497
        %6079 = vmatprep.subr.bf16.mxu0 %v4502
        %6080 = vmatpush1.bf16.msra.mxu0 %v4501
        %6081 = vmatprep.subr.bf16.mxu0 %v4506
        %6082 = vmatpush1.bf16.msra.mxu0 %v4505
        %6083 = vmatprep.subr.bf16.mxu0 %v4510
        %6084 = vmatpush1.bf16.msra.mxu0 %v4509
        %6085 = vmatprep.subr.bf16.mxu0 %v4514
        %6086 = vmatpush1.bf16.msra.mxu0 %v4513
        %6087 = vmatprep.subr.bf16.mxu0 %v4518
        %6088 = vmatpush1.bf16.msra.mxu0 %v4517
        %6089 = vmatprep.subr.bf16.mxu0 %v4522
        %6090 = vmatpush1.bf16.msra.mxu0 %v4521
        %6091 = vmatprep.subr.bf16.mxu0 %v4526
        %6092 = vmatpush1.bf16.msra.mxu0 %v4525
        %6093 = vmatprep.subr.bf16.mxu0 %v4530
        %6094 = vmatpush1.bf16.msra.mxu0 %v4529
        %6095 = vmatprep.subr.bf16.mxu0 %v4534
        %6096 = vmatpush1.bf16.msra.mxu0 %v4533
        %6097 = vmatprep.subr.bf16.mxu0 %v4538
        %6098 = vmatpush1.bf16.msra.mxu0 %v4537
        %6099 = vmatprep.mubr.bf16.mxu0 %v623
        %6100 = vmatmul.mubr.bf16.gmra.mrb[0].mxu0 %v622
        %v6101 = vpop.f32.mrb[0].mxu0
        %v6102 = vadd.f32 %v6061, %v6101
        %v6103 = vpop.f32.mrb[0].mxu0
        %v6104 = vadd.f32 %v6063, %v6103
        %v6105 = vpop.f32.mrb[0].mxu0
        %v6106 = vpop.f32.mrb[0].mxu0
        %6107 = vdwg.mxu0
        %6108 = vmatprep.subr.bf16.mxu0 %v4542
        %6109 = vmatpush1.bf16.msra.mxu0 %v4541
        %6110 = vmatprep.subr.bf16.mxu0 %v4546
        %6111 = vmatpush1.bf16.msra.mxu0 %v4545
        %6112 = vmatprep.subr.bf16.mxu0 %v4550
        %6113 = vmatpush1.bf16.msra.mxu0 %v4549
        %6114 = vmatprep.subr.bf16.mxu0 %v4554
        %6115 = vmatpush1.bf16.msra.mxu0 %v4553
        %6116 = vmatprep.subr.bf16.mxu0 %v4558
        %6117 = vmatpush1.bf16.msra.mxu0 %v4557
        %6118 = vmatprep.subr.bf16.mxu0 %v4562
        %6119 = vmatpush1.bf16.msra.mxu0 %v4561
        %6120 = vmatprep.subr.bf16.mxu0 %v4566
        %6121 = vmatpush1.bf16.msra.mxu0 %v4565
        %6122 = vmatprep.subr.bf16.mxu0 %v4570
        %6123 = vmatpush1.bf16.msra.mxu0 %v4569
        %6124 = vmatprep.subr.bf16.mxu0 %v4574
        %6125 = vmatpush1.bf16.msra.mxu0 %v4573
        %6126 = vmatprep.subr.bf16.mxu0 %v4578
        %6127 = vmatpush1.bf16.msra.mxu0 %v4577
        %6128 = vmatprep.subr.bf16.mxu0 %v4582
        %6129 = vmatpush1.bf16.msra.mxu0 %v4581
        %6130 = vmatprep.subr.bf16.mxu0 %v4586
        %6131 = vmatpush1.bf16.msra.mxu0 %v4585
        %6132 = vmatprep.subr.bf16.mxu0 %v4590
        %6133 = vmatpush1.bf16.msra.mxu0 %v4589
        %6134 = vmatprep.subr.bf16.mxu0 %v4594
        %6135 = vmatpush1.bf16.msra.mxu0 %v4593
        %6136 = vmatprep.subr.bf16.mxu0 %v4598
        %6137 = vmatpush1.bf16.msra.mxu0 %v4597
        %6138 = vmatprep.subr.bf16.mxu0 %v4602
        %6139 = vmatpush1.bf16.msra.mxu0 %v4601
        %6140 = vmatprep.mubr.bf16.mxu0 %v625
        %6141 = vmatmul.mubr.bf16.gmra.mrb[0].mxu0 %v624
        %v6142 = vpop.f32.mrb[0].mxu0
        %v6143 = vadd.f32 %v6102, %v6142
        %v6144 = vpop.f32.mrb[0].mxu0
        %v6145 = vadd.f32 %v6104, %v6144
        %v6146 = vpop.f32.mrb[0].mxu0
        %v6147 = vpop.f32.mrb[0].mxu0
        %6148 = vdwg.mxu0
        %6149 = vmatprep.subr.bf16.mxu0 %v4606
        %6150 = vmatpush1.bf16.msra.mxu0 %v4605
        %6151 = vmatprep.subr.bf16.mxu0 %v4610
        %6152 = vmatpush1.bf16.msra.mxu0 %v4609
        %6153 = vmatprep.subr.bf16.mxu0 %v4614
        %6154 = vmatpush1.bf16.msra.mxu0 %v4613
        %6155 = vmatprep.subr.bf16.mxu0 %v4618
        %6156 = vmatpush1.bf16.msra.mxu0 %v4617
        %6157 = vmatprep.subr.bf16.mxu0 %v4622
        %6158 = vmatpush1.bf16.msra.mxu0 %v4621
        %6159 = vmatprep.subr.bf16.mxu0 %v4626
        %6160 = vmatpush1.bf16.msra.mxu0 %v4625
        %6161 = vmatprep.subr.bf16.mxu0 %v4630
        %6162 = vmatpush1.bf16.msra.mxu0 %v4629
        %6163 = vmatprep.subr.bf16.mxu0 %v4634
        %6164 = vmatpush1.bf16.msra.mxu0 %v4633
        %6165 = vmatprep.subr.bf16.mxu0 %v4638
        %6166 = vmatpush1.bf16.msra.mxu0 %v4637
        %6167 = vmatprep.subr.bf16.mxu0 %v4642
        %6168 = vmatpush1.bf16.msra.mxu0 %v4641
        %6169 = vmatprep.subr.bf16.mxu0 %v4646
        %6170 = vmatpush1.bf16.msra.mxu0 %v4645
        %6171 = vmatprep.subr.bf16.mxu0 %v4650
        %6172 = vmatpush1.bf16.msra.mxu0 %v4649
        %6173 = vmatprep.subr.bf16.mxu0 %v4654
        %6174 = vmatpush1.bf16.msra.mxu0 %v4653
        %6175 = vmatprep.subr.bf16.mxu0 %v4658
        %6176 = vmatpush1.bf16.msra.mxu0 %v4657
        %6177 = vmatprep.subr.bf16.mxu0 %v4662
        %6178 = vmatpush1.bf16.msra.mxu0 %v4661
        %6179 = vmatprep.subr.bf16.mxu0 %v4666
        %6180 = vmatpush1.bf16.msra.mxu0 %v4665
        %6181 = vmatprep.mubr.bf16.mxu0 %v627
        %6182 = vmatmul.mubr.bf16.gmra.mrb[0].mxu0 %v626
        %v6183 = vpop.f32.mrb[0].mxu0
        %v6184 = vadd.f32 %v6143, %v6183
        %v6185 = vpop.f32.mrb[0].mxu0
        %v6186 = vadd.f32 %v6145, %v6185
        %v6187 = vpop.f32.mrb[0].mxu0
        %v6188 = vpop.f32.mrb[0].mxu0
        %6189 = vdwg.mxu0
        %6190 = vmatprep.subr.bf16.mxu0 %v4670
        %6191 = vmatpush1.bf16.msra.mxu0 %v4669
        %6192 = vmatprep.subr.bf16.mxu0 %v4674
        %6193 = vmatpush1.bf16.msra.mxu0 %v4673
        %6194 = vmatprep.subr.bf16.mxu0 %v4678
        %6195 = vmatpush1.bf16.msra.mxu0 %v4677
        %6196 = vmatprep.subr.bf16.mxu0 %v4682
        %6197 = vmatpush1.bf16.msra.mxu0 %v4681
        %6198 = vmatprep.subr.bf16.mxu0 %v4686
        %6199 = vmatpush1.bf16.msra.mxu0 %v4685
        %6200 = vmatprep.subr.bf16.mxu0 %v4690
        %6201 = vmatpush1.bf16.msra.mxu0 %v4689
        %6202 = vmatprep.subr.bf16.mxu0 %v4694
        %6203 = vmatpush1.bf16.msra.mxu0 %v4693
        %6204 = vmatprep.subr.bf16.mxu0 %v4698
        %6205 = vmatpush1.bf16.msra.mxu0 %v4697
        %6206 = vmatprep.subr.bf16.mxu0 %v4702
        %6207 = vmatpush1.bf16.msra.mxu0 %v4701
        %6208 = vmatprep.subr.bf16.mxu0 %v4706
        %6209 = vmatpush1.bf16.msra.mxu0 %v4705
        %6210 = vmatprep.subr.bf16.mxu0 %v4710
        %6211 = vmatpush1.bf16.msra.mxu0 %v4709
        %6212 = vmatprep.subr.bf16.mxu0 %v4714
        %6213 = vmatpush1.bf16.msra.mxu0 %v4713
        %6214 = vmatprep.subr.bf16.mxu0 %v4718
        %6215 = vmatpush1.bf16.msra.mxu0 %v4717
        %6216 = vmatprep.subr.bf16.mxu0 %v4722
        %6217 = vmatpush1.bf16.msra.mxu0 %v4721
        %6218 = vmatprep.subr.bf16.mxu0 %v4726
        %6219 = vmatpush1.bf16.msra.mxu0 %v4725
        %6220 = vmatprep.subr.bf16.mxu0 %v4730
        %6221 = vmatpush1.bf16.msra.mxu0 %v4729
        %6222 = vmatprep.mubr.bf16.mxu0 %v629
        %6223 = vmatmul.mubr.bf16.gmra.mrb[0].mxu0 %v628
        %v6224 = vpop.f32.mrb[0].mxu0
        %v6225 = vadd.f32 %v6184, %v6224
        %v6226 = vpop.f32.mrb[0].mxu0
        %v6227 = vadd.f32 %v6186, %v6226
        %v6228 = vpop.f32.mrb[0].mxu0
        %v6229 = vpop.f32.mrb[0].mxu0
        %6230 = vdwg.mxu0
        %6231 = vmatprep.subr.bf16.mxu0 %v4734
        %6232 = vmatpush1.bf16.msra.mxu0 %v4733
        %6233 = vmatprep.subr.bf16.mxu0 %v4738
        %6234 = vmatpush1.bf16.msra.mxu0 %v4737
        %6235 = vmatprep.subr.bf16.mxu0 %v4742
        %6236 = vmatpush1.bf16.msra.mxu0 %v4741
        %6237 = vmatprep.subr.bf16.mxu0 %v4746
        %6238 = vmatpush1.bf16.msra.mxu0 %v4745
        %6239 = vmatprep.subr.bf16.mxu0 %v4750
        %6240 = vmatpush1.bf16.msra.mxu0 %v4749
        %6241 = vmatprep.subr.bf16.mxu0 %v4754
        %6242 = vmatpush1.bf16.msra.mxu0 %v4753
        %6243 = vmatprep.subr.bf16.mxu0 %v4758
        %6244 = vmatpush1.bf16.msra.mxu0 %v4757
        %6245 = vmatprep.subr.bf16.mxu0 %v4762
        %6246 = vmatpush1.bf16.msra.mxu0 %v4761
        %6247 = vmatprep.subr.bf16.mxu0 %v4766
        %6248 = vmatpush1.bf16.msra.mxu0 %v4765
        %6249 = vmatprep.subr.bf16.mxu0 %v4770
        %6250 = vmatpush1.bf16.msra.mxu0 %v4769
        %6251 = vmatprep.subr.bf16.mxu0 %v4774
        %6252 = vmatpush1.bf16.msra.mxu0 %v4773
        %6253 = vmatprep.subr.bf16.mxu0 %v4778
        %6254 = vmatpush1.bf16.msra.mxu0 %v4777
        %6255 = vmatprep.subr.bf16.mxu0 %v4782
        %6256 = vmatpush1.bf16.msra.mxu0 %v4781
        %6257 = vmatprep.subr.bf16.mxu0 %v4786
        %6258 = vmatpush1.bf16.msra.mxu0 %v4785
        %6259 = vmatprep.subr.bf16.mxu0 %v4790
        %6260 = vmatpush1.bf16.msra.mxu0 %v4789
        %6261 = vmatprep.subr.bf16.mxu0 %v4794
        %6262 = vmatpush1.bf16.msra.mxu0 %v4793
        %6263 = vmatprep.mubr.bf16.mxu0 %v631
        %6264 = vmatmul.mubr.bf16.gmra.mrb[0].mxu0 %v630
        %v6265 = vpop.f32.mrb[0].mxu0
        %v6266 = vadd.f32 %v6225, %v6265
        %v6267 = vpop.f32.mrb[0].mxu0
        %v6268 = vadd.f32 %v6227, %v6267
        %v6269 = vpop.f32.mrb[0].mxu0
        %v6270 = vpop.f32.mrb[0].mxu0
        %6271 = vdwg.mxu0
        %6272 = vmatprep.subr.bf16.mxu0 %v4798
        %6273 = vmatpush1.bf16.msra.mxu0 %v4797
        %6274 = vmatprep.subr.bf16.mxu0 %v4802
        %6275 = vmatpush1.bf16.msra.mxu0 %v4801
        %6276 = vmatprep.subr.bf16.mxu0 %v4806
        %6277 = vmatpush1.bf16.msra.mxu0 %v4805
        %6278 = vmatprep.subr.bf16.mxu0 %v4810
        %6279 = vmatpush1.bf16.msra.mxu0 %v4809
        %6280 = vmatprep.subr.bf16.mxu0 %v4814
        %6281 = vmatpush1.bf16.msra.mxu0 %v4813
        %6282 = vmatprep.subr.bf16.mxu0 %v4818
        %6283 = vmatpush1.bf16.msra.mxu0 %v4817
        %6284 = vmatprep.subr.bf16.mxu0 %v4822
        %6285 = vmatpush1.bf16.msra.mxu0 %v4821
        %6286 = vmatprep.subr.bf16.mxu0 %v4826
        %6287 = vmatpush1.bf16.msra.mxu0 %v4825
        %6288 = vmatprep.subr.bf16.mxu0 %v4830
        %6289 = vmatpush1.bf16.msra.mxu0 %v4829
        %6290 = vmatprep.subr.bf16.mxu0 %v4834
        %6291 = vmatpush1.bf16.msra.mxu0 %v4833
        %6292 = vmatprep.subr.bf16.mxu0 %v4838
        %6293 = vmatpush1.bf16.msra.mxu0 %v4837
        %6294 = vmatprep.subr.bf16.mxu0 %v4842
        %6295 = vmatpush1.bf16.msra.mxu0 %v4841
        %6296 = vmatprep.subr.bf16.mxu0 %v4846
        %6297 = vmatpush1.bf16.msra.mxu0 %v4845
        %6298 = vmatprep.subr.bf16.mxu0 %v4850
        %6299 = vmatpush1.bf16.msra.mxu0 %v4849
        %6300 = vmatprep.subr.bf16.mxu0 %v4854
        %6301 = vmatpush1.bf16.msra.mxu0 %v4853
        %6302 = vmatprep.subr.bf16.mxu0 %v4858
        %6303 = vmatpush1.bf16.msra.mxu0 %v4857
        %6304 = vmatprep.mubr.bf16.mxu0 %v633
        %6305 = vmatmul.mubr.bf16.gmra.mrb[0].mxu0 %v632
        %v6306 = vpop.f32.mrb[0].mxu0
        %v6307 = vadd.f32 %v6266, %v6306
        %v6308 = vpop.f32.mrb[0].mxu0
        %v6309 = vadd.f32 %v6268, %v6308
        %v6310 = vpop.f32.mrb[0].mxu0
        %v6311 = vpop.f32.mrb[0].mxu0
        %6312 = vdwg.mxu0
        %6313 = vmatprep.subr.bf16.mxu0 %v4862
        %6314 = vmatpush1.bf16.msra.mxu0 %v4861
        %6315 = vmatprep.subr.bf16.mxu0 %v4866
        %6316 = vmatpush1.bf16.msra.mxu0 %v4865
        %6317 = vmatprep.subr.bf16.mxu0 %v4870
        %6318 = vmatpush1.bf16.msra.mxu0 %v4869
        %6319 = vmatprep.subr.bf16.mxu0 %v4874
        %6320 = vmatpush1.bf16.msra.mxu0 %v4873
        %6321 = vmatprep.subr.bf16.mxu0 %v4878
        %6322 = vmatpush1.bf16.msra.mxu0 %v4877
        %6323 = vmatprep.subr.bf16.mxu0 %v4882
        %6324 = vmatpush1.bf16.msra.mxu0 %v4881
        %6325 = vmatprep.subr.bf16.mxu0 %v4886
        %6326 = vmatpush1.bf16.msra.mxu0 %v4885
        %6327 = vmatprep.subr.bf16.mxu0 %v4890
        %6328 = vmatpush1.bf16.msra.mxu0 %v4889
        %6329 = vmatprep.subr.bf16.mxu0 %v4894
        %6330 = vmatpush1.bf16.msra.mxu0 %v4893
        %6331 = vmatprep.subr.bf16.mxu0 %v4898
        %6332 = vmatpush1.bf16.msra.mxu0 %v4897
        %6333 = vmatprep.subr.bf16.mxu0 %v4902
        %6334 = vmatpush1.bf16.msra.mxu0 %v4901
        %6335 = vmatprep.subr.bf16.mxu0 %v4906
        %6336 = vmatpush1.bf16.msra.mxu0 %v4905
        %6337 = vmatprep.subr.bf16.mxu0 %v4910
        %6338 = vmatpush1.bf16.msra.mxu0 %v4909
        %6339 = vmatprep.subr.bf16.mxu0 %v4914
        %6340 = vmatpush1.bf16.msra.mxu0 %v4913
        %6341 = vmatprep.subr.bf16.mxu0 %v4918
        %6342 = vmatpush1.bf16.msra.mxu0 %v4917
        %6343 = vmatprep.subr.bf16.mxu0 %v4922
        %6344 = vmatpush1.bf16.msra.mxu0 %v4921
        %6345 = vmatprep.mubr.bf16.mxu0 %v635
        %6346 = vmatmul.mubr.bf16.gmra.mrb[0].mxu0 %v634
        %v6347 = vpop.f32.mrb[0].mxu0
        %v6348 = vadd.f32 %v6307, %v6347
        %v6349 = vpop.f32.mrb[0].mxu0
        %v6350 = vadd.f32 %v6309, %v6349
        %v6351 = vpop.f32.mrb[0].mxu0
        %v6352 = vpop.f32.mrb[0].mxu0
        %6353 = vdwg.mxu0
        %6354 = vmatprep.subr.bf16.mxu0 %v4926
        %6355 = vmatpush1.bf16.msra.mxu0 %v4925
        %6356 = vmatprep.subr.bf16.mxu0 %v4930
        %6357 = vmatpush1.bf16.msra.mxu0 %v4929
        %6358 = vmatprep.subr.bf16.mxu0 %v4934
        %6359 = vmatpush1.bf16.msra.mxu0 %v4933
        %6360 = vmatprep.subr.bf16.mxu0 %v4938
        %6361 = vmatpush1.bf16.msra.mxu0 %v4937
        %6362 = vmatprep.subr.bf16.mxu0 %v4942
        %6363 = vmatpush1.bf16.msra.mxu0 %v4941
        %6364 = vmatprep.subr.bf16.mxu0 %v4946
        %6365 = vmatpush1.bf16.msra.mxu0 %v4945
        %6366 = vmatprep.subr.bf16.mxu0 %v4950
        %6367 = vmatpush1.bf16.msra.mxu0 %v4949
        %6368 = vmatprep.subr.bf16.mxu0 %v4954
        %6369 = vmatpush1.bf16.msra.mxu0 %v4953
        %6370 = vmatprep.subr.bf16.mxu0 0
        %6371 = vmatpush1.bf16.msra.mxu0 0
        %6372 = vmatprep.subr.bf16.mxu0 0
        %6373 = vmatpush1.bf16.msra.mxu0 0
        %6374 = vmatprep.subr.bf16.mxu0 0
        %6375 = vmatpush1.bf16.msra.mxu0 0
        %6376 = vmatprep.subr.bf16.mxu0 0
        %6377 = vmatpush1.bf16.msra.mxu0 0
        %6378 = vmatprep.subr.bf16.mxu0 0
        %6379 = vmatpush1.bf16.msra.mxu0 0
        %6380 = vmatprep.subr.bf16.mxu0 0
        %6381 = vmatpush1.bf16.msra.mxu0 0
        %6382 = vmatprep.subr.bf16.mxu0 0
        %6383 = vmatpush1.bf16.msra.mxu0 0
        %6384 = vmatprep.subr.bf16.mxu0 0
        %6385 = vmatpush1.bf16.msra.mxu0 0
        %6386 = vmatprep.mubr.bf16.mxu0 0
        %6387 = vmatmul.mubr.bf16.gmra.mrb[0].mxu0 %v636
        %v6388 = vpop.f32.mrb[0].mxu0
        %v6389 = vadd.f32 %v6348, %v6388
        %v6390 = vpop.f32.mrb[0].mxu0
        %v6391 = vadd.f32 %v6350, %v6390
        %v6392 = vpop.f32.mrb[0].mxu0
        %v6393 = vpop.f32.mrb[0].mxu0
        %6394 = vdwg.mxu0
        %6395 = vmatprep.subr.bf16.mxu0 %v4096
        %6396 = vmatpush1.bf16.msra.mxu0 %v4095
        %6397 = vmatprep.subr.bf16.mxu0 %v4100
        %6398 = vmatpush1.bf16.msra.mxu0 %v4099
        %6399 = vmatprep.subr.bf16.mxu0 %v4104
        %6400 = vmatpush1.bf16.msra.mxu0 %v4103
        %6401 = vmatprep.subr.bf16.mxu0 %v4108
        %6402 = vmatpush1.bf16.msra.mxu0 %v4107
        %6403 = vmatprep.subr.bf16.mxu0 %v4112
        %6404 = vmatpush1.bf16.msra.mxu0 %v4111
        %6405 = vmatprep.subr.bf16.mxu0 %v4116
        %6406 = vmatpush1.bf16.msra.mxu0 %v4115
        %6407 = vmatprep.subr.bf16.mxu0 %v4120
        %6408 = vmatpush1.bf16.msra.mxu0 %v4119
        %6409 = vmatprep.subr.bf16.mxu0 %v4124
        %6410 = vmatpush1.bf16.msra.mxu0 %v4123
        %6411 = vmatprep.subr.bf16.mxu0 %v4128
        %6412 = vmatpush1.bf16.msra.mxu0 %v4127
        %6413 = vmatprep.subr.bf16.mxu0 %v4132
        %6414 = vmatpush1.bf16.msra.mxu0 %v4131
        %6415 = vmatprep.subr.bf16.mxu0 %v4136
        %6416 = vmatpush1.bf16.msra.mxu0 %v4135
        %6417 = vmatprep.subr.bf16.mxu0 %v4140
        %6418 = vmatpush1.bf16.msra.mxu0 %v4139
        %6419 = vmatprep.subr.bf16.mxu0 %v4144
        %6420 = vmatpush1.bf16.msra.mxu0 %v4143
        %6421 = vmatprep.subr.bf16.mxu0 %v4148
        %6422 = vmatpush1.bf16.msra.mxu0 %v4147
        %6423 = vmatprep.subr.bf16.mxu0 %v4152
        %6424 = vmatpush1.bf16.msra.mxu0 %v4151
        %6425 = vmatprep.subr.bf16.mxu0 %v4156
        %6426 = vmatpush1.bf16.msra.mxu0 %v4155
        %6427 = vmatprep.mubr.bf16.mxu0 %v611
        %6428 = vmatmul.mubr.bf16.gmra.mrb[0].mxu0 %v610
        %v6429 = vpop.f32.mrb[0].mxu0
        %v6430 = vadd.f32 0.0, %v6429
        %v6431 = vpop.f32.mrb[0].mxu0
        %v6432 = vadd.f32 0.0, %v6431
        %v6433 = vpop.f32.mrb[0].mxu0
        %v6434 = vpop.f32.mrb[0].mxu0
        %6435 = vdwg.mxu0
        %6436 = vmatprep.subr.bf16.mxu0 %v4160
        %6437 = vmatpush1.bf16.msra.mxu0 %v4159
        %6438 = vmatprep.subr.bf16.mxu0 %v4164
        %6439 = vmatpush1.bf16.msra.mxu0 %v4163
        %6440 = vmatprep.subr.bf16.mxu0 %v4168
        %6441 = vmatpush1.bf16.msra.mxu0 %v4167
        %6442 = vmatprep.subr.bf16.mxu0 %v4172
        %6443 = vmatpush1.bf16.msra.mxu0 %v4171
        %6444 = vmatprep.subr.bf16.mxu0 %v4176
        %6445 = vmatpush1.bf16.msra.mxu0 %v4175
        %6446 = vmatprep.subr.bf16.mxu0 %v4180
        %6447 = vmatpush1.bf16.msra.mxu0 %v4179
        %6448 = vmatprep.subr.bf16.mxu0 %v4184
        %6449 = vmatpush1.bf16.msra.mxu0 %v4183
        %6450 = vmatprep.subr.bf16.mxu0 %v4188
        %6451 = vmatpush1.bf16.msra.mxu0 %v4187
        %6452 = vmatprep.subr.bf16.mxu0 %v4192
        %6453 = vmatpush1.bf16.msra.mxu0 %v4191
        %6454 = vmatprep.subr.bf16.mxu0 %v4196
        %6455 = vmatpush1.bf16.msra.mxu0 %v4195
        %6456 = vmatprep.subr.bf16.mxu0 %v4200
        %6457 = vmatpush1.bf16.msra.mxu0 %v4199
        %6458 = vmatprep.subr.bf16.mxu0 %v4204
        %6459 = vmatpush1.bf16.msra.mxu0 %v4203
        %6460 = vmatprep.subr.bf16.mxu0 %v4208
        %6461 = vmatpush1.bf16.msra.mxu0 %v4207
        %6462 = vmatprep.subr.bf16.mxu0 %v4212
        %6463 = vmatpush1.bf16.msra.mxu0 %v4211
        %6464 = vmatprep.subr.bf16.mxu0 %v4216
        %6465 = vmatpush1.bf16.msra.mxu0 %v4215
        %6466 = vmatprep.subr.bf16.mxu0 %v4220
        %6467 = vmatpush1.bf16.msra.mxu0 %v4219
        %6468 = vmatprep.mubr.bf16.mxu0 %v613
        %6469 = vmatmul.mubr.bf16.gmra.mrb[0].mxu0 %v612
        %v6470 = vpop.f32.mrb[0].mxu0
        %v6471 = vadd.f32 %v6430, %v6470
        %v6472 = vpop.f32.mrb[0].mxu0
        %v6473 = vadd.f32 %v6432, %v6472
        %v6474 = vpop.f32.mrb[0].mxu0
        %v6475 = vpop.f32.mrb[0].mxu0
        %6476 = vdwg.mxu0
        %6477 = vmatprep.subr.bf16.mxu0 %v4224
        %6478 = vmatpush1.bf16.msra.mxu0 %v4223
        %6479 = vmatprep.subr.bf16.mxu0 %v4228
        %6480 = vmatpush1.bf16.msra.mxu0 %v4227
        %6481 = vmatprep.subr.bf16.mxu0 %v4232
        %6482 = vmatpush1.bf16.msra.mxu0 %v4231
        %6483 = vmatprep.subr.bf16.mxu0 %v4236
        %6484 = vmatpush1.bf16.msra.mxu0 %v4235
        %6485 = vmatprep.subr.bf16.mxu0 %v4240
        %6486 = vmatpush1.bf16.msra.mxu0 %v4239
        %6487 = vmatprep.subr.bf16.mxu0 %v4244
        %6488 = vmatpush1.bf16.msra.mxu0 %v4243
        %6489 = vmatprep.subr.bf16.mxu0 %v4248
        %6490 = vmatpush1.bf16.msra.mxu0 %v4247
        %6491 = vmatprep.subr.bf16.mxu0 %v4252
        %6492 = vmatpush1.bf16.msra.mxu0 %v4251
        %6493 = vmatprep.subr.bf16.mxu0 %v4256
        %6494 = vmatpush1.bf16.msra.mxu0 %v4255
        %6495 = vmatprep.subr.bf16.mxu0 %v4260
        %6496 = vmatpush1.bf16.msra.mxu0 %v4259
        %6497 = vmatprep.subr.bf16.mxu0 %v4264
        %6498 = vmatpush1.bf16.msra.mxu0 %v4263
        %6499 = vmatprep.subr.bf16.mxu0 %v4268
        %6500 = vmatpush1.bf16.msra.mxu0 %v4267
        %6501 = vmatprep.subr.bf16.mxu0 %v4272
        %6502 = vmatpush1.bf16.msra.mxu0 %v4271
        %6503 = vmatprep.subr.bf16.mxu0 %v4276
        %6504 = vmatpush1.bf16.msra.mxu0 %v4275
        %6505 = vmatprep.subr.bf16.mxu0 %v4280
        %6506 = vmatpush1.bf16.msra.mxu0 %v4279
        %6507 = vmatprep.subr.bf16.mxu0 %v4284
        %6508 = vmatpush1.bf16.msra.mxu0 %v4283
        %6509 = vmatprep.mubr.bf16.mxu0 %v615
        %6510 = vmatmul.mubr.bf16.gmra.mrb[0].mxu0 %v614
        %v6511 = vpop.f32.mrb[0].mxu0
        %v6512 = vadd.f32 %v6471, %v6511
        %v6513 = vpop.f32.mrb[0].mxu0
        %v6514 = vadd.f32 %v6473, %v6513
        %v6515 = vpop.f32.mrb[0].mxu0
        %v6516 = vpop.f32.mrb[0].mxu0
        %6517 = vdwg.mxu0
        %6518 = vmatprep.subr.bf16.mxu0 %v4288
        %6519 = vmatpush1.bf16.msra.mxu0 %v4287
        %6520 = vmatprep.subr.bf16.mxu0 %v4292
        %6521 = vmatpush1.bf16.msra.mxu0 %v4291
        %6522 = vmatprep.subr.bf16.mxu0 %v4296
        %6523 = vmatpush1.bf16.msra.mxu0 %v4295
        %6524 = vmatprep.subr.bf16.mxu0 %v4300
        %6525 = vmatpush1.bf16.msra.mxu0 %v4299
        %6526 = vmatprep.subr.bf16.mxu0 %v4304
        %6527 = vmatpush1.bf16.msra.mxu0 %v4303
        %6528 = vmatprep.subr.bf16.mxu0 %v4308
        %6529 = vmatpush1.bf16.msra.mxu0 %v4307
        %6530 = vmatprep.subr.bf16.mxu0 %v4312
        %6531 = vmatpush1.bf16.msra.mxu0 %v4311
        %6532 = vmatprep.subr.bf16.mxu0 %v4316
        %6533 = vmatpush1.bf16.msra.mxu0 %v4315
        %6534 = vmatprep.subr.bf16.mxu0 %v4320
        %6535 = vmatpush1.bf16.msra.mxu0 %v4319
        %6536 = vmatprep.subr.bf16.mxu0 %v4324
        %6537 = vmatpush1.bf16.msra.mxu0 %v4323
        %6538 = vmatprep.subr.bf16.mxu0 %v4328
        %6539 = vmatpush1.bf16.msra.mxu0 %v4327
        %6540 = vmatprep.subr.bf16.mxu0 %v4332
        %6541 = vmatpush1.bf16.msra.mxu0 %v4331
        %6542 = vmatprep.subr.bf16.mxu0 %v4336
        %6543 = vmatpush1.bf16.msra.mxu0 %v4335
        %6544 = vmatprep.subr.bf16.mxu0 %v4340
        %6545 = vmatpush1.bf16.msra.mxu0 %v4339
        %6546 = vmatprep.subr.bf16.mxu0 %v4344
        %6547 = vmatpush1.bf16.msra.mxu0 %v4343
        %6548 = vmatprep.subr.bf16.mxu0 %v4348
        %6549 = vmatpush1.bf16.msra.mxu0 %v4347
        %6550 = vmatprep.mubr.bf16.mxu0 %v617
        %6551 = vmatmul.mubr.bf16.gmra.mrb[0].mxu0 %v616
        %v6552 = vpop.f32.mrb[0].mxu0
        %v6553 = vadd.f32 %v6512, %v6552
        %v6554 = vpop.f32.mrb[0].mxu0
        %v6555 = vadd.f32 %v6514, %v6554
        %v6556 = vpop.f32.mrb[0].mxu0
        %v6557 = vpop.f32.mrb[0].mxu0
        %6558 = vdwg.mxu0
        %6559 = vmatprep.subr.bf16.mxu0 %v4352
        %6560 = vmatpush1.bf16.msra.mxu0 %v4351
        %6561 = vmatprep.subr.bf16.mxu0 %v4356
        %6562 = vmatpush1.bf16.msra.mxu0 %v4355
        %6563 = vmatprep.subr.bf16.mxu0 %v4360
        %6564 = vmatpush1.bf16.msra.mxu0 %v4359
        %6565 = vmatprep.subr.bf16.mxu0 %v4364
        %6566 = vmatpush1.bf16.msra.mxu0 %v4363
        %6567 = vmatprep.subr.bf16.mxu0 %v4368
        %6568 = vmatpush1.bf16.msra.mxu0 %v4367
        %6569 = vmatprep.subr.bf16.mxu0 %v4372
        %6570 = vmatpush1.bf16.msra.mxu0 %v4371
        %6571 = vmatprep.subr.bf16.mxu0 %v4376
        %6572 = vmatpush1.bf16.msra.mxu0 %v4375
        %6573 = vmatprep.subr.bf16.mxu0 %v4380
        %6574 = vmatpush1.bf16.msra.mxu0 %v4379
        %6575 = vmatprep.subr.bf16.mxu0 %v4384
        %6576 = vmatpush1.bf16.msra.mxu0 %v4383
        %6577 = vmatprep.subr.bf16.mxu0 %v4388
        %6578 = vmatpush1.bf16.msra.mxu0 %v4387
        %6579 = vmatprep.subr.bf16.mxu0 %v4392
        %6580 = vmatpush1.bf16.msra.mxu0 %v4391
        %6581 = vmatprep.subr.bf16.mxu0 %v4396
        %6582 = vmatpush1.bf16.msra.mxu0 %v4395
        %6583 = vmatprep.subr.bf16.mxu0 %v4400
        %6584 = vmatpush1.bf16.msra.mxu0 %v4399
        %6585 = vmatprep.subr.bf16.mxu0 %v4404
        %6586 = vmatpush1.bf16.msra.mxu0 %v4403
        %6587 = vmatprep.subr.bf16.mxu0 %v4408
        %6588 = vmatpush1.bf16.msra.mxu0 %v4407
        %6589 = vmatprep.subr.bf16.mxu0 %v4412
        %6590 = vmatpush1.bf16.msra.mxu0 %v4411
        %6591 = vmatprep.mubr.bf16.mxu0 %v619
        %6592 = vmatmul.mubr.bf16.gmra.mrb[0].mxu0 %v618
        %v6593 = vpop.f32.mrb[0].mxu0
        %v6594 = vadd.f32 %v6553, %v6593
        %v6595 = vpop.f32.mrb[0].mxu0
        %v6596 = vadd.f32 %v6555, %v6595
        %v6597 = vpop.f32.mrb[0].mxu0
        %v6598 = vpop.f32.mrb[0].mxu0
        %6599 = vdwg.mxu0
        %6600 = vmatprep.subr.bf16.mxu0 %v4416
        %6601 = vmatpush1.bf16.msra.mxu0 %v4415
        %6602 = vmatprep.subr.bf16.mxu0 %v4420
        %6603 = vmatpush1.bf16.msra.mxu0 %v4419
        %6604 = vmatprep.subr.bf16.mxu0 %v4424
        %6605 = vmatpush1.bf16.msra.mxu0 %v4423
        %6606 = vmatprep.subr.bf16.mxu0 %v4428
        %6607 = vmatpush1.bf16.msra.mxu0 %v4427
        %6608 = vmatprep.subr.bf16.mxu0 %v4432
        %6609 = vmatpush1.bf16.msra.mxu0 %v4431
        %6610 = vmatprep.subr.bf16.mxu0 %v4436
        %6611 = vmatpush1.bf16.msra.mxu0 %v4435
        %6612 = vmatprep.subr.bf16.mxu0 %v4440
        %6613 = vmatpush1.bf16.msra.mxu0 %v4439
        %6614 = vmatprep.subr.bf16.mxu0 %v4444
        %6615 = vmatpush1.bf16.msra.mxu0 %v4443
        %6616 = vmatprep.subr.bf16.mxu0 %v4448
        %6617 = vmatpush1.bf16.msra.mxu0 %v4447
        %6618 = vmatprep.subr.bf16.mxu0 %v4452
        %6619 = vmatpush1.bf16.msra.mxu0 %v4451
        %6620 = vmatprep.subr.bf16.mxu0 %v4456
        %6621 = vmatpush1.bf16.msra.mxu0 %v4455
        %6622 = vmatprep.subr.bf16.mxu0 %v4460
        %6623 = vmatpush1.bf16.msra.mxu0 %v4459
        %6624 = vmatprep.subr.bf16.mxu0 %v4464
        %6625 = vmatpush1.bf16.msra.mxu0 %v4463
        %6626 = vmatprep.subr.bf16.mxu0 %v4468
        %6627 = vmatpush1.bf16.msra.mxu0 %v4467
        %6628 = vmatprep.subr.bf16.mxu0 %v4472
        %6629 = vmatpush1.bf16.msra.mxu0 %v4471
        %6630 = vmatprep.subr.bf16.mxu0 %v4476
        %6631 = vmatpush1.bf16.msra.mxu0 %v4475
        %6632 = vmatprep.mubr.bf16.mxu0 %v621
        %6633 = vmatmul.mubr.bf16.gmra.mrb[0].mxu0 %v620
        %v6634 = vpop.f32.mrb[0].mxu0
        %v6635 = vadd.f32 %v6594, %v6634
        %v6636 = vpop.f32.mrb[0].mxu0
        %v6637 = vadd.f32 %v6596, %v6636
        %v6638 = vpop.f32.mrb[0].mxu0
        %v6639 = vpop.f32.mrb[0].mxu0
        %6640 = vdwg.mxu0
        %6641 = vmatprep.subr.bf16.mxu0 %v4480
        %6642 = vmatpush1.bf16.msra.mxu0 %v4479
        %6643 = vmatprep.subr.bf16.mxu0 %v4484
        %6644 = vmatpush1.bf16.msra.mxu0 %v4483
        %6645 = vmatprep.subr.bf16.mxu0 %v4488
        %6646 = vmatpush1.bf16.msra.mxu0 %v4487
        %6647 = vmatprep.subr.bf16.mxu0 %v4492
        %6648 = vmatpush1.bf16.msra.mxu0 %v4491
        %6649 = vmatprep.subr.bf16.mxu0 %v4496
        %6650 = vmatpush1.bf16.msra.mxu0 %v4495
        %6651 = vmatprep.subr.bf16.mxu0 %v4500
        %6652 = vmatpush1.bf16.msra.mxu0 %v4499
        %6653 = vmatprep.subr.bf16.mxu0 %v4504
        %6654 = vmatpush1.bf16.msra.mxu0 %v4503
        %6655 = vmatprep.subr.bf16.mxu0 %v4508
        %6656 = vmatpush1.bf16.msra.mxu0 %v4507
        %6657 = vmatprep.subr.bf16.mxu0 %v4512
        %6658 = vmatpush1.bf16.msra.mxu0 %v4511
        %6659 = vmatprep.subr.bf16.mxu0 %v4516
        %6660 = vmatpush1.bf16.msra.mxu0 %v4515
        %6661 = vmatprep.subr.bf16.mxu0 %v4520
        %6662 = vmatpush1.bf16.msra.mxu0 %v4519
        %6663 = vmatprep.subr.bf16.mxu0 %v4524
        %6664 = vmatpush1.bf16.msra.mxu0 %v4523
        %6665 = vmatprep.subr.bf16.mxu0 %v4528
        %6666 = vmatpush1.bf16.msra.mxu0 %v4527
        %6667 = vmatprep.subr.bf16.mxu0 %v4532
        %6668 = vmatpush1.bf16.msra.mxu0 %v4531
        %6669 = vmatprep.subr.bf16.mxu0 %v4536
        %6670 = vmatpush1.bf16.msra.mxu0 %v4535
        %6671 = vmatprep.subr.bf16.mxu0 %v4540
        %6672 = vmatpush1.bf16.msra.mxu0 %v4539
        %6673 = vmatprep.mubr.bf16.mxu0 %v623
        %6674 = vmatmul.mubr.bf16.gmra.mrb[0].mxu0 %v622
        %v6675 = vpop.f32.mrb[0].mxu0
        %v6676 = vadd.f32 %v6635, %v6675
        %v6677 = vpop.f32.mrb[0].mxu0
        %v6678 = vadd.f32 %v6637, %v6677
        %v6679 = vpop.f32.mrb[0].mxu0
        %v6680 = vpop.f32.mrb[0].mxu0
        %6681 = vdwg.mxu0
        %6682 = vmatprep.subr.bf16.mxu0 %v4544
        %6683 = vmatpush1.bf16.msra.mxu0 %v4543
        %6684 = vmatprep.subr.bf16.mxu0 %v4548
        %6685 = vmatpush1.bf16.msra.mxu0 %v4547
        %6686 = vmatprep.subr.bf16.mxu0 %v4552
        %6687 = vmatpush1.bf16.msra.mxu0 %v4551
        %6688 = vmatprep.subr.bf16.mxu0 %v4556
        %6689 = vmatpush1.bf16.msra.mxu0 %v4555
        %6690 = vmatprep.subr.bf16.mxu0 %v4560
        %6691 = vmatpush1.bf16.msra.mxu0 %v4559
        %6692 = vmatprep.subr.bf16.mxu0 %v4564
        %6693 = vmatpush1.bf16.msra.mxu0 %v4563
        %6694 = vmatprep.subr.bf16.mxu0 %v4568
        %6695 = vmatpush1.bf16.msra.mxu0 %v4567
        %6696 = vmatprep.subr.bf16.mxu0 %v4572
        %6697 = vmatpush1.bf16.msra.mxu0 %v4571
        %6698 = vmatprep.subr.bf16.mxu0 %v4576
        %6699 = vmatpush1.bf16.msra.mxu0 %v4575
        %6700 = vmatprep.subr.bf16.mxu0 %v4580
        %6701 = vmatpush1.bf16.msra.mxu0 %v4579
        %6702 = vmatprep.subr.bf16.mxu0 %v4584
        %6703 = vmatpush1.bf16.msra.mxu0 %v4583
        %6704 = vmatprep.subr.bf16.mxu0 %v4588
        %6705 = vmatpush1.bf16.msra.mxu0 %v4587
        %6706 = vmatprep.subr.bf16.mxu0 %v4592
        %6707 = vmatpush1.bf16.msra.mxu0 %v4591
        %6708 = vmatprep.subr.bf16.mxu0 %v4596
        %6709 = vmatpush1.bf16.msra.mxu0 %v4595
        %6710 = vmatprep.subr.bf16.mxu0 %v4600
        %6711 = vmatpush1.bf16.msra.mxu0 %v4599
        %6712 = vmatprep.subr.bf16.mxu0 %v4604
        %6713 = vmatpush1.bf16.msra.mxu0 %v4603
        %6714 = vmatprep.mubr.bf16.mxu0 %v625
        %6715 = vmatmul.mubr.bf16.gmra.mrb[0].mxu0 %v624
        %v6716 = vpop.f32.mrb[0].mxu0
        %v6717 = vadd.f32 %v6676, %v6716
        %v6718 = vpop.f32.mrb[0].mxu0
        %v6719 = vadd.f32 %v6678, %v6718
        %v6720 = vpop.f32.mrb[0].mxu0
        %v6721 = vpop.f32.mrb[0].mxu0
        %6722 = vdwg.mxu0
        %6723 = vmatprep.subr.bf16.mxu0 %v4608
        %6724 = vmatpush1.bf16.msra.mxu0 %v4607
        %6725 = vmatprep.subr.bf16.mxu0 %v4612
        %6726 = vmatpush1.bf16.msra.mxu0 %v4611
        %6727 = vmatprep.subr.bf16.mxu0 %v4616
        %6728 = vmatpush1.bf16.msra.mxu0 %v4615
        %6729 = vmatprep.subr.bf16.mxu0 %v4620
        %6730 = vmatpush1.bf16.msra.mxu0 %v4619
        %6731 = vmatprep.subr.bf16.mxu0 %v4624
        %6732 = vmatpush1.bf16.msra.mxu0 %v4623
        %6733 = vmatprep.subr.bf16.mxu0 %v4628
        %6734 = vmatpush1.bf16.msra.mxu0 %v4627
        %6735 = vmatprep.subr.bf16.mxu0 %v4632
        %6736 = vmatpush1.bf16.msra.mxu0 %v4631
        %6737 = vmatprep.subr.bf16.mxu0 %v4636
        %6738 = vmatpush1.bf16.msra.mxu0 %v4635
        %6739 = vmatprep.subr.bf16.mxu0 %v4640
        %6740 = vmatpush1.bf16.msra.mxu0 %v4639
        %6741 = vmatprep.subr.bf16.mxu0 %v4644
        %6742 = vmatpush1.bf16.msra.mxu0 %v4643
        %6743 = vmatprep.subr.bf16.mxu0 %v4648
        %6744 = vmatpush1.bf16.msra.mxu0 %v4647
        %6745 = vmatprep.subr.bf16.mxu0 %v4652
        %6746 = vmatpush1.bf16.msra.mxu0 %v4651
        %6747 = vmatprep.subr.bf16.mxu0 %v4656
        %6748 = vmatpush1.bf16.msra.mxu0 %v4655
        %6749 = vmatprep.subr.bf16.mxu0 %v4660
        %6750 = vmatpush1.bf16.msra.mxu0 %v4659
        %6751 = vmatprep.subr.bf16.mxu0 %v4664
        %6752 = vmatpush1.bf16.msra.mxu0 %v4663
        %6753 = vmatprep.subr.bf16.mxu0 %v4668
        %6754 = vmatpush1.bf16.msra.mxu0 %v4667
        %6755 = vmatprep.mubr.bf16.mxu0 %v627
        %6756 = vmatmul.mubr.bf16.gmra.mrb[0].mxu0 %v626
        %v6757 = vpop.f32.mrb[0].mxu0
        %v6758 = vadd.f32 %v6717, %v6757
        %v6759 = vpop.f32.mrb[0].mxu0
        %v6760 = vadd.f32 %v6719, %v6759
        %v6761 = vpop.f32.mrb[0].mxu0
        %v6762 = vpop.f32.mrb[0].mxu0
        %6763 = vdwg.mxu0
        %6764 = vmatprep.subr.bf16.mxu0 %v4672
        %6765 = vmatpush1.bf16.msra.mxu0 %v4671
        %6766 = vmatprep.subr.bf16.mxu0 %v4676
        %6767 = vmatpush1.bf16.msra.mxu0 %v4675
        %6768 = vmatprep.subr.bf16.mxu0 %v4680
        %6769 = vmatpush1.bf16.msra.mxu0 %v4679
        %6770 = vmatprep.subr.bf16.mxu0 %v4684
        %6771 = vmatpush1.bf16.msra.mxu0 %v4683
        %6772 = vmatprep.subr.bf16.mxu0 %v4688
        %6773 = vmatpush1.bf16.msra.mxu0 %v4687
        %6774 = vmatprep.subr.bf16.mxu0 %v4692
        %6775 = vmatpush1.bf16.msra.mxu0 %v4691
        %6776 = vmatprep.subr.bf16.mxu0 %v4696
        %6777 = vmatpush1.bf16.msra.mxu0 %v4695
        %6778 = vmatprep.subr.bf16.mxu0 %v4700
        %6779 = vmatpush1.bf16.msra.mxu0 %v4699
        %6780 = vmatprep.subr.bf16.mxu0 %v4704
        %6781 = vmatpush1.bf16.msra.mxu0 %v4703
        %6782 = vmatprep.subr.bf16.mxu0 %v4708
        %6783 = vmatpush1.bf16.msra.mxu0 %v4707
        %6784 = vmatprep.subr.bf16.mxu0 %v4712
        %6785 = vmatpush1.bf16.msra.mxu0 %v4711
        %6786 = vmatprep.subr.bf16.mxu0 %v4716
        %6787 = vmatpush1.bf16.msra.mxu0 %v4715
        %6788 = vmatprep.subr.bf16.mxu0 %v4720
        %6789 = vmatpush1.bf16.msra.mxu0 %v4719
        %6790 = vmatprep.subr.bf16.mxu0 %v4724
        %6791 = vmatpush1.bf16.msra.mxu0 %v4723
        %6792 = vmatprep.subr.bf16.mxu0 %v4728
        %6793 = vmatpush1.bf16.msra.mxu0 %v4727
        %6794 = vmatprep.subr.bf16.mxu0 %v4732
        %6795 = vmatpush1.bf16.msra.mxu0 %v4731
        %6796 = vmatprep.mubr.bf16.mxu0 %v629
        %6797 = vmatmul.mubr.bf16.gmra.mrb[0].mxu0 %v628
        %v6798 = vpop.f32.mrb[0].mxu0
        %v6799 = vadd.f32 %v6758, %v6798
        %v6800 = vpop.f32.mrb[0].mxu0
        %v6801 = vadd.f32 %v6760, %v6800
        %v6802 = vpop.f32.mrb[0].mxu0
        %v6803 = vpop.f32.mrb[0].mxu0
        %6804 = vdwg.mxu0
        %6805 = vmatprep.subr.bf16.mxu0 %v4736
        %6806 = vmatpush1.bf16.msra.mxu0 %v4735
        %6807 = vmatprep.subr.bf16.mxu0 %v4740
        %6808 = vmatpush1.bf16.msra.mxu0 %v4739
        %6809 = vmatprep.subr.bf16.mxu0 %v4744
        %6810 = vmatpush1.bf16.msra.mxu0 %v4743
        %6811 = vmatprep.subr.bf16.mxu0 %v4748
        %6812 = vmatpush1.bf16.msra.mxu0 %v4747
        %6813 = vmatprep.subr.bf16.mxu0 %v4752
        %6814 = vmatpush1.bf16.msra.mxu0 %v4751
        %6815 = vmatprep.subr.bf16.mxu0 %v4756
        %6816 = vmatpush1.bf16.msra.mxu0 %v4755
        %6817 = vmatprep.subr.bf16.mxu0 %v4760
        %6818 = vmatpush1.bf16.msra.mxu0 %v4759
        %6819 = vmatprep.subr.bf16.mxu0 %v4764
        %6820 = vmatpush1.bf16.msra.mxu0 %v4763
        %6821 = vmatprep.subr.bf16.mxu0 %v4768
        %6822 = vmatpush1.bf16.msra.mxu0 %v4767
        %6823 = vmatprep.subr.bf16.mxu0 %v4772
        %6824 = vmatpush1.bf16.msra.mxu0 %v4771
        %6825 = vmatprep.subr.bf16.mxu0 %v4776
        %6826 = vmatpush1.bf16.msra.mxu0 %v4775
        %6827 = vmatprep.subr.bf16.mxu0 %v4780
        %6828 = vmatpush1.bf16.msra.mxu0 %v4779
        %6829 = vmatprep.subr.bf16.mxu0 %v4784
        %6830 = vmatpush1.bf16.msra.mxu0 %v4783
        %6831 = vmatprep.subr.bf16.mxu0 %v4788
        %6832 = vmatpush1.bf16.msra.mxu0 %v4787
        %6833 = vmatprep.subr.bf16.mxu0 %v4792
        %6834 = vmatpush1.bf16.msra.mxu0 %v4791
        %6835 = vmatprep.subr.bf16.mxu0 %v4796
        %6836 = vmatpush1.bf16.msra.mxu0 %v4795
        %6837 = vmatprep.mubr.bf16.mxu0 %v631
        %6838 = vmatmul.mubr.bf16.gmra.mrb[0].mxu0 %v630
        %v6839 = vpop.f32.mrb[0].mxu0
        %v6840 = vadd.f32 %v6799, %v6839
        %v6841 = vpop.f32.mrb[0].mxu0
        %v6842 = vadd.f32 %v6801, %v6841
        %v6843 = vpop.f32.mrb[0].mxu0
        %v6844 = vpop.f32.mrb[0].mxu0
        %6845 = vdwg.mxu0
        %6846 = vmatprep.subr.bf16.mxu0 %v4800
        %6847 = vmatpush1.bf16.msra.mxu0 %v4799
        %6848 = vmatprep.subr.bf16.mxu0 %v4804
        %6849 = vmatpush1.bf16.msra.mxu0 %v4803
        %6850 = vmatprep.subr.bf16.mxu0 %v4808
        %6851 = vmatpush1.bf16.msra.mxu0 %v4807
        %6852 = vmatprep.subr.bf16.mxu0 %v4812
        %6853 = vmatpush1.bf16.msra.mxu0 %v4811
        %6854 = vmatprep.subr.bf16.mxu0 %v4816
        %6855 = vmatpush1.bf16.msra.mxu0 %v4815
        %6856 = vmatprep.subr.bf16.mxu0 %v4820
        %6857 = vmatpush1.bf16.msra.mxu0 %v4819
        %6858 = vmatprep.subr.bf16.mxu0 %v4824
        %6859 = vmatpush1.bf16.msra.mxu0 %v4823
        %6860 = vmatprep.subr.bf16.mxu0 %v4828
        %6861 = vmatpush1.bf16.msra.mxu0 %v4827
        %6862 = vmatprep.subr.bf16.mxu0 %v4832
        %6863 = vmatpush1.bf16.msra.mxu0 %v4831
        %6864 = vmatprep.subr.bf16.mxu0 %v4836
        %6865 = vmatpush1.bf16.msra.mxu0 %v4835
        %6866 = vmatprep.subr.bf16.mxu0 %v4840
        %6867 = vmatpush1.bf16.msra.mxu0 %v4839
        %6868 = vmatprep.subr.bf16.mxu0 %v4844
        %6869 = vmatpush1.bf16.msra.mxu0 %v4843
        %6870 = vmatprep.subr.bf16.mxu0 %v4848
        %6871 = vmatpush1.bf16.msra.mxu0 %v4847
        %6872 = vmatprep.subr.bf16.mxu0 %v4852
        %6873 = vmatpush1.bf16.msra.mxu0 %v4851
        %6874 = vmatprep.subr.bf16.mxu0 %v4856
        %6875 = vmatpush1.bf16.msra.mxu0 %v4855
        %6876 = vmatprep.subr.bf16.mxu0 %v4860
        %6877 = vmatpush1.bf16.msra.mxu0 %v4859
        %6878 = vmatprep.mubr.bf16.mxu0 %v633
        %6879 = vmatmul.mubr.bf16.gmra.mrb[0].mxu0 %v632
        %v6880 = vpop.f32.mrb[0].mxu0
        %v6881 = vadd.f32 %v6840, %v6880
        %v6882 = vpop.f32.mrb[0].mxu0
        %v6883 = vadd.f32 %v6842, %v6882
        %v6884 = vpop.f32.mrb[0].mxu0
        %v6885 = vpop.f32.mrb[0].mxu0
        %6886 = vdwg.mxu0
        %6887 = vmatprep.subr.bf16.mxu0 %v4864
        %6888 = vmatpush1.bf16.msra.mxu0 %v4863
        %6889 = vmatprep.subr.bf16.mxu0 %v4868
        %6890 = vmatpush1.bf16.msra.mxu0 %v4867
        %6891 = vmatprep.subr.bf16.mxu0 %v4872
        %6892 = vmatpush1.bf16.msra.mxu0 %v4871
        %6893 = vmatprep.subr.bf16.mxu0 %v4876
        %6894 = vmatpush1.bf16.msra.mxu0 %v4875
        %6895 = vmatprep.subr.bf16.mxu0 %v4880
        %6896 = vmatpush1.bf16.msra.mxu0 %v4879
        %6897 = vmatprep.subr.bf16.mxu0 %v4884
        %6898 = vmatpush1.bf16.msra.mxu0 %v4883
        %6899 = vmatprep.subr.bf16.mxu0 %v4888
        %6900 = vmatpush1.bf16.msra.mxu0 %v4887
        %6901 = vmatprep.subr.bf16.mxu0 %v4892
        %6902 = vmatpush1.bf16.msra.mxu0 %v4891
        %6903 = vmatprep.subr.bf16.mxu0 %v4896
        %6904 = vmatpush1.bf16.msra.mxu0 %v4895
        %6905 = vmatprep.subr.bf16.mxu0 %v4900
        %6906 = vmatpush1.bf16.msra.mxu0 %v4899
        %6907 = vmatprep.subr.bf16.mxu0 %v4904
        %6908 = vmatpush1.bf16.msra.mxu0 %v4903
        %6909 = vmatprep.subr.bf16.mxu0 %v4908
        %6910 = vmatpush1.bf16.msra.mxu0 %v4907
        %6911 = vmatprep.subr.bf16.mxu0 %v4912
        %6912 = vmatpush1.bf16.msra.mxu0 %v4911
        %6913 = vmatprep.subr.bf16.mxu0 %v4916
        %6914 = vmatpush1.bf16.msra.mxu0 %v4915
        %6915 = vmatprep.subr.bf16.mxu0 %v4920
        %6916 = vmatpush1.bf16.msra.mxu0 %v4919
        %6917 = vmatprep.subr.bf16.mxu0 %v4924
        %6918 = vmatpush1.bf16.msra.mxu0 %v4923
        %6919 = vmatprep.mubr.bf16.mxu0 %v635
        %6920 = vmatmul.mubr.bf16.gmra.mrb[0].mxu0 %v634
        %v6921 = vpop.f32.mrb[0].mxu0
        %v6922 = vadd.f32 %v6881, %v6921
        %v6923 = vpop.f32.mrb[0].mxu0
        %v6924 = vadd.f32 %v6883, %v6923
        %v6925 = vpop.f32.mrb[0].mxu0
        %v6926 = vpop.f32.mrb[0].mxu0
        %6927 = vdwg.mxu0
        %6928 = vmatprep.subr.bf16.mxu0 %v4928
        %6929 = vmatpush1.bf16.msra.mxu0 %v4927
        %6930 = vmatprep.subr.bf16.mxu0 %v4932
        %6931 = vmatpush1.bf16.msra.mxu0 %v4931
        %6932 = vmatprep.subr.bf16.mxu0 %v4936
        %6933 = vmatpush1.bf16.msra.mxu0 %v4935
        %6934 = vmatprep.subr.bf16.mxu0 %v4940
        %6935 = vmatpush1.bf16.msra.mxu0 %v4939
        %6936 = vmatprep.subr.bf16.mxu0 %v4944
        %6937 = vmatpush1.bf16.msra.mxu0 %v4943
        %6938 = vmatprep.subr.bf16.mxu0 %v4948
        %6939 = vmatpush1.bf16.msra.mxu0 %v4947
        %6940 = vmatprep.subr.bf16.mxu0 %v4952
        %6941 = vmatpush1.bf16.msra.mxu0 %v4951
        %6942 = vmatprep.subr.bf16.mxu0 %v4956
        %6943 = vmatpush1.bf16.msra.mxu0 %v4955
        %6944 = vmatprep.subr.bf16.mxu0 0
        %6945 = vmatpush1.bf16.msra.mxu0 0
        %6946 = vmatprep.subr.bf16.mxu0 0
        %6947 = vmatpush1.bf16.msra.mxu0 0
        %6948 = vmatprep.subr.bf16.mxu0 0
        %6949 = vmatpush1.bf16.msra.mxu0 0
        %6950 = vmatprep.subr.bf16.mxu0 0
        %6951 = vmatpush1.bf16.msra.mxu0 0
        %6952 = vmatprep.subr.bf16.mxu0 0
        %6953 = vmatpush1.bf16.msra.mxu0 0
        %6954 = vmatprep.subr.bf16.mxu0 0
        %6955 = vmatpush1.bf16.msra.mxu0 0
        %6956 = vmatprep.subr.bf16.mxu0 0
        %6957 = vmatpush1.bf16.msra.mxu0 0
        %6958 = vmatprep.subr.bf16.mxu0 0
        %6959 = vmatpush1.bf16.msra.mxu0 0
        %6960 = vmatprep.mubr.bf16.mxu0 0
        %6961 = vmatmul.mubr.bf16.gmra.mrb[0].mxu0 %v636
        %v6962 = vpop.f32.mrb[0].mxu0
        %v6963 = vadd.f32 %v6922, %v6962
        %v6964 = vpop.f32.mrb[0].mxu0
        %v6965 = vadd.f32 %v6924, %v6964
        %v6966 = vpop.f32.mrb[0].mxu0
        %v6967 = vpop.f32.mrb[0].mxu0
        %6968 = vdwg.mxu0
        %v6973 = vcombine.low %v6389, %v6391
        %v6974 = vcombine.low %v6963, %v6965
        %v6976 = vunpack.c.l.s4 1983009808
        %v6977 = vunpack.c.0.s8 %v6976
        %v6978 = vlaneseq
        %v6979 = vshrl.u32 %v6978, 7
        %v6980 = vsub.s32 %v6977, %v6979
        %v6981 = vrot.slane %v6973, %v6980
        %v6983 = vunpack.c.l.s4 1983009808
        %v6984 = vunpack.c.0.s8 %v6983
        %v6985 = vlaneseq
        %v6986 = vshrl.u32 %v6985, 7
        %v6987 = vsub.s32 %v6984, %v6986
        %v6988 = vrot.slane %v6974, %v6987
        %v6989 = vcombine.low %v6981, %v6988
        %v6991 = vadd.f32 %v450, %v6989
        %6992 = vst [vmem:[#allocation2] sm:$0xff] %v6991
        %p6993 = scmp.eq.s32.totalorder %s29, 5
        // Predicated region
        $region89: #{fc_forward.1} parent=55 // pred_check
          %p6994 = pneg %p6993
        $region90: #{fc_forward.1} parent=55 // pred_check_branch
          %6996 = sbr.rel (%p6994) target = $region92
        $region91: #{fc_forward.1} parent=55 // pred_region
          %v6997 = vld [vmem:[#allocation2] sm:$0xff]
          %v6998 = vld [vmem:[#allocation8] sm:$0xf]
          %v7000 = vlaneseq
          %v7001 = vshrl.u32 %v7000, 7
          %v7002 = vsub.s32 0, %v7001
          %v7003 = vrot.slane %v6998, %v7002
          %v7004 = vlaneseq
          %v7005 = vshrl.u32 %v7004, 7
          %v7006 = vsub.s32 1, %v7005
          %v7007 = vrot.slane %v6998, %v7006
          %v7008 = vlaneseq
          %v7009 = vshrl.u32 %v7008, 7
          %v7010 = vsub.s32 2, %v7009
          %v7011 = vrot.slane %v6998, %v7010
          %v7012 = vlaneseq
          %v7013 = vshrl.u32 %v7012, 7
          %v7014 = vsub.s32 3, %v7013
          %v7015 = vrot.slane %v6998, %v7014
          %v7016 = vcombine.low %v7003, %v7007
          %v7017 = vcombine.low %v7011, %v7015
          %v7019 = vunpack.c.l.s4 1983009808
          %v7020 = vunpack.c.0.s8 %v7019
          %v7021 = vlaneseq
          %v7022 = vshrl.u32 %v7021, 7
          %v7023 = vsub.s32 %v7020, %v7022
          %v7024 = vrot.slane %v7016, %v7023
          %v7026 = vunpack.c.l.s4 1983009808
          %v7027 = vunpack.c.0.s8 %v7026
          %v7028 = vlaneseq
          %v7029 = vshrl.u32 %v7028, 7
          %v7030 = vsub.s32 %v7027, %v7029
          %v7031 = vrot.slane %v7017, %v7030
          %v7032 = vcombine.low %v7024, %v7031
          %v7034 = vadd.f32 %v6997, %v7032
          %v7035 = vmax.f32 %v7034, 0.0
          %v7036 = vld [vmem:[#allocation9] sm:$0xff]
          %v7037 = vld [vmem:[#allocation9 + $0x8] sm:$0xff]
          %v7038 = vld [vmem:[#allocation9 + $0x10] sm:$0xff]
          %v7039 = vld [vmem:[#allocation9 + $0x18] sm:$0xff]
          %v7040 = vld [vmem:[#allocation9 + $0x20] sm:$0xff]
          %v7041 = vld [vmem:[#allocation9 + $0x28] sm:$0xff]
          %v7042 = vld [vmem:[#allocation9 + $0x30] sm:$0xff]
          %v7043 = vld [vmem:[#allocation9 + $0x38] sm:$0xff]
          %v7044 = vld [vmem:[#allocation9 + $0x40] sm:$0xff]
          %v7045 = vld [vmem:[#allocation9 + $0x48] sm:$0xff]
          %v7046 = vld [vmem:[#allocation9 + $0x50] sm:$0xff]
          %v7047 = vld [vmem:[#allocation9 + $0x58] sm:$0xff]
          %v7048 = vld [vmem:[#allocation9 + $0x60] sm:$0xff]
          %v7049 = vld [vmem:[#allocation9 + $0x68] sm:$0xff]
          %v7050 = vld [vmem:[#allocation9 + $0x70] sm:$0xff]
          %v7051 = vld [vmem:[#allocation9 + $0x78] sm:$0xff]
          %v7052 = vld [vmem:[#allocation9 + $0x80] sm:$0xff]
          %v7053 = vld [vmem:[#allocation9 + $0x88] sm:$0xff]
          %v7054 = vld [vmem:[#allocation9 + $0x90] sm:$0xff]
          %v7055 = vld [vmem:[#allocation9 + $0x98] sm:$0xff]
          %v7056 = vld [vmem:[#allocation9 + $0xa0] sm:$0xff]
          %v7057 = vld [vmem:[#allocation9 + $0xa8] sm:$0xff]
          %v7058 = vld [vmem:[#allocation9 + $0xb0] sm:$0xff]
          %v7059 = vld [vmem:[#allocation9 + $0xb8] sm:$0xff]
          %v7060 = vld [vmem:[#allocation9 + $0xc0] sm:$0xff]
          %v7061 = vld [vmem:[#allocation9 + $0xc8] sm:$0xff]
          %v7062 = vld [vmem:[#allocation9 + $0xd0] sm:$0xff]
          %v7063 = vld [vmem:[#allocation9 + $0xd8] sm:$0xff]
          %v7064 = vld [vmem:[#allocation9 + $0xe0] sm:$0xff]
          %v7065 = vld [vmem:[#allocation9 + $0xe8] sm:$0xff]
          %v7066 = vld [vmem:[#allocation9 + $0xf0] sm:$0xff]
          %v7067 = vld [vmem:[#allocation9 + $0xf8] sm:$0xff]
          %v7068 = vld [vmem:[#allocation9 + $0x100] sm:$0xff]
          %v7069 = vld [vmem:[#allocation9 + $0x108] sm:$0xff]
          %v7070 = vld [vmem:[#allocation9 + $0x110] sm:$0xff]
          %v7071 = vld [vmem:[#allocation9 + $0x118] sm:$0xff]
          %v7072 = vld [vmem:[#allocation9 + $0x120] sm:$0xff]
          %v7073 = vld [vmem:[#allocation9 + $0x128] sm:$0xff]
          %v7074 = vld [vmem:[#allocation9 + $0x130] sm:$0xff]
          %v7075 = vld [vmem:[#allocation9 + $0x138] sm:$0xff]
          %v7076 = vld [vmem:[#allocation9 + $0x140] sm:$0xff]
          %v7077 = vld [vmem:[#allocation9 + $0x148] sm:$0xff]
          %v7078 = vld [vmem:[#allocation9 + $0x150] sm:$0xff]
          %v7079 = vld [vmem:[#allocation9 + $0x158] sm:$0xff]
          %v7080 = vld [vmem:[#allocation9 + $0x160] sm:$0xff]
          %v7081 = vld [vmem:[#allocation9 + $0x168] sm:$0xff]
          %v7082 = vld [vmem:[#allocation9 + $0x170] sm:$0xff]
          %v7083 = vld [vmem:[#allocation9 + $0x178] sm:$0xff]
          %v7084 = vld [vmem:[#allocation9 + $0x180] sm:$0xff]
          %v7085 = vld [vmem:[#allocation9 + $0x188] sm:$0xff]
          %v7086 = vld [vmem:[#allocation9 + $0x190] sm:$0xff]
          %v7087 = vld [vmem:[#allocation9 + $0x198] sm:$0xff]
          %v7088 = vld [vmem:[#allocation9 + $0x1a0] sm:$0xff]
          %v7089 = vld [vmem:[#allocation9 + $0x1a8] sm:$0xff]
          %v7090 = vld [vmem:[#allocation9 + $0x1b0] sm:$0xff]
          %v7091 = vld [vmem:[#allocation9 + $0x1b8] sm:$0xff]
          %v7092 = vld [vmem:[#allocation9 + $0x1c0] sm:$0xff]
          %v7093 = vld [vmem:[#allocation9 + $0x1c8] sm:$0xff]
          %v7094 = vld [vmem:[#allocation9 + $0x1d0] sm:$0xff]
          %v7095 = vld [vmem:[#allocation9 + $0x1d8] sm:$0xff]
          %v7096 = vld [vmem:[#allocation9 + $0x1e0] sm:$0xff]
          %v7097 = vld [vmem:[#allocation9 + $0x1e8] sm:$0xff]
          %v7098 = vld [vmem:[#allocation9 + $0x1f0] sm:$0xff]
          %v7099 = vld [vmem:[#allocation9 + $0x1f8] sm:$0xff]
          %v7100 = vld [vmem:[#allocation11] sm:$0x1]
          %v7102 = vlaneseq
          %v7103 = vshrl.u32 %v7102, 7
          %v7104 = vsub.s32 0, %v7103
          %v7105 = vrot.slane %v7100, %v7104
          %v7108 = vcombine.high %v7035, %v7035
          %v7110 = vunpack.c.l.s4 1983009808
          %v7111 = vunpack.c.0.s8 %v7110
          %v7112 = vlaneseq
          %v7113 = vshrl.u32 %v7112, 7
          %v7114 = vsub.s32 %v7111, %v7113
          %v7115 = vrot.slane %v7035, %v7114
          %v7117 = vunpack.c.l.s4 1983009808
          %v7118 = vunpack.c.0.s8 %v7117
          %v7119 = vlaneseq
          %v7120 = vshrl.u32 %v7119, 7
          %v7121 = vsub.s32 %v7118, %v7120
          %v7122 = vrot.slane %v7108, %v7121
          %v7123 = vcombine.high %v7115, %v7115
          %v7124 = vcombine.high %v7122, %v7122
          %7129 = vmatprep.subr.mxu0 0.0
          %7130 = vmatpush1.msra.mxu0 %v7036
          %7131 = vmatprep.subr.mxu0 0.0
          %7132 = vmatpush1.msra.mxu0 %v7037
          %7133 = vmatprep.subr.mxu0 0.0
          %7134 = vmatpush1.msra.mxu0 %v7038
          %7135 = vmatprep.subr.mxu0 0.0
          %7136 = vmatpush1.msra.mxu0 %v7039
          %7137 = vmatprep.subr.mxu0 0.0
          %7138 = vmatpush1.msra.mxu0 %v7040
          %7139 = vmatprep.subr.mxu0 0.0
          %7140 = vmatpush1.msra.mxu0 %v7041
          %7141 = vmatprep.subr.mxu0 0.0
          %7142 = vmatpush1.msra.mxu0 %v7042
          %7143 = vmatprep.subr.mxu0 0.0
          %7144 = vmatpush1.msra.mxu0 %v7043
          %7145 = vmatprep.subr.mxu0 0.0
          %7146 = vmatpush1.msra.mxu0 %v7044
          %7147 = vmatprep.subr.mxu0 0.0
          %7148 = vmatpush1.msra.mxu0 %v7045
          %7149 = vmatprep.subr.mxu0 0.0
          %7150 = vmatpush1.msra.mxu0 %v7046
          %7151 = vmatprep.subr.mxu0 0.0
          %7152 = vmatpush1.msra.mxu0 %v7047
          %7153 = vmatprep.subr.mxu0 0.0
          %7154 = vmatpush1.msra.mxu0 %v7048
          %7155 = vmatprep.subr.mxu0 0.0
          %7156 = vmatpush1.msra.mxu0 %v7049
          %7157 = vmatprep.subr.mxu0 0.0
          %7158 = vmatpush1.msra.mxu0 %v7050
          %7159 = vmatprep.subr.mxu0 0.0
          %7160 = vmatpush1.msra.mxu0 %v7051
          %7161 = vmatprep.subr.mxu0 0.0
          %7162 = vmatpush1.msra.mxu0 %v7052
          %7163 = vmatprep.subr.mxu0 0.0
          %7164 = vmatpush1.msra.mxu0 %v7053
          %7165 = vmatprep.subr.mxu0 0.0
          %7166 = vmatpush1.msra.mxu0 %v7054
          %7167 = vmatprep.subr.mxu0 0.0
          %7168 = vmatpush1.msra.mxu0 %v7055
          %7169 = vmatprep.subr.mxu0 0.0
          %7170 = vmatpush1.msra.mxu0 %v7056
          %7171 = vmatprep.subr.mxu0 0.0
          %7172 = vmatpush1.msra.mxu0 %v7057
          %7173 = vmatprep.subr.mxu0 0.0
          %7174 = vmatpush1.msra.mxu0 %v7058
          %7175 = vmatprep.subr.mxu0 0.0
          %7176 = vmatpush1.msra.mxu0 %v7059
          %7177 = vmatprep.subr.mxu0 0.0
          %7178 = vmatpush1.msra.mxu0 %v7060
          %7179 = vmatprep.subr.mxu0 0.0
          %7180 = vmatpush1.msra.mxu0 %v7061
          %7181 = vmatprep.subr.mxu0 0.0
          %7182 = vmatpush1.msra.mxu0 %v7062
          %7183 = vmatprep.subr.mxu0 0.0
          %7184 = vmatpush1.msra.mxu0 %v7063
          %7185 = vmatprep.subr.mxu0 0.0
          %7186 = vmatpush1.msra.mxu0 %v7064
          %7187 = vmatprep.subr.mxu0 0.0
          %7188 = vmatpush1.msra.mxu0 %v7065
          %7189 = vmatprep.subr.mxu0 0.0
          %7190 = vmatpush1.msra.mxu0 %v7066
          %7191 = vmatprep.subr.mxu0 0.0
          %7192 = vmatpush1.msra.mxu0 %v7067
          %7193 = vmatprep.mubr.f32.mxu0 %v7123
          %7194 = vmatmul.mubr.f32.gmra.mrb[0].mxu0 %v7115
          %v7195 = vpop.f32.mrb[0].mxu0
          %v7196 = vadd.f32 %v7105, %v7195
          %v7197 = vpop.f32.mrb[0].mxu0
          %7198 = vdwg.mxu0
          %7199 = vmatprep.subr.mxu0 0.0
          %7200 = vmatpush1.msra.mxu0 %v7068
          %7201 = vmatprep.subr.mxu0 0.0
          %7202 = vmatpush1.msra.mxu0 %v7069
          %7203 = vmatprep.subr.mxu0 0.0
          %7204 = vmatpush1.msra.mxu0 %v7070
          %7205 = vmatprep.subr.mxu0 0.0
          %7206 = vmatpush1.msra.mxu0 %v7071
          %7207 = vmatprep.subr.mxu0 0.0
          %7208 = vmatpush1.msra.mxu0 %v7072
          %7209 = vmatprep.subr.mxu0 0.0
          %7210 = vmatpush1.msra.mxu0 %v7073
          %7211 = vmatprep.subr.mxu0 0.0
          %7212 = vmatpush1.msra.mxu0 %v7074
          %7213 = vmatprep.subr.mxu0 0.0
          %7214 = vmatpush1.msra.mxu0 %v7075
          %7215 = vmatprep.subr.mxu0 0.0
          %7216 = vmatpush1.msra.mxu0 %v7076
          %7217 = vmatprep.subr.mxu0 0.0
          %7218 = vmatpush1.msra.mxu0 %v7077
          %7219 = vmatprep.subr.mxu0 0.0
          %7220 = vmatpush1.msra.mxu0 %v7078
          %7221 = vmatprep.subr.mxu0 0.0
          %7222 = vmatpush1.msra.mxu0 %v7079
          %7223 = vmatprep.subr.mxu0 0.0
          %7224 = vmatpush1.msra.mxu0 %v7080
          %7225 = vmatprep.subr.mxu0 0.0
          %7226 = vmatpush1.msra.mxu0 %v7081
          %7227 = vmatprep.subr.mxu0 0.0
          %7228 = vmatpush1.msra.mxu0 %v7082
          %7229 = vmatprep.subr.mxu0 0.0
          %7230 = vmatpush1.msra.mxu0 %v7083
          %7231 = vmatprep.subr.mxu0 0.0
          %7232 = vmatpush1.msra.mxu0 %v7084
          %7233 = vmatprep.subr.mxu0 0.0
          %7234 = vmatpush1.msra.mxu0 %v7085
          %7235 = vmatprep.subr.mxu0 0.0
          %7236 = vmatpush1.msra.mxu0 %v7086
          %7237 = vmatprep.subr.mxu0 0.0
          %7238 = vmatpush1.msra.mxu0 %v7087
          %7239 = vmatprep.subr.mxu0 0.0
          %7240 = vmatpush1.msra.mxu0 %v7088
          %7241 = vmatprep.subr.mxu0 0.0
          %7242 = vmatpush1.msra.mxu0 %v7089
          %7243 = vmatprep.subr.mxu0 0.0
          %7244 = vmatpush1.msra.mxu0 %v7090
          %7245 = vmatprep.subr.mxu0 0.0
          %7246 = vmatpush1.msra.mxu0 %v7091
          %7247 = vmatprep.subr.mxu0 0.0
          %7248 = vmatpush1.msra.mxu0 %v7092
          %7249 = vmatprep.subr.mxu0 0.0
          %7250 = vmatpush1.msra.mxu0 %v7093
          %7251 = vmatprep.subr.mxu0 0.0
          %7252 = vmatpush1.msra.mxu0 %v7094
          %7253 = vmatprep.subr.mxu0 0.0
          %7254 = vmatpush1.msra.mxu0 %v7095
          %7255 = vmatprep.subr.mxu0 0.0
          %7256 = vmatpush1.msra.mxu0 %v7096
          %7257 = vmatprep.subr.mxu0 0.0
          %7258 = vmatpush1.msra.mxu0 %v7097
          %7259 = vmatprep.subr.mxu0 0.0
          %7260 = vmatpush1.msra.mxu0 %v7098
          %7261 = vmatprep.subr.mxu0 0.0
          %7262 = vmatpush1.msra.mxu0 %v7099
          %7263 = vmatprep.mubr.f32.mxu0 %v7124
          %7264 = vmatmul.mubr.f32.gmra.mrb[0].mxu0 %v7122
          %v7265 = vpop.f32.mrb[0].mxu0
          %v7266 = vadd.f32 %v7196, %v7265
          %v7267 = vpop.f32.mrb[0].mxu0
          %7268 = vdwg.mxu0
          %v7269 = vmax.f32 %v7266, 0.0
          %v7270 = vld [vmem:[%s5] sm:$0xff]
          %v7271 = vld [vmem:[%s5 + $0x8] sm:$0xff]
          %v7272 = vld [vmem:[%s5 + $0x10] sm:$0xff]
          %v7273 = vld [vmem:[%s5 + $0x18] sm:$0xff]
          %v7274 = vld [vmem:[%s5 + $0x20] sm:$0xff]
          %v7275 = vld [vmem:[%s5 + $0x28] sm:$0xff]
          %v7276 = vld [vmem:[%s5 + $0x30] sm:$0xff]
          %v7277 = vld [vmem:[%s5 + $0x38] sm:$0xff]
          %v7278 = vld [vmem:[%s5 + $0x40] sm:$0xff]
          %v7279 = vld [vmem:[%s5 + $0x48] sm:$0xff]
          %v7280 = vld [vmem:[%s5 + $0x50] sm:$0xff]
          %v7281 = vld [vmem:[%s5 + $0x58] sm:$0xff]
          %v7282 = vld [vmem:[%s5 + $0x60] sm:$0xff]
          %v7283 = vld [vmem:[%s5 + $0x68] sm:$0xff]
          %v7284 = vld [vmem:[%s5 + $0x70] sm:$0xff]
          %v7285 = vld [vmem:[%s5 + $0x78] sm:$0xff]
          %v7286 = vld [vmem:[#allocation12] sm:$0x1]
          %v7288 = vlaneseq
          %v7289 = vshrl.u32 %v7288, 7
          %v7290 = vsub.s32 0, %v7289
          %v7291 = vrot.slane %v7286, %v7290
          %7293 = vmatprep.subr.mxu0 0.0
          %7294 = vmatpush1.msra.mxu0 %v7270
          %7295 = vmatprep.subr.mxu0 0.0
          %7296 = vmatpush1.msra.mxu0 %v7271
          %7297 = vmatprep.subr.mxu0 0.0
          %7298 = vmatpush1.msra.mxu0 %v7272
          %7299 = vmatprep.subr.mxu0 0.0
          %7300 = vmatpush1.msra.mxu0 %v7273
          %7301 = vmatprep.subr.mxu0 0.0
          %7302 = vmatpush1.msra.mxu0 %v7274
          %7303 = vmatprep.subr.mxu0 0.0
          %7304 = vmatpush1.msra.mxu0 %v7275
          %7305 = vmatprep.subr.mxu0 0.0
          %7306 = vmatpush1.msra.mxu0 %v7276
          %7307 = vmatprep.subr.mxu0 0.0
          %7308 = vmatpush1.msra.mxu0 %v7277
          %7309 = vmatprep.subr.mxu0 0.0
          %7310 = vmatpush1.msra.mxu0 %v7278
          %7311 = vmatprep.subr.mxu0 0.0
          %7312 = vmatpush1.msra.mxu0 %v7279
          %7313 = vmatprep.subr.mxu0 0.0
          %7314 = vmatpush1.msra.mxu0 %v7280
          %7315 = vmatprep.subr.mxu0 0.0
          %7316 = vmatpush1.msra.mxu0 %v7281
          %7317 = vmatprep.subr.mxu0 0.0
          %7318 = vmatpush1.msra.mxu0 %v7282
          %7319 = vmatprep.subr.mxu0 0.0
          %7320 = vmatpush1.msra.mxu0 %v7283
          %7321 = vmatprep.subr.mxu0 0.0
          %7322 = vmatpush1.msra.mxu0 %v7284
          %7323 = vmatprep.subr.mxu0 0.0
          %7324 = vmatpush1.msra.mxu0 %v7285
          %7325 = vmatprep.subr.mxu0 0.0
          %7326 = vmatpush1.msra.mxu0 0.0
          %7327 = vmatprep.subr.mxu0 0.0
          %7328 = vmatpush1.msra.mxu0 0.0
          %7329 = vmatprep.subr.mxu0 0.0
          %7330 = vmatpush1.msra.mxu0 0.0
          %7331 = vmatprep.subr.mxu0 0.0
          %7332 = vmatpush1.msra.mxu0 0.0
          %7333 = vmatprep.subr.mxu0 0.0
          %7334 = vmatpush1.msra.mxu0 0.0
          %7335 = vmatprep.subr.mxu0 0.0
          %7336 = vmatpush1.msra.mxu0 0.0
          %7337 = vmatprep.subr.mxu0 0.0
          %7338 = vmatpush1.msra.mxu0 0.0
          %7339 = vmatprep.subr.mxu0 0.0
          %7340 = vmatpush1.msra.mxu0 0.0
          %7341 = vmatprep.subr.mxu0 0.0
          %7342 = vmatpush1.msra.mxu0 0.0
          %7343 = vmatprep.subr.mxu0 0.0
          %7344 = vmatpush1.msra.mxu0 0.0
          %7345 = vmatprep.subr.mxu0 0.0
          %7346 = vmatpush1.msra.mxu0 0.0
          %7347 = vmatprep.subr.mxu0 0.0
          %7348 = vmatpush1.msra.mxu0 0.0
          %7349 = vmatprep.subr.mxu0 0.0
          %7350 = vmatpush1.msra.mxu0 0.0
          %7351 = vmatprep.subr.mxu0 0.0
          %7352 = vmatpush1.msra.mxu0 0.0
          %7353 = vmatprep.subr.mxu0 0.0
          %7354 = vmatpush1.msra.mxu0 0.0
          %7355 = vmatprep.subr.mxu0 0.0
          %7356 = vmatpush1.msra.mxu0 0.0
          %7357 = vmatprep.mubr.f32.mxu0 0.0
          %7358 = vmatmul.mubr.f32.gmra.mrb[0].mxu0 %v7269
          %v7359 = vpop.f32.mrb[0].mxu0
          %v7360 = vadd.f32 %v7291, %v7359
          %v7361 = vpop.f32.mrb[0].mxu0
          %7362 = vdwg.mxu0
          %v7363 = vmax.f32 %v7360, 0.0
          %v7364 = vld [vmem:[%s7] sm:$0xff]
          %v7365 = vld [vmem:[%s7 + $0x8] sm:$0xff]
          %v7366 = vld [vmem:[%s7 + $0x10] sm:$0xff]
          %v7367 = vld [vmem:[%s7 + $0x18] sm:$0xff]
          %v7368 = vld [vmem:[#allocation14] sm:$0x1]
          %v7370 = vlaneseq
          %v7371 = vshrl.u32 %v7370, 7
          %v7372 = vsub.s32 0, %v7371
          %v7373 = vrot.slane %v7368, %v7372
          %vm7375 = vcmask 261120
          %v7377 = vsel %vm7375, %v7363, 0
          %7379 = vmatprep.subr.mxu0 0.0
          %7380 = vmatpush1.msra.mxu0 %v7364
          %7381 = vmatprep.subr.mxu0 0.0
          %7382 = vmatpush1.msra.mxu0 %v7365
          %7383 = vmatprep.subr.mxu0 0.0
          %7384 = vmatpush1.msra.mxu0 %v7366
          %7385 = vmatprep.subr.mxu0 0.0
          %7386 = vmatpush1.msra.mxu0 %v7367
          %7387 = vmatprep.subr.mxu0 0.0
          %7388 = vmatpush1.msra.mxu0 0.0
          %7389 = vmatprep.subr.mxu0 0.0
          %7390 = vmatpush1.msra.mxu0 0.0
          %7391 = vmatprep.subr.mxu0 0.0
          %7392 = vmatpush1.msra.mxu0 0.0
          %7393 = vmatprep.subr.mxu0 0.0
          %7394 = vmatpush1.msra.mxu0 0.0
          %7395 = vmatprep.subr.mxu0 0.0
          %7396 = vmatpush1.msra.mxu0 0.0
          %7397 = vmatprep.subr.mxu0 0.0
          %7398 = vmatpush1.msra.mxu0 0.0
          %7399 = vmatprep.subr.mxu0 0.0
          %7400 = vmatpush1.msra.mxu0 0.0
          %7401 = vmatprep.subr.mxu0 0.0
          %7402 = vmatpush1.msra.mxu0 0.0
          %7403 = vmatprep.subr.mxu0 0.0
          %7404 = vmatpush1.msra.mxu0 0.0
          %7405 = vmatprep.subr.mxu0 0.0
          %7406 = vmatpush1.msra.mxu0 0.0
          %7407 = vmatprep.subr.mxu0 0.0
          %7408 = vmatpush1.msra.mxu0 0.0
          %7409 = vmatprep.subr.mxu0 0.0
          %7410 = vmatpush1.msra.mxu0 0.0
          %7411 = vmatprep.subr.mxu0 0.0
          %7412 = vmatpush1.msra.mxu0 0.0
          %7413 = vmatprep.subr.mxu0 0.0
          %7414 = vmatpush1.msra.mxu0 0.0
          %7415 = vmatprep.subr.mxu0 0.0
          %7416 = vmatpush1.msra.mxu0 0.0
          %7417 = vmatprep.subr.mxu0 0.0
          %7418 = vmatpush1.msra.mxu0 0.0
          %7419 = vmatprep.subr.mxu0 0.0
          %7420 = vmatpush1.msra.mxu0 0.0
          %7421 = vmatprep.subr.mxu0 0.0
          %7422 = vmatpush1.msra.mxu0 0.0
          %7423 = vmatprep.subr.mxu0 0.0
          %7424 = vmatpush1.msra.mxu0 0.0
          %7425 = vmatprep.subr.mxu0 0.0
          %7426 = vmatpush1.msra.mxu0 0.0
          %7427 = vmatprep.subr.mxu0 0.0
          %7428 = vmatpush1.msra.mxu0 0.0
          %7429 = vmatprep.subr.mxu0 0.0
          %7430 = vmatpush1.msra.mxu0 0.0
          %7431 = vmatprep.subr.mxu0 0.0
          %7432 = vmatpush1.msra.mxu0 0.0
          %7433 = vmatprep.subr.mxu0 0.0
          %7434 = vmatpush1.msra.mxu0 0.0
          %7435 = vmatprep.subr.mxu0 0.0
          %7436 = vmatpush1.msra.mxu0 0.0
          %7437 = vmatprep.subr.mxu0 0.0
          %7438 = vmatpush1.msra.mxu0 0.0
          %7439 = vmatprep.subr.mxu0 0.0
          %7440 = vmatpush1.msra.mxu0 0.0
          %7441 = vmatprep.subr.mxu0 0.0
          %7442 = vmatpush1.msra.mxu0 0.0
          %7443 = vmatprep.mubr.f32.mxu0 0.0
          %7444 = vmatmul.mubr.f32.gmra.mrb[0].mxu0 %v7377
          %v7445 = vpop.f32.mrb[0].mxu0
          %v7446 = vadd.f32 %v7373, %v7445
          %v7447 = vpop.f32.mrb[0].mxu0
          %7448 = vdwg.mxu0
          %vm7449 = vcmask 17408
          %7450 = vst.msk [vmem:[#allocation15] sm:$0x3] %vm7449, %v7446
        $region92: #{fc_forward.1} parent=55 // pred_fallthru
          _
        // Predicated region
        $region93: #{fc_forward.1} parent=55 // pred_check
          %p7451 = pneg %p241
        $region94: #{fc_forward.1} parent=55 // pred_check_branch
          %7453 = sbr.rel (%p7451) target = $region96
        $region95: #{fc_forward.1} parent=55 // pred_region
          %s7455 = ssub.s32 32, 32
          %7456 = vsyncadd [#allocation5], %s7455
          %s7458 = sshll.u32 [#allocation15], 4
          %s7459 = int_to_ptr.vmem [resolvable:$true] %s7458
          %7461 = dma.vmem_to_hbm [thread:$0]  %s7459, 32, %s9, [#allocation5]
        $region96: #{fc_forward.1} parent=55 // pred_fallthru
          _
        // Predicated region
        $region97: #{fc_forward.1} parent=55 // pred_check
          %p7462 = pneg %p241
        $region98: #{fc_forward.1} parent=55 // pred_check_branch
          %7464 = sbr.rel (%p7462) target = $region100
        $region99: #{fc_forward.1} parent=55 // pred_region
          %7465 = dma.done [#allocation5], 32
        $region100: #{fc_forward.1} parent=55 // pred_fallthru
          _
      $region56: #{fc_forward.1} parent=5 // pred_fallthru
        _
      %p7466 = scmp.le.s32.totalorder 2, %s24
      // Predicated region
      $region101: #{fc_forward.1} parent=5 // pred_check
        %p7467 = pneg %p7466
      $region102: #{fc_forward.1} parent=5 // pred_check_branch
        %7469 = sbr.rel (%p7467) target = $region104
      $region103: #{fc_forward.1} parent=5 // pred_region
        %s7470 = ssub.s32 %s24, 2
      $region104: #{fc_forward.1} parent=5 // pred_fallthru
        _
    $region6: #{fc_forward.1} parent=1 // loop_footer
      %s28 = sadd.s32 1, %s24
    $region7: #{fc_forward.1} parent=1 // loop_footer_branch
      %23 = sbr.rel target = $region3
    $region8: #{fc_forward.1} parent=1 // loop_exit
      _
    %7471 = vsyncpa [#allocation4], 1
    %s7472 = scalar_lea.sflag [#allocation4], 1
    %7473 = vsyncpa %s7472, 1
    %7474 = vsyncpa [#allocation7], 1
    %s7475 = scalar_lea.sflag [#allocation7], 1
    %7476 = vsyncpa %s7475, 1
    %7477 = vsyncpa [#allocation10], 1
    %7478 = vsyncpa [#allocation13], 1
    %7479 = vsyncpa [#allocation5], 1
    %s7480 = scalar_lea.sflag [#allocation5], 1
    %7481 = vsyncpa %s7480, 1

</llo_original>
